<compile_context>
chip_gen: v7x
topology: tpu7x:2x2x1
jax: 0.10.0
libtpu: 0.0.40
codegen_flags: <defaults>
</compile_context>

<pallas_src>
import jax
import jax.numpy as jnp
from jax.experimental import pallas as pl
from jax.experimental.pallas import tpu as pltpu

# Module hyper-parameters (defaults of GeneratorNetwork.__init__)
X_DIM, V_DIM, R_DIM, Z_DIM, H_DIM, L = 1, 128, 32, 32, 64, 8
IN_INF = H_DIM + X_DIM + V_DIM + R_DIM   # 225  (inference_core input)
IN_GEN = V_DIM + R_DIM + Z_DIM           # 192  (generator_core input)
IN_VRX = V_DIM + R_DIM + X_DIM           # 161  (packed kernel input slab)
OUT_W = 128                              # packed output width: [x_mu | kl | pad]
ROW_TILE = 512                           # rows per grid step (~6 MB VMEM/tile,
                                         # fits default scoped VMEM on v5e/v6e/v7x)


def _round_up(a, m):
    return (a + m - 1) // m * m


def _generator_kernel(vrx_ref, eps_ref,
                      w_fixed_ref, b_fixed_ref,
                      w_inf_hp_ref, b_prior_ref,
                      w_gen_z_ref,
                      w_post_ref, b_post_ref,
                      w_obs_ref, b_obs_ref,
                      out_ref):
    f32 = jnp.float32
    bf16 = jnp.bfloat16
    h, z = H_DIM, Z_DIM
    n = out_ref.shape[0]

    def sigmoid(t):
        # exactly 1/(1+exp(-t)); tanh form keeps it a single EUP op, no divide
        return 0.5 * jnp.tanh(0.5 * t) + 0.5

    def softplus(t):
        return jnp.logaddexp(t, 0.0)

    def lstm_step(gates, hidden, cell):
        # one full-width (n, 256) transcendental pass, then slice f|i|o|s
        g = sigmoid(gates)
        f, i = g[:, 0 * h:1 * h], g[:, 1 * h:2 * h]
        o, s = g[:, 2 * h:3 * h], g[:, 3 * h:4 * h]
        cell = f * cell + i * s
        hidden = o * jnp.tanh(cell)
        return hidden, cell

    # hoisted loads (loop-invariant)
    eps_all = eps_ref[...]               # (n, L*z) f32
    w_hp = w_inf_hp_ref[...]             # (h, 4h + 2z) bf16
    w_post = w_post_ref[...]             # (h, 2z) bf16
    w_gz = w_gen_z_ref[...]              # (z, 4h) bf16
    b_prior = b_prior_ref[...]           # (1, 2z) f32
    b_post = b_post_ref[...]             # (1, 2z) f32

    # loop-invariant [v, r, x] contributions to BOTH cores' gate pre-activations,
    # fused into a single MXU matmul (generator half has a zero row for x)
    fixed = jnp.dot(vrx_ref[...], w_fixed_ref[...],
                    preferred_element_type=f32) + b_fixed_ref[...]
    fixed_i = fixed[:, :4 * h]           # inference gates  (+ b_inf)
    fixed_g = fixed[:, 4 * h:]           # generator gates  (+ b_gen)

    hidden_i = jnp.zeros((n, h), f32)
    cell_i = jnp.zeros((n, h), f32)
    hidden_g = jnp.zeros((n, h), f32)
    cell_g = jnp.zeros((n, h), f32)
    u = jnp.zeros((n, h), f32)
    kl = jnp.zeros((n, z), f32)

    for l in range(L):                   # statically unrolled, L = 8
        # fused [inference-gate | prior] projection of the current hidden_g
        hp = jnp.dot(hidden_g.astype(bf16), w_hp, preferred_element_type=f32)

        # prior p(z) = Normal(p_mu, softplus(p_std_raw))
        p = hp[:, 4 * h:] + b_prior
        p_mu, p_std = p[:, :z], softplus(p[:, z:])

        # inference LSTM cell on cat([hidden_g, x, v, r])
        hidden_i, cell_i = lstm_step(hp[:, :4 * h] + fixed_i, hidden_i, cell_i)

        # posterior q(z) = Normal(q_mu, softplus(q_std_raw)); reparameterized sample
        q = jnp.dot(hidden_i.astype(bf16), w_post,
                    preferred_element_type=f32) + b_post
        q_mu, q_std = q[:, :z], softplus(q[:, z:])
        z_sample = q_mu + q_std * eps_all[:, l * z:(l + 1) * z]

        # generator LSTM cell on cat([z, v, r])
        gates_g = jnp.dot(z_sample.astype(bf16), w_gz,
                          preferred_element_type=f32) + fixed_g
        hidden_g, cell_g = lstm_step(gates_g, hidden_g, cell_g)
        u = u + hidden_g

        # KL(Normal(q_mu,q_std) || Normal(p_mu,p_std)) — torch's closed form,
        # with one reciprocal instead of two divides
        inv_p_std = pl.reciprocal(p_std, approx=True)
        ratio = q_std * inv_p_std
        var_ratio = ratio * ratio
        diff = (q_mu - p_mu) * inv_p_std
        kl = kl + 0.5 * (var_ratio + diff * diff - 1.0 - jnp.log(var_ratio))

    # observation head (x_dim == 1): VPU multiply + XLU cross-lane sum instead
    # of a 1-column MXU matmul.
    x_mu = jnp.tanh(jnp.sum(u * w_obs_ref[...], axis=1, keepdims=True)
                    + b_obs_ref[...])

    # lane-dense packed output slab: [x_mu | kl | zero pad] -> full-width DMA
    out_ref[...] = jnp.zeros((n, OUT_W), f32)
    out_ref[:, :X_DIM] = x_mu
    out_ref[:, X_DIM:X_DIM + Z_DIM] = kl


def generator_forward(x, v, r, eps, params):
    """x: (B,M,x_dim)  v: (B,M,v_dim)  r: (B,r_dim)  eps: (L,B,M,z_dim)."""
    B, M, _ = x.shape
    N = B * M
    r_rep = jnp.broadcast_to(r[:, None, :], (B, M, R_DIM))

    # single input slab, column order [v | r | x] so the generator core reuses
    # the leading V+R columns; bf16 (only ever used as an MXU LHS operand)
    vrx = jnp.concatenate([v, r_rep, x], axis=2).reshape(N, IN_VRX)
    vrx = vrx.astype(jnp.bfloat16)
    # eps as one lane-dense (N, L*z) slab; layer l lives in columns [l*z, (l+1)*z)
    eps_flat = jnp.transpose(eps, (1, 2, 0, 3)).reshape(N, L * Z_DIM)

    # row-tile choice + padding so every block is full-size
    if N <= ROW_TILE:
        tile = _round_up(max(N, 16), 16)
    else:
        tile = ROW_TILE
    n_pad = _round_up(N, tile)
    if n_pad != N:
        vrx = jnp.pad(vrx, ((0, n_pad - N), (0, 0)))
        eps_flat = jnp.pad(eps_flat, ((0, n_pad - N), (0, 0)))

    grid = (n_pad // tile,)
    row = lambda w: pl.BlockSpec((tile, w), lambda i: (i, 0))
    full = lambda a: pl.BlockSpec(a.shape, lambda i: (0, 0))

    weights = (params["w_fixed"], params["b_fixed"],
               params["w_inf_hp"], params["b_prior"],
               params["w_gen_z"],
               params["w_post"], params["b_post"],
               params["w_obs"], params["b_obs"])

    out = pl.pallas_call(
        _generator_kernel,
        out_shape=jax.ShapeDtypeStruct((n_pad, OUT_W), jnp.float32),
        grid=grid,
        in_specs=[row(IN_VRX), row(L * Z_DIM)] + [full(w) for w in weights],
        out_specs=row(OUT_W),
        compiler_params=pltpu.CompilerParams(
            dimension_semantics=("parallel",)),
    )(vrx, eps_flat, *weights)

    x_mu = out[:N, :X_DIM].reshape(B, M, X_DIM)
    kl = out[:N, X_DIM:X_DIM + Z_DIM].reshape(B, M, Z_DIM)
    return x_mu, kl


def init_params(key):
    """Deterministic synthetic weights, PyTorch nn.Linear-style uniform init,
    repacked into the kernel's fused / transposed layout."""
    def linear(k, fan_in, fan_out):
        k1, k2 = jax.random.split(k)
        bound = 1.0 / float(fan_in) ** 0.5
        w = jax.random.uniform(k1, (fan_in, fan_out), jnp.float32, -bound, bound)
        b = jax.random.uniform(k2, (1, fan_out), jnp.float32, -bound, bound)
        return w, b

    keys = jax.random.split(key, 11)

    # inference core: 4 linears (forget, input, output, state), in=225, out=64
    wi = [linear(keys[i], IN_INF, H_DIM) for i in range(4)]
    w_inf = jnp.concatenate([w for w, _ in wi], axis=1)     # (225, 256)
    b_inf = jnp.concatenate([b for _, b in wi], axis=1)     # (1, 256)

    # generator core: 4 linears, in=192, out=64
    wg = [linear(keys[4 + i], IN_GEN, H_DIM) for i in range(4)]
    w_gen = jnp.concatenate([w for w, _ in wg], axis=1)     # (192, 256)
    b_gen = jnp.concatenate([b for _, b in wg], axis=1)     # (1, 256)

    w_post, b_post = linear(keys[8], H_DIM, 2 * Z_DIM)      # (64, 64)
    w_prior, b_prior = linear(keys[9], H_DIM, 2 * Z_DIM)    # (64, 64)
    w_obs, b_obs = linear(keys[10], H_DIM, X_DIM)           # (64, 1)

    # --- repack for the kernel ---
    # inference weight rows follow torch input layout cat([hidden_g, x, v, r])
    w_inf_h = w_inf[:H_DIM]                                 # (64, 256)
    w_inf_x = w_inf[H_DIM:H_DIM + X_DIM]                    # (1, 256)
    w_inf_vr = w_inf[H_DIM + X_DIM:]                        # (160, 256) rows [v, r]
    w_inf_vrx = jnp.concatenate([w_inf_vr, w_inf_x], axis=0)  # rows [v, r, x]

    # generator weight rows follow torch input layout cat([z, v, r])
    w_gen_z = w_gen[:Z_DIM]                                 # (32, 256)
    w_gen_vr = w_gen[Z_DIM:]                                # (160, 256) rows [v, r]
    w_gen_vrx = jnp.concatenate(
        [w_gen_vr, jnp.zeros((X_DIM, 4 * H_DIM), jnp.float32)], axis=0)  # zero row for x

    bf16 = jnp.bfloat16
    return {
        # fused loop-invariant matmul: [v|r|x] -> [inference gates | generator gates]
        "w_fixed": jnp.concatenate([w_inf_vrx, w_gen_vrx], axis=1).astype(bf16),  # (161, 512)
        "b_fixed": jnp.concatenate([b_inf, b_gen], axis=1),                       # (1, 512) f32
        # fused hidden_g projection: [inference gates | prior density]
        "w_inf_hp": jnp.concatenate([w_inf_h, w_prior], axis=1).astype(bf16),     # (64, 320)
        "b_prior": b_prior,                                                       # (1, 64) f32
        "w_gen_z": w_gen_z.astype(bf16),                                          # (32, 256)
        "w_post": w_post.astype(bf16),                                            # (64, 64)
        "b_post": b_post,                                                         # (1, 64) f32
        "w_obs": w_obs.T,                                                         # (1, 64) f32 (x_dim == 1)
        "b_obs": b_obs,                                                           # (1, 1)  f32
    }


if __name__ == "__main__":
    key = jax.random.PRNGKey(0)
    kp, kx, kv, kr, ke = jax.random.split(key, 5)

    B, M = 2, 8
    params = init_params(kp)
    x = jax.random.normal(kx, (B, M, X_DIM), jnp.float32)
    v = jax.random.normal(kv, (B, M, V_DIM), jnp.float32)
    r = jax.random.normal(kr, (B, R_DIM), jnp.float32)
    # rsample noise for the L layers (replaces torch's internal randn)
    eps = jax.random.normal(ke, (L, B, M, Z_DIM), jnp.float32)

    x_mu, kl = generator_forward(x, v, r, eps, params)
    jax.block_until_ready((x_mu, kl))

    assert x_mu.shape == (B, M, X_DIM)
    assert kl.shape == (B, M, Z_DIM)
    assert bool(jnp.all(jnp.isfinite(x_mu))) and bool(jnp.all(jnp.isfinite(kl)))
    print("KERNEL_OK")
</pallas_src>

<mosaic_0001>
module attributes {stable_mosaic.version = 11 : i64} {
  func.func @_generator_kernel(%arg0: i32, %arg1: memref<16x161xbf16, #tpu.memory_space<vmem>>, %arg2: memref<16x256xf32, #tpu.memory_space<vmem>>, %arg3: memref<161x512xbf16, #tpu.memory_space<vmem>>, %arg4: memref<1x512xf32, #tpu.memory_space<vmem>>, %arg5: memref<64x320xbf16, #tpu.memory_space<vmem>>, %arg6: memref<1x64xf32, #tpu.memory_space<vmem>>, %arg7: memref<32x256xbf16, #tpu.memory_space<vmem>>, %arg8: memref<64x64xbf16, #tpu.memory_space<vmem>>, %arg9: memref<1x64xf32, #tpu.memory_space<vmem>>, %arg10: memref<1x64xf32, #tpu.memory_space<vmem>>, %arg11: memref<1x1xf32, #tpu.memory_space<vmem>>, %arg12: memref<16x128xf32, #tpu.memory_space<vmem>>) attributes {dimension_semantics = [#tpu.dimension_semantics<parallel>], iteration_bounds = array<i64: 1>, scalar_prefetch = 0 : i64, scratch_operands = 0 : i64, tpu.core_type = #tpu.core_type<tc>, window_params = [{transform_indices = @transform_0, window_bounds = array<i64: 16, 161>}, {transform_indices = @transform_1, window_bounds = array<i64: 16, 256>}, {pipeline_mode = #tpu.pipeline_mode<synchronous>, transform_indices = @transform_2, window_bounds = array<i64: 161, 512>}, {pipeline_mode = #tpu.pipeline_mode<synchronous>, transform_indices = @transform_3, window_bounds = array<i64: 1, 512>}, {pipeline_mode = #tpu.pipeline_mode<synchronous>, transform_indices = @transform_4, window_bounds = array<i64: 64, 320>}, {pipeline_mode = #tpu.pipeline_mode<synchronous>, transform_indices = @transform_5, window_bounds = array<i64: 1, 64>}, {pipeline_mode = #tpu.pipeline_mode<synchronous>, transform_indices = @transform_6, window_bounds = array<i64: 32, 256>}, {pipeline_mode = #tpu.pipeline_mode<synchronous>, transform_indices = @transform_7, window_bounds = array<i64: 64, 64>}, {pipeline_mode = #tpu.pipeline_mode<synchronous>, transform_indices = @transform_8, window_bounds = array<i64: 1, 64>}, {pipeline_mode = #tpu.pipeline_mode<synchronous>, transform_indices = @transform_9, window_bounds = array<i64: 1, 64>}, {pipeline_mode = #tpu.pipeline_mode<synchronous>, transform_indices = @transform_10, window_bounds = array<i64: 1, 1>}, {transform_indices = @transform_11, window_bounds = array<i64: 16, 128>}]} {
    %c0 = arith.constant 0 : index
    %c0_0 = arith.constant 0 : index
    %0 = vector.load %arg2[%c0, %c0_0] : memref<16x256xf32, #tpu.memory_space<vmem>>, vector<16x256xf32>
    %c0_1 = arith.constant 0 : index
    %c0_2 = arith.constant 0 : index
    %1 = vector.load %arg5[%c0_1, %c0_2] : memref<64x320xbf16, #tpu.memory_space<vmem>>, vector<64x320xbf16>
    %c0_3 = arith.constant 0 : index
    %c0_4 = arith.constant 0 : index
    %2 = vector.load %arg8[%c0_3, %c0_4] : memref<64x64xbf16, #tpu.memory_space<vmem>>, vector<64x64xbf16>
    %c0_5 = arith.constant 0 : index
    %c0_6 = arith.constant 0 : index
    %3 = vector.load %arg7[%c0_5, %c0_6] : memref<32x256xbf16, #tpu.memory_space<vmem>>, vector<32x256xbf16>
    %c0_7 = arith.constant 0 : index
    %c0_8 = arith.constant 0 : index
    %4 = vector.load %arg6[%c0_7, %c0_8] : memref<1x64xf32, #tpu.memory_space<vmem>>, vector<1x64xf32>
    %c0_9 = arith.constant 0 : index
    %c0_10 = arith.constant 0 : index
    %5 = vector.load %arg9[%c0_9, %c0_10] : memref<1x64xf32, #tpu.memory_space<vmem>>, vector<1x64xf32>
    %c0_11 = arith.constant 0 : index
    %c0_12 = arith.constant 0 : index
    %6 = vector.load %arg1[%c0_11, %c0_12] : memref<16x161xbf16, #tpu.memory_space<vmem>>, vector<16x161xbf16>
    %c0_13 = arith.constant 0 : index
    %c0_14 = arith.constant 0 : index
    %7 = vector.load %arg3[%c0_13, %c0_14] : memref<161x512xbf16, #tpu.memory_space<vmem>>, vector<161x512xbf16>
    %cst = arith.constant dense<0.000000e+00> : vector<16x512xf32>
    %8 = tpu.matmul %6, %7, %cst {dimension_numbers = #tpu.dot_dimension_numbers<[1], [0], [0], [1], [0, 0, 1, 1], [], []>} : vector<16x161xbf16>, vector<161x512xbf16>, vector<16x512xf32> -> vector<16x512xf32>
    %c0_15 = arith.constant 0 : index
    %c0_16 = arith.constant 0 : index
    %9 = vector.load %arg4[%c0_15, %c0_16] : memref<1x512xf32, #tpu.memory_space<vmem>>, vector<1x512xf32>
    %10 = vector.broadcast %9 : vector<1x512xf32> to vector<16x512xf32>
    %11 = arith.addf %8, %10 : vector<16x512xf32>
    %12 = vector.extract_strided_slice %11 {offsets = [0, 0], sizes = [16, 256], strides = [1, 1]} : vector<16x512xf32> to vector<16x256xf32>
    %13 = vector.extract_strided_slice %11 {offsets = [0, 256], sizes = [16, 256], strides = [1, 1]} : vector<16x512xf32> to vector<16x256xf32>
    %cst_17 = arith.constant 0.000000e+00 : f32
    %14 = vector.broadcast %cst_17 : f32 to vector<16x64xf32>
    %cst_18 = arith.constant 0.000000e+00 : f32
    %15 = vector.broadcast %cst_18 : f32 to vector<16x64xf32>
    %cst_19 = arith.constant 0.000000e+00 : f32
    %16 = vector.broadcast %cst_19 : f32 to vector<16x64xf32>
    %cst_20 = arith.constant 0.000000e+00 : f32
    %17 = vector.broadcast %cst_20 : f32 to vector<16x64xf32>
    %cst_21 = arith.constant 0.000000e+00 : f32
    %18 = vector.broadcast %cst_21 : f32 to vector<16x32xf32>
    %19 = arith.truncf %15 : vector<16x64xf32> to vector<16x64xbf16>
    %cst_22 = arith.constant dense<0.000000e+00> : vector<16x320xf32>
    %20 = tpu.matmul %19, %1, %cst_22 {dimension_numbers = #tpu.dot_dimension_numbers<[1], [0], [0], [1], [0, 0, 1, 1], [], []>} : vector<16x64xbf16>, vector<64x320xbf16>, vector<16x320xf32> -> vector<16x320xf32>
    %21 = vector.extract_strided_slice %20 {offsets = [0, 256], sizes = [16, 64], strides = [1, 1]} : vector<16x320xf32> to vector<16x64xf32>
    %22 = vector.broadcast %4 : vector<1x64xf32> to vector<16x64xf32>
    %23 = arith.addf %21, %22 : vector<16x64xf32>
    %24 = vector.extract_strided_slice %23 {offsets = [0, 0], sizes = [16, 32], strides = [1, 1]} : vector<16x64xf32> to vector<16x32xf32>
    %25 = vector.extract_strided_slice %23 {offsets = [0, 32], sizes = [16, 32], strides = [1, 1]} : vector<16x64xf32> to vector<16x32xf32>
    %cst_23 = arith.constant 0.000000e+00 : f32
    %26 = vector.broadcast %cst_23 : f32 to vector<16x32xf32>
    %27 = arith.maximumf %25, %26 : vector<16x32xf32>
    %28 = vector.broadcast %cst_23 : f32 to vector<16x32xf32>
    %29 = arith.subf %25, %28 : vector<16x32xf32>
    %30 = arith.cmpf one, %29, %29 : vector<16x32xf32>
    %31 = vector.broadcast %cst_23 : f32 to vector<16x32xf32>
    %32 = arith.addf %25, %31 : vector<16x32xf32>
    %33 = math.absf %29 : vector<16x32xf32>
    %cst_24 = arith.constant 0.000000e+00 : f32
    %34 = vector.broadcast %cst_24 : f32 to vector<16x32xf32>
    %35 = arith.subf %34, %33 : vector<16x32xf32>
    %36 = math.exp %35 : vector<16x32xf32>
    %37 = math.log1p %36 : vector<16x32xf32>
    %38 = arith.addf %27, %37 : vector<16x32xf32>
    %39 = arith.select %30, %32, %38 : vector<16x32xi1>, vector<16x32xf32>
    %40 = vector.extract_strided_slice %20 {offsets = [0, 0], sizes = [16, 256], strides = [1, 1]} : vector<16x320xf32> to vector<16x256xf32>
    %41 = arith.addf %40, %12 : vector<16x256xf32>
    %cst_25 = arith.constant 5.000000e-01 : f32
    %42 = vector.broadcast %cst_25 : f32 to vector<16x256xf32>
    %43 = arith.mulf %42, %41 : vector<16x256xf32>
    %44 = math.tanh %43 : vector<16x256xf32>
    %cst_26 = arith.constant 5.000000e-01 : f32
    %45 = vector.broadcast %cst_26 : f32 to vector<16x256xf32>
    %46 = arith.mulf %45, %44 : vector<16x256xf32>
    %cst_27 = arith.constant 5.000000e-01 : f32
    %47 = vector.broadcast %cst_27 : f32 to vector<16x256xf32>
    %48 = arith.addf %46, %47 : vector<16x256xf32>
    %49 = vector.extract_strided_slice %48 {offsets = [0, 0], sizes = [16, 64], strides = [1, 1]} : vector<16x256xf32> to vector<16x64xf32>
    %50 = vector.extract_strided_slice %48 {offsets = [0, 64], sizes = [16, 64], strides = [1, 1]} : vector<16x256xf32> to vector<16x64xf32>
    %51 = vector.extract_strided_slice %48 {offsets = [0, 128], sizes = [16, 64], strides = [1, 1]} : vector<16x256xf32> to vector<16x64xf32>
    %52 = vector.extract_strided_slice %48 {offsets = [0, 192], sizes = [16, 64], strides = [1, 1]} : vector<16x256xf32> to vector<16x64xf32>
    %53 = arith.mulf %49, %14 : vector<16x64xf32>
    %54 = arith.mulf %50, %52 : vector<16x64xf32>
    %55 = arith.addf %53, %54 : vector<16x64xf32>
    %56 = math.tanh %55 : vector<16x64xf32>
    %57 = arith.mulf %51, %56 : vector<16x64xf32>
    %58 = arith.truncf %57 : vector<16x64xf32> to vector<16x64xbf16>
    %cst_28 = arith.constant dense<0.000000e+00> : vector<16x64xf32>
    %59 = tpu.matmul %58, %2, %cst_28 {dimension_numbers = #tpu.dot_dimension_numbers<[1], [0], [0], [1], [0, 0, 1, 1], [], []>} : vector<16x64xbf16>, vector<64x64xbf16>, vector<16x64xf32> -> vector<16x64xf32>
    %60 = vector.broadcast %5 : vector<1x64xf32> to vector<16x64xf32>
    %61 = arith.addf %59, %60 : vector<16x64xf32>
    %62 = vector.extract_strided_slice %61 {offsets = [0, 0], sizes = [16, 32], strides = [1, 1]} : vector<16x64xf32> to vector<16x32xf32>
    %63 = vector.extract_strided_slice %61 {offsets = [0, 32], sizes = [16, 32], strides = [1, 1]} : vector<16x64xf32> to vector<16x32xf32>
    %cst_29 = arith.constant 0.000000e+00 : f32
    %64 = vector.broadcast %cst_29 : f32 to vector<16x32xf32>
    %65 = arith.maximumf %63, %64 : vector<16x32xf32>
    %66 = vector.broadcast %cst_29 : f32 to vector<16x32xf32>
    %67 = arith.subf %63, %66 : vector<16x32xf32>
    %68 = arith.cmpf one, %67, %67 : vector<16x32xf32>
    %69 = vector.broadcast %cst_29 : f32 to vector<16x32xf32>
    %70 = arith.addf %63, %69 : vector<16x32xf32>
    %71 = math.absf %67 : vector<16x32xf32>
    %cst_30 = arith.constant 0.000000e+00 : f32
    %72 = vector.broadcast %cst_30 : f32 to vector<16x32xf32>
    %73 = arith.subf %72, %71 : vector<16x32xf32>
    %74 = math.exp %73 : vector<16x32xf32>
    %75 = math.log1p %74 : vector<16x32xf32>
    %76 = arith.addf %65, %75 : vector<16x32xf32>
    %77 = arith.select %68, %70, %76 : vector<16x32xi1>, vector<16x32xf32>
    %78 = vector.extract_strided_slice %0 {offsets = [0, 0], sizes = [16, 32], strides = [1, 1]} : vector<16x256xf32> to vector<16x32xf32>
    %79 = arith.mulf %77, %78 : vector<16x32xf32>
    %80 = arith.addf %62, %79 : vector<16x32xf32>
    %81 = arith.truncf %80 : vector<16x32xf32> to vector<16x32xbf16>
    %cst_31 = arith.constant dense<0.000000e+00> : vector<16x256xf32>
    %82 = tpu.matmul %81, %3, %cst_31 {dimension_numbers = #tpu.dot_dimension_numbers<[1], [0], [0], [1], [0, 0, 1, 1], [], []>} : vector<16x32xbf16>, vector<32x256xbf16>, vector<16x256xf32> -> vector<16x256xf32>
    %83 = arith.addf %82, %13 : vector<16x256xf32>
    %cst_32 = arith.constant 5.000000e-01 : f32
    %84 = vector.broadcast %cst_32 : f32 to vector<16x256xf32>
    %85 = arith.mulf %84, %83 : vector<16x256xf32>
    %86 = math.tanh %85 : vector<16x256xf32>
    %cst_33 = arith.constant 5.000000e-01 : f32
    %87 = vector.broadcast %cst_33 : f32 to vector<16x256xf32>
    %88 = arith.mulf %87, %86 : vector<16x256xf32>
    %cst_34 = arith.constant 5.000000e-01 : f32
    %89 = vector.broadcast %cst_34 : f32 to vector<16x256xf32>
    %90 = arith.addf %88, %89 : vector<16x256xf32>
    %91 = vector.extract_strided_slice %90 {offsets = [0, 0], sizes = [16, 64], strides = [1, 1]} : vector<16x256xf32> to vector<16x64xf32>
    %92 = vector.extract_strided_slice %90 {offsets = [0, 64], sizes = [16, 64], strides = [1, 1]} : vector<16x256xf32> to vector<16x64xf32>
    %93 = vector.extract_strided_slice %90 {offsets = [0, 128], sizes = [16, 64], strides = [1, 1]} : vector<16x256xf32> to vector<16x64xf32>
    %94 = vector.extract_strided_slice %90 {offsets = [0, 192], sizes = [16, 64], strides = [1, 1]} : vector<16x256xf32> to vector<16x64xf32>
    %95 = arith.mulf %91, %16 : vector<16x64xf32>
    %96 = arith.mulf %92, %94 : vector<16x64xf32>
    %97 = arith.addf %95, %96 : vector<16x64xf32>
    %98 = math.tanh %97 : vector<16x64xf32>
    %99 = arith.mulf %93, %98 : vector<16x64xf32>
    %100 = arith.addf %17, %99 : vector<16x64xf32>
    %101 = tpu.reciprocal %39 {approx = true} : vector<16x32xf32> -> vector<16x32xf32>
    %102 = arith.mulf %77, %101 : vector<16x32xf32>
    %103 = arith.mulf %102, %102 : vector<16x32xf32>
    %104 = arith.subf %62, %24 : vector<16x32xf32>
    %105 = arith.mulf %104, %101 : vector<16x32xf32>
    %106 = arith.mulf %105, %105 : vector<16x32xf32>
    %107 = arith.addf %103, %106 : vector<16x32xf32>
    %cst_35 = arith.constant 1.000000e+00 : f32
    %108 = vector.broadcast %cst_35 : f32 to vector<16x32xf32>
    %109 = arith.subf %107, %108 : vector<16x32xf32>
    %110 = math.log %103 : vector<16x32xf32>
    %111 = arith.subf %109, %110 : vector<16x32xf32>
    %cst_36 = arith.constant 5.000000e-01 : f32
    %112 = vector.broadcast %cst_36 : f32 to vector<16x32xf32>
    %113 = arith.mulf %112, %111 : vector<16x32xf32>
    %114 = arith.addf %18, %113 : vector<16x32xf32>
    %115 = arith.truncf %99 : vector<16x64xf32> to vector<16x64xbf16>
    %cst_37 = arith.constant dense<0.000000e+00> : vector<16x320xf32>
    %116 = tpu.matmul %115, %1, %cst_37 {dimension_numbers = #tpu.dot_dimension_numbers<[1], [0], [0], [1], [0, 0, 1, 1], [], []>} : vector<16x64xbf16>, vector<64x320xbf16>, vector<16x320xf32> -> vector<16x320xf32>
    %117 = vector.extract_strided_slice %116 {offsets = [0, 256], sizes = [16, 64], strides = [1, 1]} : vector<16x320xf32> to vector<16x64xf32>
    %118 = vector.broadcast %4 : vector<1x64xf32> to vector<16x64xf32>
    %119 = arith.addf %117, %118 : vector<16x64xf32>
    %120 = vector.extract_strided_slice %119 {offsets = [0, 0], sizes = [16, 32], strides = [1, 1]} : vector<16x64xf32> to vector<16x32xf32>
    %121 = vector.extract_strided_slice %119 {offsets = [0, 32], sizes = [16, 32], strides = [1, 1]} : vector<16x64xf32> to vector<16x32xf32>
    %cst_38 = arith.constant 0.000000e+00 : f32
    %122 = vector.broadcast %cst_38 : f32 to vector<16x32xf32>
    %123 = arith.maximumf %121, %122 : vector<16x32xf32>
    %124 = vector.broadcast %cst_38 : f32 to vector<16x32xf32>
    %125 = arith.subf %121, %124 : vector<16x32xf32>
    %126 = arith.cmpf one, %125, %125 : vector<16x32xf32>
    %127 = vector.broadcast %cst_38 : f32 to vector<16x32xf32>
    %128 = arith.addf %121, %127 : vector<16x32xf32>
    %129 = math.absf %125 : vector<16x32xf32>
    %cst_39 = arith.constant 0.000000e+00 : f32
    %130 = vector.broadcast %cst_39 : f32 to vector<16x32xf32>
    %131 = arith.subf %130, %129 : vector<16x32xf32>
    %132 = math.exp %131 : vector<16x32xf32>
    %133 = math.log1p %132 : vector<16x32xf32>
    %134 = arith.addf %123, %133 : vector<16x32xf32>
    %135 = arith.select %126, %128, %134 : vector<16x32xi1>, vector<16x32xf32>
    %136 = vector.extract_strided_slice %116 {offsets = [0, 0], sizes = [16, 256], strides = [1, 1]} : vector<16x320xf32> to vector<16x256xf32>
    %137 = arith.addf %136, %12 : vector<16x256xf32>
    %cst_40 = arith.constant 5.000000e-01 : f32
    %138 = vector.broadcast %cst_40 : f32 to vector<16x256xf32>
    %139 = arith.mulf %138, %137 : vector<16x256xf32>
    %140 = math.tanh %139 : vector<16x256xf32>
    %cst_41 = arith.constant 5.000000e-01 : f32
    %141 = vector.broadcast %cst_41 : f32 to vector<16x256xf32>
    %142 = arith.mulf %141, %140 : vector<16x256xf32>
    %cst_42 = arith.constant 5.000000e-01 : f32
    %143 = vector.broadcast %cst_42 : f32 to vector<16x256xf32>
    %144 = arith.addf %142, %143 : vector<16x256xf32>
    %145 = vector.extract_strided_slice %144 {offsets = [0, 0], sizes = [16, 64], strides = [1, 1]} : vector<16x256xf32> to vector<16x64xf32>
    %146 = vector.extract_strided_slice %144 {offsets = [0, 64], sizes = [16, 64], strides = [1, 1]} : vector<16x256xf32> to vector<16x64xf32>
    %147 = vector.extract_strided_slice %144 {offsets = [0, 128], sizes = [16, 64], strides = [1, 1]} : vector<16x256xf32> to vector<16x64xf32>
    %148 = vector.extract_strided_slice %144 {offsets = [0, 192], sizes = [16, 64], strides = [1, 1]} : vector<16x256xf32> to vector<16x64xf32>
    %149 = arith.mulf %145, %55 : vector<16x64xf32>
    %150 = arith.mulf %146, %148 : vector<16x64xf32>
    %151 = arith.addf %149, %150 : vector<16x64xf32>
    %152 = math.tanh %151 : vector<16x64xf32>
    %153 = arith.mulf %147, %152 : vector<16x64xf32>
    %154 = arith.truncf %153 : vector<16x64xf32> to vector<16x64xbf16>
    %cst_43 = arith.constant dense<0.000000e+00> : vector<16x64xf32>
    %155 = tpu.matmul %154, %2, %cst_43 {dimension_numbers = #tpu.dot_dimension_numbers<[1], [0], [0], [1], [0, 0, 1, 1], [], []>} : vector<16x64xbf16>, vector<64x64xbf16>, vector<16x64xf32> -> vector<16x64xf32>
    %156 = vector.broadcast %5 : vector<1x64xf32> to vector<16x64xf32>
    %157 = arith.addf %155, %156 : vector<16x64xf32>
    %158 = vector.extract_strided_slice %157 {offsets = [0, 0], sizes = [16, 32], strides = [1, 1]} : vector<16x64xf32> to vector<16x32xf32>
    %159 = vector.extract_strided_slice %157 {offsets = [0, 32], sizes = [16, 32], strides = [1, 1]} : vector<16x64xf32> to vector<16x32xf32>
    %cst_44 = arith.constant 0.000000e+00 : f32
    %160 = vector.broadcast %cst_44 : f32 to vector<16x32xf32>
    %161 = arith.maximumf %159, %160 : vector<16x32xf32>
    %162 = vector.broadcast %cst_44 : f32 to vector<16x32xf32>
    %163 = arith.subf %159, %162 : vector<16x32xf32>
    %164 = arith.cmpf one, %163, %163 : vector<16x32xf32>
    %165 = vector.broadcast %cst_44 : f32 to vector<16x32xf32>
    %166 = arith.addf %159, %165 : vector<16x32xf32>
    %167 = math.absf %163 : vector<16x32xf32>
    %cst_45 = arith.constant 0.000000e+00 : f32
    %168 = vector.broadcast %cst_45 : f32 to vector<16x32xf32>
    %169 = arith.subf %168, %167 : vector<16x32xf32>
    %170 = math.exp %169 : vector<16x32xf32>
    %171 = math.log1p %170 : vector<16x32xf32>
    %172 = arith.addf %161, %171 : vector<16x32xf32>
    %173 = arith.select %164, %166, %172 : vector<16x32xi1>, vector<16x32xf32>
    %174 = vector.extract_strided_slice %0 {offsets = [0, 32], sizes = [16, 32], strides = [1, 1]} : vector<16x256xf32> to vector<16x32xf32>
    %175 = arith.mulf %173, %174 : vector<16x32xf32>
    %176 = arith.addf %158, %175 : vector<16x32xf32>
    %177 = arith.truncf %176 : vector<16x32xf32> to vector<16x32xbf16>
    %cst_46 = arith.constant dense<0.000000e+00> : vector<16x256xf32>
    %178 = tpu.matmul %177, %3, %cst_46 {dimension_numbers = #tpu.dot_dimension_numbers<[1], [0], [0], [1], [0, 0, 1, 1], [], []>} : vector<16x32xbf16>, vector<32x256xbf16>, vector<16x256xf32> -> vector<16x256xf32>
    %179 = arith.addf %178, %13 : vector<16x256xf32>
    %cst_47 = arith.constant 5.000000e-01 : f32
    %180 = vector.broadcast %cst_47 : f32 to vector<16x256xf32>
    %181 = arith.mulf %180, %179 : vector<16x256xf32>
    %182 = math.tanh %181 : vector<16x256xf32>
    %cst_48 = arith.constant 5.000000e-01 : f32
    %183 = vector.broadcast %cst_48 : f32 to vector<16x256xf32>
    %184 = arith.mulf %183, %182 : vector<16x256xf32>
    %cst_49 = arith.constant 5.000000e-01 : f32
    %185 = vector.broadcast %cst_49 : f32 to vector<16x256xf32>
    %186 = arith.addf %184, %185 : vector<16x256xf32>
    %187 = vector.extract_strided_slice %186 {offsets = [0, 0], sizes = [16, 64], strides = [1, 1]} : vector<16x256xf32> to vector<16x64xf32>
    %188 = vector.extract_strided_slice %186 {offsets = [0, 64], sizes = [16, 64], strides = [1, 1]} : vector<16x256xf32> to vector<16x64xf32>
    %189 = vector.extract_strided_slice %186 {offsets = [0, 128], sizes = [16, 64], strides = [1, 1]} : vector<16x256xf32> to vector<16x64xf32>
    %190 = vector.extract_strided_slice %186 {offsets = [0, 192], sizes = [16, 64], strides = [1, 1]} : vector<16x256xf32> to vector<16x64xf32>
    %191 = arith.mulf %187, %97 : vector<16x64xf32>
    %192 = arith.mulf %188, %190 : vector<16x64xf32>
    %193 = arith.addf %191, %192 : vector<16x64xf32>
    %194 = math.tanh %193 : vector<16x64xf32>
    %195 = arith.mulf %189, %194 : vector<16x64xf32>
    %196 = arith.addf %100, %195 : vector<16x64xf32>
    %197 = tpu.reciprocal %135 {approx = true} : vector<16x32xf32> -> vector<16x32xf32>
    %198 = arith.mulf %173, %197 : vector<16x32xf32>
    %199 = arith.mulf %198, %198 : vector<16x32xf32>
    %200 = arith.subf %158, %120 : vector<16x32xf32>
    %201 = arith.mulf %200, %197 : vector<16x32xf32>
    %202 = arith.mulf %201, %201 : vector<16x32xf32>
    %203 = arith.addf %199, %202 : vector<16x32xf32>
    %cst_50 = arith.constant 1.000000e+00 : f32
    %204 = vector.broadcast %cst_50 : f32 to vector<16x32xf32>
    %205 = arith.subf %203, %204 : vector<16x32xf32>
    %206 = math.log %199 : vector<16x32xf32>
    %207 = arith.subf %205, %206 : vector<16x32xf32>
    %cst_51 = arith.constant 5.000000e-01 : f32
    %208 = vector.broadcast %cst_51 : f32 to vector<16x32xf32>
    %209 = arith.mulf %208, %207 : vector<16x32xf32>
    %210 = arith.addf %114, %209 : vector<16x32xf32>
    %211 = arith.truncf %195 : vector<16x64xf32> to vector<16x64xbf16>
    %cst_52 = arith.constant dense<0.000000e+00> : vector<16x320xf32>
    %212 = tpu.matmul %211, %1, %cst_52 {dimension_numbers = #tpu.dot_dimension_numbers<[1], [0], [0], [1], [0, 0, 1, 1], [], []>} : vector<16x64xbf16>, vector<64x320xbf16>, vector<16x320xf32> -> vector<16x320xf32>
    %213 = vector.extract_strided_slice %212 {offsets = [0, 256], sizes = [16, 64], strides = [1, 1]} : vector<16x320xf32> to vector<16x64xf32>
    %214 = vector.broadcast %4 : vector<1x64xf32> to vector<16x64xf32>
    %215 = arith.addf %213, %214 : vector<16x64xf32>
    %216 = vector.extract_strided_slice %215 {offsets = [0, 0], sizes = [16, 32], strides = [1, 1]} : vector<16x64xf32> to vector<16x32xf32>
    %217 = vector.extract_strided_slice %215 {offsets = [0, 32], sizes = [16, 32], strides = [1, 1]} : vector<16x64xf32> to vector<16x32xf32>
    %cst_53 = arith.constant 0.000000e+00 : f32
    %218 = vector.broadcast %cst_53 : f32 to vector<16x32xf32>
    %219 = arith.maximumf %217, %218 : vector<16x32xf32>
    %220 = vector.broadcast %cst_53 : f32 to vector<16x32xf32>
    %221 = arith.subf %217, %220 : vector<16x32xf32>
    %222 = arith.cmpf one, %221, %221 : vector<16x32xf32>
    %223 = vector.broadcast %cst_53 : f32 to vector<16x32xf32>
    %224 = arith.addf %217, %223 : vector<16x32xf32>
    %225 = math.absf %221 : vector<16x32xf32>
    %cst_54 = arith.constant 0.000000e+00 : f32
    %226 = vector.broadcast %cst_54 : f32 to vector<16x32xf32>
    %227 = arith.subf %226, %225 : vector<16x32xf32>
    %228 = math.exp %227 : vector<16x32xf32>
    %229 = math.log1p %228 : vector<16x32xf32>
    %230 = arith.addf %219, %229 : vector<16x32xf32>
    %231 = arith.select %222, %224, %230 : vector<16x32xi1>, vector<16x32xf32>
    %232 = vector.extract_strided_slice %212 {offsets = [0, 0], sizes = [16, 256], strides = [1, 1]} : vector<16x320xf32> to vector<16x256xf32>
    %233 = arith.addf %232, %12 : vector<16x256xf32>
    %cst_55 = arith.constant 5.000000e-01 : f32
    %234 = vector.broadcast %cst_55 : f32 to vector<16x256xf32>
    %235 = arith.mulf %234, %233 : vector<16x256xf32>
    %236 = math.tanh %235 : vector<16x256xf32>
    %cst_56 = arith.constant 5.000000e-01 : f32
    %237 = vector.broadcast %cst_56 : f32 to vector<16x256xf32>
    %238 = arith.mulf %237, %236 : vector<16x256xf32>
    %cst_57 = arith.constant 5.000000e-01 : f32
    %239 = vector.broadcast %cst_57 : f32 to vector<16x256xf32>
    %240 = arith.addf %238, %239 : vector<16x256xf32>
    %241 = vector.extract_strided_slice %240 {offsets = [0, 0], sizes = [16, 64], strides = [1, 1]} : vector<16x256xf32> to vector<16x64xf32>
    %242 = vector.extract_strided_slice %240 {offsets = [0, 64], sizes = [16, 64], strides = [1, 1]} : vector<16x256xf32> to vector<16x64xf32>
    %243 = vector.extract_strided_slice %240 {offsets = [0, 128], sizes = [16, 64], strides = [1, 1]} : vector<16x256xf32> to vector<16x64xf32>
    %244 = vector.extract_strided_slice %240 {offsets = [0, 192], sizes = [16, 64], strides = [1, 1]} : vector<16x256xf32> to vector<16x64xf32>
    %245 = arith.mulf %241, %151 : vector<16x64xf32>
    %246 = arith.mulf %242, %244 : vector<16x64xf32>
    %247 = arith.addf %245, %246 : vector<16x64xf32>
    %248 = math.tanh %247 : vector<16x64xf32>
    %249 = arith.mulf %243, %248 : vector<16x64xf32>
    %250 = arith.truncf %249 : vector<16x64xf32> to vector<16x64xbf16>
    %cst_58 = arith.constant dense<0.000000e+00> : vector<16x64xf32>
    %251 = tpu.matmul %250, %2, %cst_58 {dimension_numbers = #tpu.dot_dimension_numbers<[1], [0], [0], [1], [0, 0, 1, 1], [], []>} : vector<16x64xbf16>, vector<64x64xbf16>, vector<16x64xf32> -> vector<16x64xf32>
    %252 = vector.broadcast %5 : vector<1x64xf32> to vector<16x64xf32>
    %253 = arith.addf %251, %252 : vector<16x64xf32>
    %254 = vector.extract_strided_slice %253 {offsets = [0, 0], sizes = [16, 32], strides = [1, 1]} : vector<16x64xf32> to vector<16x32xf32>
    %255 = vector.extract_strided_slice %253 {offsets = [0, 32], sizes = [16, 32], strides = [1, 1]} : vector<16x64xf32> to vector<16x32xf32>
    %cst_59 = arith.constant 0.000000e+00 : f32
    %256 = vector.broadcast %cst_59 : f32 to vector<16x32xf32>
    %257 = arith.maximumf %255, %256 : vector<16x32xf32>
    %258 = vector.broadcast %cst_59 : f32 to vector<16x32xf32>
    %259 = arith.subf %255, %258 : vector<16x32xf32>
    %260 = arith.cmpf one, %259, %259 : vector<16x32xf32>
    %261 = vector.broadcast %cst_59 : f32 to vector<16x32xf32>
    %262 = arith.addf %255, %261 : vector<16x32xf32>
    %263 = math.absf %259 : vector<16x32xf32>
    %cst_60 = arith.constant 0.000000e+00 : f32
    %264 = vector.broadcast %cst_60 : f32 to vector<16x32xf32>
    %265 = arith.subf %264, %263 : vector<16x32xf32>
    %266 = math.exp %265 : vector<16x32xf32>
    %267 = math.log1p %266 : vector<16x32xf32>
    %268 = arith.addf %257, %267 : vector<16x32xf32>
    %269 = arith.select %260, %262, %268 : vector<16x32xi1>, vector<16x32xf32>
    %270 = vector.extract_strided_slice %0 {offsets = [0, 64], sizes = [16, 32], strides = [1, 1]} : vector<16x256xf32> to vector<16x32xf32>
    %271 = arith.mulf %269, %270 : vector<16x32xf32>
    %272 = arith.addf %254, %271 : vector<16x32xf32>
    %273 = arith.truncf %272 : vector<16x32xf32> to vector<16x32xbf16>
    %cst_61 = arith.constant dense<0.000000e+00> : vector<16x256xf32>
    %274 = tpu.matmul %273, %3, %cst_61 {dimension_numbers = #tpu.dot_dimension_numbers<[1], [0], [0], [1], [0, 0, 1, 1], [], []>} : vector<16x32xbf16>, vector<32x256xbf16>, vector<16x256xf32> -> vector<16x256xf32>
    %275 = arith.addf %274, %13 : vector<16x256xf32>
    %cst_62 = arith.constant 5.000000e-01 : f32
    %276 = vector.broadcast %cst_62 : f32 to vector<16x256xf32>
    %277 = arith.mulf %276, %275 : vector<16x256xf32>
    %278 = math.tanh %277 : vector<16x256xf32>
    %cst_63 = arith.constant 5.000000e-01 : f32
    %279 = vector.broadcast %cst_63 : f32 to vector<16x256xf32>
    %280 = arith.mulf %279, %278 : vector<16x256xf32>
    %cst_64 = arith.constant 5.000000e-01 : f32
    %281 = vector.broadcast %cst_64 : f32 to vector<16x256xf32>
    %282 = arith.addf %280, %281 : vector<16x256xf32>
    %283 = vector.extract_strided_slice %282 {offsets = [0, 0], sizes = [16, 64], strides = [1, 1]} : vector<16x256xf32> to vector<16x64xf32>
    %284 = vector.extract_strided_slice %282 {offsets = [0, 64], sizes = [16, 64], strides = [1, 1]} : vector<16x256xf32> to vector<16x64xf32>
    %285 = vector.extract_strided_slice %282 {offsets = [0, 128], sizes = [16, 64], strides = [1, 1]} : vector<16x256xf32> to vector<16x64xf32>
    %286 = vector.extract_strided_slice %282 {offsets = [0, 192], sizes = [16, 64], strides = [1, 1]} : vector<16x256xf32> to vector<16x64xf32>
    %287 = arith.mulf %283, %193 : vector<16x64xf32>
    %288 = arith.mulf %284, %286 : vector<16x64xf32>
    %289 = arith.addf %287, %288 : vector<16x64xf32>
    %290 = math.tanh %289 : vector<16x64xf32>
    %291 = arith.mulf %285, %290 : vector<16x64xf32>
    %292 = arith.addf %196, %291 : vector<16x64xf32>
    %293 = tpu.reciprocal %231 {approx = true} : vector<16x32xf32> -> vector<16x32xf32>
    %294 = arith.mulf %269, %293 : vector<16x32xf32>
    %295 = arith.mulf %294, %294 : vector<16x32xf32>
    %296 = arith.subf %254, %216 : vector<16x32xf32>
    %297 = arith.mulf %296, %293 : vector<16x32xf32>
    %298 = arith.mulf %297, %297 : vector<16x32xf32>
    %299 = arith.addf %295, %298 : vector<16x32xf32>
    %cst_65 = arith.constant 1.000000e+00 : f32
    %300 = vector.broadcast %cst_65 : f32 to vector<16x32xf32>
    %301 = arith.subf %299, %300 : vector<16x32xf32>
    %302 = math.log %295 : vector<16x32xf32>
    %303 = arith.subf %301, %302 : vector<16x32xf32>
    %cst_66 = arith.constant 5.000000e-01 : f32
    %304 = vector.broadcast %cst_66 : f32 to vector<16x32xf32>
    %305 = arith.mulf %304, %303 : vector<16x32xf32>
    %306 = arith.addf %210, %305 : vector<16x32xf32>
    %307 = arith.truncf %291 : vector<16x64xf32> to vector<16x64xbf16>
    %cst_67 = arith.constant dense<0.000000e+00> : vector<16x320xf32>
    %308 = tpu.matmul %307, %1, %cst_67 {dimension_numbers = #tpu.dot_dimension_numbers<[1], [0], [0], [1], [0, 0, 1, 1], [], []>} : vector<16x64xbf16>, vector<64x320xbf16>, vector<16x320xf32> -> vector<16x320xf32>
    %309 = vector.extract_strided_slice %308 {offsets = [0, 256], sizes = [16, 64], strides = [1, 1]} : vector<16x320xf32> to vector<16x64xf32>
    %310 = vector.broadcast %4 : vector<1x64xf32> to vector<16x64xf32>
    %311 = arith.addf %309, %310 : vector<16x64xf32>
    %312 = vector.extract_strided_slice %311 {offsets = [0, 0], sizes = [16, 32], strides = [1, 1]} : vector<16x64xf32> to vector<16x32xf32>
    %313 = vector.extract_strided_slice %311 {offsets = [0, 32], sizes = [16, 32], strides = [1, 1]} : vector<16x64xf32> to vector<16x32xf32>
    %cst_68 = arith.constant 0.000000e+00 : f32
    %314 = vector.broadcast %cst_68 : f32 to vector<16x32xf32>
    %315 = arith.maximumf %313, %314 : vector<16x32xf32>
    %316 = vector.broadcast %cst_68 : f32 to vector<16x32xf32>
    %317 = arith.subf %313, %316 : vector<16x32xf32>
    %318 = arith.cmpf one, %317, %317 : vector<16x32xf32>
    %319 = vector.broadcast %cst_68 : f32 to vector<16x32xf32>
    %320 = arith.addf %313, %319 : vector<16x32xf32>
    %321 = math.absf %317 : vector<16x32xf32>
    %cst_69 = arith.constant 0.000000e+00 : f32
    %322 = vector.broadcast %cst_69 : f32 to vector<16x32xf32>
    %323 = arith.subf %322, %321 : vector<16x32xf32>
    %324 = math.exp %323 : vector<16x32xf32>
    %325 = math.log1p %324 : vector<16x32xf32>
    %326 = arith.addf %315, %325 : vector<16x32xf32>
    %327 = arith.select %318, %320, %326 : vector<16x32xi1>, vector<16x32xf32>
    %328 = vector.extract_strided_slice %308 {offsets = [0, 0], sizes = [16, 256], strides = [1, 1]} : vector<16x320xf32> to vector<16x256xf32>
    %329 = arith.addf %328, %12 : vector<16x256xf32>
    %cst_70 = arith.constant 5.000000e-01 : f32
    %330 = vector.broadcast %cst_70 : f32 to vector<16x256xf32>
    %331 = arith.mulf %330, %329 : vector<16x256xf32>
    %332 = math.tanh %331 : vector<16x256xf32>
    %cst_71 = arith.constant 5.000000e-01 : f32
    %333 = vector.broadcast %cst_71 : f32 to vector<16x256xf32>
    %334 = arith.mulf %333, %332 : vector<16x256xf32>
    %cst_72 = arith.constant 5.000000e-01 : f32
    %335 = vector.broadcast %cst_72 : f32 to vector<16x256xf32>
    %336 = arith.addf %334, %335 : vector<16x256xf32>
    %337 = vector.extract_strided_slice %336 {offsets = [0, 0], sizes = [16, 64], strides = [1, 1]} : vector<16x256xf32> to vector<16x64xf32>
    %338 = vector.extract_strided_slice %336 {offsets = [0, 64], sizes = [16, 64], strides = [1, 1]} : vector<16x256xf32> to vector<16x64xf32>
    %339 = vector.extract_strided_slice %336 {offsets = [0, 128], sizes = [16, 64], strides = [1, 1]} : vector<16x256xf32> to vector<16x64xf32>
    %340 = vector.extract_strided_slice %336 {offsets = [0, 192], sizes = [16, 64], strides = [1, 1]} : vector<16x256xf32> to vector<16x64xf32>
    %341 = arith.mulf %337, %247 : vector<16x64xf32>
    %342 = arith.mulf %338, %340 : vector<16x64xf32>
    %343 = arith.addf %341, %342 : vector<16x64xf32>
    %344 = math.tanh %343 : vector<16x64xf32>
    %345 = arith.mulf %339, %344 : vector<16x64xf32>
    %346 = arith.truncf %345 : vector<16x64xf32> to vector<16x64xbf16>
    %cst_73 = arith.constant dense<0.000000e+00> : vector<16x64xf32>
    %347 = tpu.matmul %346, %2, %cst_73 {dimension_numbers = #tpu.dot_dimension_numbers<[1], [0], [0], [1], [0, 0, 1, 1], [], []>} : vector<16x64xbf16>, vector<64x64xbf16>, vector<16x64xf32> -> vector<16x64xf32>
    %348 = vector.broadcast %5 : vector<1x64xf32> to vector<16x64xf32>
    %349 = arith.addf %347, %348 : vector<16x64xf32>
    %350 = vector.extract_strided_slice %349 {offsets = [0, 0], sizes = [16, 32], strides = [1, 1]} : vector<16x64xf32> to vector<16x32xf32>
    %351 = vector.extract_strided_slice %349 {offsets = [0, 32], sizes = [16, 32], strides = [1, 1]} : vector<16x64xf32> to vector<16x32xf32>
    %cst_74 = arith.constant 0.000000e+00 : f32
    %352 = vector.broadcast %cst_74 : f32 to vector<16x32xf32>
    %353 = arith.maximumf %351, %352 : vector<16x32xf32>
    %354 = vector.broadcast %cst_74 : f32 to vector<16x32xf32>
    %355 = arith.subf %351, %354 : vector<16x32xf32>
    %356 = arith.cmpf one, %355, %355 : vector<16x32xf32>
    %357 = vector.broadcast %cst_74 : f32 to vector<16x32xf32>
    %358 = arith.addf %351, %357 : vector<16x32xf32>
    %359 = math.absf %355 : vector<16x32xf32>
    %cst_75 = arith.constant 0.000000e+00 : f32
    %360 = vector.broadcast %cst_75 : f32 to vector<16x32xf32>
    %361 = arith.subf %360, %359 : vector<16x32xf32>
    %362 = math.exp %361 : vector<16x32xf32>
    %363 = math.log1p %362 : vector<16x32xf32>
    %364 = arith.addf %353, %363 : vector<16x32xf32>
    %365 = arith.select %356, %358, %364 : vector<16x32xi1>, vector<16x32xf32>
    %366 = vector.extract_strided_slice %0 {offsets = [0, 96], sizes = [16, 32], strides = [1, 1]} : vector<16x256xf32> to vector<16x32xf32>
    %367 = arith.mulf %365, %366 : vector<16x32xf32>
    %368 = arith.addf %350, %367 : vector<16x32xf32>
    %369 = arith.truncf %368 : vector<16x32xf32> to vector<16x32xbf16>
    %cst_76 = arith.constant dense<0.000000e+00> : vector<16x256xf32>
    %370 = tpu.matmul %369, %3, %cst_76 {dimension_numbers = #tpu.dot_dimension_numbers<[1], [0], [0], [1], [0, 0, 1, 1], [], []>} : vector<16x32xbf16>, vector<32x256xbf16>, vector<16x256xf32> -> vector<16x256xf32>
    %371 = arith.addf %370, %13 : vector<16x256xf32>
    %cst_77 = arith.constant 5.000000e-01 : f32
    %372 = vector.broadcast %cst_77 : f32 to vector<16x256xf32>
    %373 = arith.mulf %372, %371 : vector<16x256xf32>
    %374 = math.tanh %373 : vector<16x256xf32>
    %cst_78 = arith.constant 5.000000e-01 : f32
    %375 = vector.broadcast %cst_78 : f32 to vector<16x256xf32>
    %376 = arith.mulf %375, %374 : vector<16x256xf32>
    %cst_79 = arith.constant 5.000000e-01 : f32
    %377 = vector.broadcast %cst_79 : f32 to vector<16x256xf32>
    %378 = arith.addf %376, %377 : vector<16x256xf32>
    %379 = vector.extract_strided_slice %378 {offsets = [0, 0], sizes = [16, 64], strides = [1, 1]} : vector<16x256xf32> to vector<16x64xf32>
    %380 = vector.extract_strided_slice %378 {offsets = [0, 64], sizes = [16, 64], strides = [1, 1]} : vector<16x256xf32> to vector<16x64xf32>
    %381 = vector.extract_strided_slice %378 {offsets = [0, 128], sizes = [16, 64], strides = [1, 1]} : vector<16x256xf32> to vector<16x64xf32>
    %382 = vector.extract_strided_slice %378 {offsets = [0, 192], sizes = [16, 64], strides = [1, 1]} : vector<16x256xf32> to vector<16x64xf32>
    %383 = arith.mulf %379, %289 : vector<16x64xf32>
    %384 = arith.mulf %380, %382 : vector<16x64xf32>
    %385 = arith.addf %383, %384 : vector<16x64xf32>
    %386 = math.tanh %385 : vector<16x64xf32>
    %387 = arith.mulf %381, %386 : vector<16x64xf32>
    %388 = arith.addf %292, %387 : vector<16x64xf32>
    %389 = tpu.reciprocal %327 {approx = true} : vector<16x32xf32> -> vector<16x32xf32>
    %390 = arith.mulf %365, %389 : vector<16x32xf32>
    %391 = arith.mulf %390, %390 : vector<16x32xf32>
    %392 = arith.subf %350, %312 : vector<16x32xf32>
    %393 = arith.mulf %392, %389 : vector<16x32xf32>
    %394 = arith.mulf %393, %393 : vector<16x32xf32>
    %395 = arith.addf %391, %394 : vector<16x32xf32>
    %cst_80 = arith.constant 1.000000e+00 : f32
    %396 = vector.broadcast %cst_80 : f32 to vector<16x32xf32>
    %397 = arith.subf %395, %396 : vector<16x32xf32>
    %398 = math.log %391 : vector<16x32xf32>
    %399 = arith.subf %397, %398 : vector<16x32xf32>
    %cst_81 = arith.constant 5.000000e-01 : f32
    %400 = vector.broadcast %cst_81 : f32 to vector<16x32xf32>
    %401 = arith.mulf %400, %399 : vector<16x32xf32>
    %402 = arith.addf %306, %401 : vector<16x32xf32>
    %403 = arith.truncf %387 : vector<16x64xf32> to vector<16x64xbf16>
    %cst_82 = arith.constant dense<0.000000e+00> : vector<16x320xf32>
    %404 = tpu.matmul %403, %1, %cst_82 {dimension_numbers = #tpu.dot_dimension_numbers<[1], [0], [0], [1], [0, 0, 1, 1], [], []>} : vector<16x64xbf16>, vector<64x320xbf16>, vector<16x320xf32> -> vector<16x320xf32>
    %405 = vector.extract_strided_slice %404 {offsets = [0, 256], sizes = [16, 64], strides = [1, 1]} : vector<16x320xf32> to vector<16x64xf32>
    %406 = vector.broadcast %4 : vector<1x64xf32> to vector<16x64xf32>
    %407 = arith.addf %405, %406 : vector<16x64xf32>
    %408 = vector.extract_strided_slice %407 {offsets = [0, 0], sizes = [16, 32], strides = [1, 1]} : vector<16x64xf32> to vector<16x32xf32>
    %409 = vector.extract_strided_slice %407 {offsets = [0, 32], sizes = [16, 32], strides = [1, 1]} : vector<16x64xf32> to vector<16x32xf32>
    %cst_83 = arith.constant 0.000000e+00 : f32
    %410 = vector.broadcast %cst_83 : f32 to vector<16x32xf32>
    %411 = arith.maximumf %409, %410 : vector<16x32xf32>
    %412 = vector.broadcast %cst_83 : f32 to vector<16x32xf32>
    %413 = arith.subf %409, %412 : vector<16x32xf32>
    %414 = arith.cmpf one, %413, %413 : vector<16x32xf32>
    %415 = vector.broadcast %cst_83 : f32 to vector<16x32xf32>
    %416 = arith.addf %409, %415 : vector<16x32xf32>
    %417 = math.absf %413 : vector<16x32xf32>
    %cst_84 = arith.constant 0.000000e+00 : f32
    %418 = vector.broadcast %cst_84 : f32 to vector<16x32xf32>
    %419 = arith.subf %418, %417 : vector<16x32xf32>
    %420 = math.exp %419 : vector<16x32xf32>
    %421 = math.log1p %420 : vector<16x32xf32>
    %422 = arith.addf %411, %421 : vector<16x32xf32>
    %423 = arith.select %414, %416, %422 : vector<16x32xi1>, vector<16x32xf32>
    %424 = vector.extract_strided_slice %404 {offsets = [0, 0], sizes = [16, 256], strides = [1, 1]} : vector<16x320xf32> to vector<16x256xf32>
    %425 = arith.addf %424, %12 : vector<16x256xf32>
    %cst_85 = arith.constant 5.000000e-01 : f32
    %426 = vector.broadcast %cst_85 : f32 to vector<16x256xf32>
    %427 = arith.mulf %426, %425 : vector<16x256xf32>
    %428 = math.tanh %427 : vector<16x256xf32>
    %cst_86 = arith.constant 5.000000e-01 : f32
    %429 = vector.broadcast %cst_86 : f32 to vector<16x256xf32>
    %430 = arith.mulf %429, %428 : vector<16x256xf32>
    %cst_87 = arith.constant 5.000000e-01 : f32
    %431 = vector.broadcast %cst_87 : f32 to vector<16x256xf32>
    %432 = arith.addf %430, %431 : vector<16x256xf32>
    %433 = vector.extract_strided_slice %432 {offsets = [0, 0], sizes = [16, 64], strides = [1, 1]} : vector<16x256xf32> to vector<16x64xf32>
    %434 = vector.extract_strided_slice %432 {offsets = [0, 64], sizes = [16, 64], strides = [1, 1]} : vector<16x256xf32> to vector<16x64xf32>
    %435 = vector.extract_strided_slice %432 {offsets = [0, 128], sizes = [16, 64], strides = [1, 1]} : vector<16x256xf32> to vector<16x64xf32>
    %436 = vector.extract_strided_slice %432 {offsets = [0, 192], sizes = [16, 64], strides = [1, 1]} : vector<16x256xf32> to vector<16x64xf32>
    %437 = arith.mulf %433, %343 : vector<16x64xf32>
    %438 = arith.mulf %434, %436 : vector<16x64xf32>
    %439 = arith.addf %437, %438 : vector<16x64xf32>
    %440 = math.tanh %439 : vector<16x64xf32>
    %441 = arith.mulf %435, %440 : vector<16x64xf32>
    %442 = arith.truncf %441 : vector<16x64xf32> to vector<16x64xbf16>
    %cst_88 = arith.constant dense<0.000000e+00> : vector<16x64xf32>
    %443 = tpu.matmul %442, %2, %cst_88 {dimension_numbers = #tpu.dot_dimension_numbers<[1], [0], [0], [1], [0, 0, 1, 1], [], []>} : vector<16x64xbf16>, vector<64x64xbf16>, vector<16x64xf32> -> vector<16x64xf32>
    %444 = vector.broadcast %5 : vector<1x64xf32> to vector<16x64xf32>
    %445 = arith.addf %443, %444 : vector<16x64xf32>
    %446 = vector.extract_strided_slice %445 {offsets = [0, 0], sizes = [16, 32], strides = [1, 1]} : vector<16x64xf32> to vector<16x32xf32>
    %447 = vector.extract_strided_slice %445 {offsets = [0, 32], sizes = [16, 32], strides = [1, 1]} : vector<16x64xf32> to vector<16x32xf32>
    %cst_89 = arith.constant 0.000000e+00 : f32
    %448 = vector.broadcast %cst_89 : f32 to vector<16x32xf32>
    %449 = arith.maximumf %447, %448 : vector<16x32xf32>
    %450 = vector.broadcast %cst_89 : f32 to vector<16x32xf32>
    %451 = arith.subf %447, %450 : vector<16x32xf32>
    %452 = arith.cmpf one, %451, %451 : vector<16x32xf32>
    %453 = vector.broadcast %cst_89 : f32 to vector<16x32xf32>
    %454 = arith.addf %447, %453 : vector<16x32xf32>
    %455 = math.absf %451 : vector<16x32xf32>
    %cst_90 = arith.constant 0.000000e+00 : f32
    %456 = vector.broadcast %cst_90 : f32 to vector<16x32xf32>
    %457 = arith.subf %456, %455 : vector<16x32xf32>
    %458 = math.exp %457 : vector<16x32xf32>
    %459 = math.log1p %458 : vector<16x32xf32>
    %460 = arith.addf %449, %459 : vector<16x32xf32>
    %461 = arith.select %452, %454, %460 : vector<16x32xi1>, vector<16x32xf32>
    %462 = vector.extract_strided_slice %0 {offsets = [0, 128], sizes = [16, 32], strides = [1, 1]} : vector<16x256xf32> to vector<16x32xf32>
    %463 = arith.mulf %461, %462 : vector<16x32xf32>
    %464 = arith.addf %446, %463 : vector<16x32xf32>
    %465 = arith.truncf %464 : vector<16x32xf32> to vector<16x32xbf16>
    %cst_91 = arith.constant dense<0.000000e+00> : vector<16x256xf32>
    %466 = tpu.matmul %465, %3, %cst_91 {dimension_numbers = #tpu.dot_dimension_numbers<[1], [0], [0], [1], [0, 0, 1, 1], [], []>} : vector<16x32xbf16>, vector<32x256xbf16>, vector<16x256xf32> -> vector<16x256xf32>
    %467 = arith.addf %466, %13 : vector<16x256xf32>
    %cst_92 = arith.constant 5.000000e-01 : f32
    %468 = vector.broadcast %cst_92 : f32 to vector<16x256xf32>
    %469 = arith.mulf %468, %467 : vector<16x256xf32>
    %470 = math.tanh %469 : vector<16x256xf32>
    %cst_93 = arith.constant 5.000000e-01 : f32
    %471 = vector.broadcast %cst_93 : f32 to vector<16x256xf32>
    %472 = arith.mulf %471, %470 : vector<16x256xf32>
    %cst_94 = arith.constant 5.000000e-01 : f32
    %473 = vector.broadcast %cst_94 : f32 to vector<16x256xf32>
    %474 = arith.addf %472, %473 : vector<16x256xf32>
    %475 = vector.extract_strided_slice %474 {offsets = [0, 0], sizes = [16, 64], strides = [1, 1]} : vector<16x256xf32> to vector<16x64xf32>
    %476 = vector.extract_strided_slice %474 {offsets = [0, 64], sizes = [16, 64], strides = [1, 1]} : vector<16x256xf32> to vector<16x64xf32>
    %477 = vector.extract_strided_slice %474 {offsets = [0, 128], sizes = [16, 64], strides = [1, 1]} : vector<16x256xf32> to vector<16x64xf32>
    %478 = vector.extract_strided_slice %474 {offsets = [0, 192], sizes = [16, 64], strides = [1, 1]} : vector<16x256xf32> to vector<16x64xf32>
    %479 = arith.mulf %475, %385 : vector<16x64xf32>
    %480 = arith.mulf %476, %478 : vector<16x64xf32>
    %481 = arith.addf %479, %480 : vector<16x64xf32>
    %482 = math.tanh %481 : vector<16x64xf32>
    %483 = arith.mulf %477, %482 : vector<16x64xf32>
    %484 = arith.addf %388, %483 : vector<16x64xf32>
    %485 = tpu.reciprocal %423 {approx = true} : vector<16x32xf32> -> vector<16x32xf32>
    %486 = arith.mulf %461, %485 : vector<16x32xf32>
    %487 = arith.mulf %486, %486 : vector<16x32xf32>
    %488 = arith.subf %446, %408 : vector<16x32xf32>
    %489 = arith.mulf %488, %485 : vector<16x32xf32>
    %490 = arith.mulf %489, %489 : vector<16x32xf32>
    %491 = arith.addf %487, %490 : vector<16x32xf32>
    %cst_95 = arith.constant 1.000000e+00 : f32
    %492 = vector.broadcast %cst_95 : f32 to vector<16x32xf32>
    %493 = arith.subf %491, %492 : vector<16x32xf32>
    %494 = math.log %487 : vector<16x32xf32>
    %495 = arith.subf %493, %494 : vector<16x32xf32>
    %cst_96 = arith.constant 5.000000e-01 : f32
    %496 = vector.broadcast %cst_96 : f32 to vector<16x32xf32>
    %497 = arith.mulf %496, %495 : vector<16x32xf32>
    %498 = arith.addf %402, %497 : vector<16x32xf32>
    %499 = arith.truncf %483 : vector<16x64xf32> to vector<16x64xbf16>
    %cst_97 = arith.constant dense<0.000000e+00> : vector<16x320xf32>
    %500 = tpu.matmul %499, %1, %cst_97 {dimension_numbers = #tpu.dot_dimension_numbers<[1], [0], [0], [1], [0, 0, 1, 1], [], []>} : vector<16x64xbf16>, vector<64x320xbf16>, vector<16x320xf32> -> vector<16x320xf32>
    %501 = vector.extract_strided_slice %500 {offsets = [0, 256], sizes = [16, 64], strides = [1, 1]} : vector<16x320xf32> to vector<16x64xf32>
    %502 = vector.broadcast %4 : vector<1x64xf32> to vector<16x64xf32>
    %503 = arith.addf %501, %502 : vector<16x64xf32>
    %504 = vector.extract_strided_slice %503 {offsets = [0, 0], sizes = [16, 32], strides = [1, 1]} : vector<16x64xf32> to vector<16x32xf32>
    %505 = vector.extract_strided_slice %503 {offsets = [0, 32], sizes = [16, 32], strides = [1, 1]} : vector<16x64xf32> to vector<16x32xf32>
    %cst_98 = arith.constant 0.000000e+00 : f32
    %506 = vector.broadcast %cst_98 : f32 to vector<16x32xf32>
    %507 = arith.maximumf %505, %506 : vector<16x32xf32>
    %508 = vector.broadcast %cst_98 : f32 to vector<16x32xf32>
    %509 = arith.subf %505, %508 : vector<16x32xf32>
    %510 = arith.cmpf one, %509, %509 : vector<16x32xf32>
    %511 = vector.broadcast %cst_98 : f32 to vector<16x32xf32>
    %512 = arith.addf %505, %511 : vector<16x32xf32>
    %513 = math.absf %509 : vector<16x32xf32>
    %cst_99 = arith.constant 0.000000e+00 : f32
    %514 = vector.broadcast %cst_99 : f32 to vector<16x32xf32>
    %515 = arith.subf %514, %513 : vector<16x32xf32>
    %516 = math.exp %515 : vector<16x32xf32>
    %517 = math.log1p %516 : vector<16x32xf32>
    %518 = arith.addf %507, %517 : vector<16x32xf32>
    %519 = arith.select %510, %512, %518 : vector<16x32xi1>, vector<16x32xf32>
    %520 = vector.extract_strided_slice %500 {offsets = [0, 0], sizes = [16, 256], strides = [1, 1]} : vector<16x320xf32> to vector<16x256xf32>
    %521 = arith.addf %520, %12 : vector<16x256xf32>
    %cst_100 = arith.constant 5.000000e-01 : f32
    %522 = vector.broadcast %cst_100 : f32 to vector<16x256xf32>
    %523 = arith.mulf %522, %521 : vector<16x256xf32>
    %524 = math.tanh %523 : vector<16x256xf32>
    %cst_101 = arith.constant 5.000000e-01 : f32
    %525 = vector.broadcast %cst_101 : f32 to vector<16x256xf32>
    %526 = arith.mulf %525, %524 : vector<16x256xf32>
    %cst_102 = arith.constant 5.000000e-01 : f32
    %527 = vector.broadcast %cst_102 : f32 to vector<16x256xf32>
    %528 = arith.addf %526, %527 : vector<16x256xf32>
    %529 = vector.extract_strided_slice %528 {offsets = [0, 0], sizes = [16, 64], strides = [1, 1]} : vector<16x256xf32> to vector<16x64xf32>
    %530 = vector.extract_strided_slice %528 {offsets = [0, 64], sizes = [16, 64], strides = [1, 1]} : vector<16x256xf32> to vector<16x64xf32>
    %531 = vector.extract_strided_slice %528 {offsets = [0, 128], sizes = [16, 64], strides = [1, 1]} : vector<16x256xf32> to vector<16x64xf32>
    %532 = vector.extract_strided_slice %528 {offsets = [0, 192], sizes = [16, 64], strides = [1, 1]} : vector<16x256xf32> to vector<16x64xf32>
    %533 = arith.mulf %529, %439 : vector<16x64xf32>
    %534 = arith.mulf %530, %532 : vector<16x64xf32>
    %535 = arith.addf %533, %534 : vector<16x64xf32>
    %536 = math.tanh %535 : vector<16x64xf32>
    %537 = arith.mulf %531, %536 : vector<16x64xf32>
    %538 = arith.truncf %537 : vector<16x64xf32> to vector<16x64xbf16>
    %cst_103 = arith.constant dense<0.000000e+00> : vector<16x64xf32>
    %539 = tpu.matmul %538, %2, %cst_103 {dimension_numbers = #tpu.dot_dimension_numbers<[1], [0], [0], [1], [0, 0, 1, 1], [], []>} : vector<16x64xbf16>, vector<64x64xbf16>, vector<16x64xf32> -> vector<16x64xf32>
    %540 = vector.broadcast %5 : vector<1x64xf32> to vector<16x64xf32>
    %541 = arith.addf %539, %540 : vector<16x64xf32>
    %542 = vector.extract_strided_slice %541 {offsets = [0, 0], sizes = [16, 32], strides = [1, 1]} : vector<16x64xf32> to vector<16x32xf32>
    %543 = vector.extract_strided_slice %541 {offsets = [0, 32], sizes = [16, 32], strides = [1, 1]} : vector<16x64xf32> to vector<16x32xf32>
    %cst_104 = arith.constant 0.000000e+00 : f32
    %544 = vector.broadcast %cst_104 : f32 to vector<16x32xf32>
    %545 = arith.maximumf %543, %544 : vector<16x32xf32>
    %546 = vector.broadcast %cst_104 : f32 to vector<16x32xf32>
    %547 = arith.subf %543, %546 : vector<16x32xf32>
    %548 = arith.cmpf one, %547, %547 : vector<16x32xf32>
    %549 = vector.broadcast %cst_104 : f32 to vector<16x32xf32>
    %550 = arith.addf %543, %549 : vector<16x32xf32>
    %551 = math.absf %547 : vector<16x32xf32>
    %cst_105 = arith.constant 0.000000e+00 : f32
    %552 = vector.broadcast %cst_105 : f32 to vector<16x32xf32>
    %553 = arith.subf %552, %551 : vector<16x32xf32>
    %554 = math.exp %553 : vector<16x32xf32>
    %555 = math.log1p %554 : vector<16x32xf32>
    %556 = arith.addf %545, %555 : vector<16x32xf32>
    %557 = arith.select %548, %550, %556 : vector<16x32xi1>, vector<16x32xf32>
    %558 = vector.extract_strided_slice %0 {offsets = [0, 160], sizes = [16, 32], strides = [1, 1]} : vector<16x256xf32> to vector<16x32xf32>
    %559 = arith.mulf %557, %558 : vector<16x32xf32>
    %560 = arith.addf %542, %559 : vector<16x32xf32>
    %561 = arith.truncf %560 : vector<16x32xf32> to vector<16x32xbf16>
    %cst_106 = arith.constant dense<0.000000e+00> : vector<16x256xf32>
    %562 = tpu.matmul %561, %3, %cst_106 {dimension_numbers = #tpu.dot_dimension_numbers<[1], [0], [0], [1], [0, 0, 1, 1], [], []>} : vector<16x32xbf16>, vector<32x256xbf16>, vector<16x256xf32> -> vector<16x256xf32>
    %563 = arith.addf %562, %13 : vector<16x256xf32>
    %cst_107 = arith.constant 5.000000e-01 : f32
    %564 = vector.broadcast %cst_107 : f32 to vector<16x256xf32>
    %565 = arith.mulf %564, %563 : vector<16x256xf32>
    %566 = math.tanh %565 : vector<16x256xf32>
    %cst_108 = arith.constant 5.000000e-01 : f32
    %567 = vector.broadcast %cst_108 : f32 to vector<16x256xf32>
    %568 = arith.mulf %567, %566 : vector<16x256xf32>
    %cst_109 = arith.constant 5.000000e-01 : f32
    %569 = vector.broadcast %cst_109 : f32 to vector<16x256xf32>
    %570 = arith.addf %568, %569 : vector<16x256xf32>
    %571 = vector.extract_strided_slice %570 {offsets = [0, 0], sizes = [16, 64], strides = [1, 1]} : vector<16x256xf32> to vector<16x64xf32>
    %572 = vector.extract_strided_slice %570 {offsets = [0, 64], sizes = [16, 64], strides = [1, 1]} : vector<16x256xf32> to vector<16x64xf32>
    %573 = vector.extract_strided_slice %570 {offsets = [0, 128], sizes = [16, 64], strides = [1, 1]} : vector<16x256xf32> to vector<16x64xf32>
    %574 = vector.extract_strided_slice %570 {offsets = [0, 192], sizes = [16, 64], strides = [1, 1]} : vector<16x256xf32> to vector<16x64xf32>
    %575 = arith.mulf %571, %481 : vector<16x64xf32>
    %576 = arith.mulf %572, %574 : vector<16x64xf32>
    %577 = arith.addf %575, %576 : vector<16x64xf32>
    %578 = math.tanh %577 : vector<16x64xf32>
    %579 = arith.mulf %573, %578 : vector<16x64xf32>
    %580 = arith.addf %484, %579 : vector<16x64xf32>
    %581 = tpu.reciprocal %519 {approx = true} : vector<16x32xf32> -> vector<16x32xf32>
    %582 = arith.mulf %557, %581 : vector<16x32xf32>
    %583 = arith.mulf %582, %582 : vector<16x32xf32>
    %584 = arith.subf %542, %504 : vector<16x32xf32>
    %585 = arith.mulf %584, %581 : vector<16x32xf32>
    %586 = arith.mulf %585, %585 : vector<16x32xf32>
    %587 = arith.addf %583, %586 : vector<16x32xf32>
    %cst_110 = arith.constant 1.000000e+00 : f32
    %588 = vector.broadcast %cst_110 : f32 to vector<16x32xf32>
    %589 = arith.subf %587, %588 : vector<16x32xf32>
    %590 = math.log %583 : vector<16x32xf32>
    %591 = arith.subf %589, %590 : vector<16x32xf32>
    %cst_111 = arith.constant 5.000000e-01 : f32
    %592 = vector.broadcast %cst_111 : f32 to vector<16x32xf32>
    %593 = arith.mulf %592, %591 : vector<16x32xf32>
    %594 = arith.addf %498, %593 : vector<16x32xf32>
    %595 = arith.truncf %579 : vector<16x64xf32> to vector<16x64xbf16>
    %cst_112 = arith.constant dense<0.000000e+00> : vector<16x320xf32>
    %596 = tpu.matmul %595, %1, %cst_112 {dimension_numbers = #tpu.dot_dimension_numbers<[1], [0], [0], [1], [0, 0, 1, 1], [], []>} : vector<16x64xbf16>, vector<64x320xbf16>, vector<16x320xf32> -> vector<16x320xf32>
    %597 = vector.extract_strided_slice %596 {offsets = [0, 256], sizes = [16, 64], strides = [1, 1]} : vector<16x320xf32> to vector<16x64xf32>
    %598 = vector.broadcast %4 : vector<1x64xf32> to vector<16x64xf32>
    %599 = arith.addf %597, %598 : vector<16x64xf32>
    %600 = vector.extract_strided_slice %599 {offsets = [0, 0], sizes = [16, 32], strides = [1, 1]} : vector<16x64xf32> to vector<16x32xf32>
    %601 = vector.extract_strided_slice %599 {offsets = [0, 32], sizes = [16, 32], strides = [1, 1]} : vector<16x64xf32> to vector<16x32xf32>
    %cst_113 = arith.constant 0.000000e+00 : f32
    %602 = vector.broadcast %cst_113 : f32 to vector<16x32xf32>
    %603 = arith.maximumf %601, %602 : vector<16x32xf32>
    %604 = vector.broadcast %cst_113 : f32 to vector<16x32xf32>
    %605 = arith.subf %601, %604 : vector<16x32xf32>
    %606 = arith.cmpf one, %605, %605 : vector<16x32xf32>
    %607 = vector.broadcast %cst_113 : f32 to vector<16x32xf32>
    %608 = arith.addf %601, %607 : vector<16x32xf32>
    %609 = math.absf %605 : vector<16x32xf32>
    %cst_114 = arith.constant 0.000000e+00 : f32
    %610 = vector.broadcast %cst_114 : f32 to vector<16x32xf32>
    %611 = arith.subf %610, %609 : vector<16x32xf32>
    %612 = math.exp %611 : vector<16x32xf32>
    %613 = math.log1p %612 : vector<16x32xf32>
    %614 = arith.addf %603, %613 : vector<16x32xf32>
    %615 = arith.select %606, %608, %614 : vector<16x32xi1>, vector<16x32xf32>
    %616 = vector.extract_strided_slice %596 {offsets = [0, 0], sizes = [16, 256], strides = [1, 1]} : vector<16x320xf32> to vector<16x256xf32>
    %617 = arith.addf %616, %12 : vector<16x256xf32>
    %cst_115 = arith.constant 5.000000e-01 : f32
    %618 = vector.broadcast %cst_115 : f32 to vector<16x256xf32>
    %619 = arith.mulf %618, %617 : vector<16x256xf32>
    %620 = math.tanh %619 : vector<16x256xf32>
    %cst_116 = arith.constant 5.000000e-01 : f32
    %621 = vector.broadcast %cst_116 : f32 to vector<16x256xf32>
    %622 = arith.mulf %621, %620 : vector<16x256xf32>
    %cst_117 = arith.constant 5.000000e-01 : f32
    %623 = vector.broadcast %cst_117 : f32 to vector<16x256xf32>
    %624 = arith.addf %622, %623 : vector<16x256xf32>
    %625 = vector.extract_strided_slice %624 {offsets = [0, 0], sizes = [16, 64], strides = [1, 1]} : vector<16x256xf32> to vector<16x64xf32>
    %626 = vector.extract_strided_slice %624 {offsets = [0, 64], sizes = [16, 64], strides = [1, 1]} : vector<16x256xf32> to vector<16x64xf32>
    %627 = vector.extract_strided_slice %624 {offsets = [0, 128], sizes = [16, 64], strides = [1, 1]} : vector<16x256xf32> to vector<16x64xf32>
    %628 = vector.extract_strided_slice %624 {offsets = [0, 192], sizes = [16, 64], strides = [1, 1]} : vector<16x256xf32> to vector<16x64xf32>
    %629 = arith.mulf %625, %535 : vector<16x64xf32>
    %630 = arith.mulf %626, %628 : vector<16x64xf32>
    %631 = arith.addf %629, %630 : vector<16x64xf32>
    %632 = math.tanh %631 : vector<16x64xf32>
    %633 = arith.mulf %627, %632 : vector<16x64xf32>
    %634 = arith.truncf %633 : vector<16x64xf32> to vector<16x64xbf16>
    %cst_118 = arith.constant dense<0.000000e+00> : vector<16x64xf32>
    %635 = tpu.matmul %634, %2, %cst_118 {dimension_numbers = #tpu.dot_dimension_numbers<[1], [0], [0], [1], [0, 0, 1, 1], [], []>} : vector<16x64xbf16>, vector<64x64xbf16>, vector<16x64xf32> -> vector<16x64xf32>
    %636 = vector.broadcast %5 : vector<1x64xf32> to vector<16x64xf32>
    %637 = arith.addf %635, %636 : vector<16x64xf32>
    %638 = vector.extract_strided_slice %637 {offsets = [0, 0], sizes = [16, 32], strides = [1, 1]} : vector<16x64xf32> to vector<16x32xf32>
    %639 = vector.extract_strided_slice %637 {offsets = [0, 32], sizes = [16, 32], strides = [1, 1]} : vector<16x64xf32> to vector<16x32xf32>
    %cst_119 = arith.constant 0.000000e+00 : f32
    %640 = vector.broadcast %cst_119 : f32 to vector<16x32xf32>
    %641 = arith.maximumf %639, %640 : vector<16x32xf32>
    %642 = vector.broadcast %cst_119 : f32 to vector<16x32xf32>
    %643 = arith.subf %639, %642 : vector<16x32xf32>
    %644 = arith.cmpf one, %643, %643 : vector<16x32xf32>
    %645 = vector.broadcast %cst_119 : f32 to vector<16x32xf32>
    %646 = arith.addf %639, %645 : vector<16x32xf32>
    %647 = math.absf %643 : vector<16x32xf32>
    %cst_120 = arith.constant 0.000000e+00 : f32
    %648 = vector.broadcast %cst_120 : f32 to vector<16x32xf32>
    %649 = arith.subf %648, %647 : vector<16x32xf32>
    %650 = math.exp %649 : vector<16x32xf32>
    %651 = math.log1p %650 : vector<16x32xf32>
    %652 = arith.addf %641, %651 : vector<16x32xf32>
    %653 = arith.select %644, %646, %652 : vector<16x32xi1>, vector<16x32xf32>
    %654 = vector.extract_strided_slice %0 {offsets = [0, 192], sizes = [16, 32], strides = [1, 1]} : vector<16x256xf32> to vector<16x32xf32>
    %655 = arith.mulf %653, %654 : vector<16x32xf32>
    %656 = arith.addf %638, %655 : vector<16x32xf32>
    %657 = arith.truncf %656 : vector<16x32xf32> to vector<16x32xbf16>
    %cst_121 = arith.constant dense<0.000000e+00> : vector<16x256xf32>
    %658 = tpu.matmul %657, %3, %cst_121 {dimension_numbers = #tpu.dot_dimension_numbers<[1], [0], [0], [1], [0, 0, 1, 1], [], []>} : vector<16x32xbf16>, vector<32x256xbf16>, vector<16x256xf32> -> vector<16x256xf32>
    %659 = arith.addf %658, %13 : vector<16x256xf32>
    %cst_122 = arith.constant 5.000000e-01 : f32
    %660 = vector.broadcast %cst_122 : f32 to vector<16x256xf32>
    %661 = arith.mulf %660, %659 : vector<16x256xf32>
    %662 = math.tanh %661 : vector<16x256xf32>
    %cst_123 = arith.constant 5.000000e-01 : f32
    %663 = vector.broadcast %cst_123 : f32 to vector<16x256xf32>
    %664 = arith.mulf %663, %662 : vector<16x256xf32>
    %cst_124 = arith.constant 5.000000e-01 : f32
    %665 = vector.broadcast %cst_124 : f32 to vector<16x256xf32>
    %666 = arith.addf %664, %665 : vector<16x256xf32>
    %667 = vector.extract_strided_slice %666 {offsets = [0, 0], sizes = [16, 64], strides = [1, 1]} : vector<16x256xf32> to vector<16x64xf32>
    %668 = vector.extract_strided_slice %666 {offsets = [0, 64], sizes = [16, 64], strides = [1, 1]} : vector<16x256xf32> to vector<16x64xf32>
    %669 = vector.extract_strided_slice %666 {offsets = [0, 128], sizes = [16, 64], strides = [1, 1]} : vector<16x256xf32> to vector<16x64xf32>
    %670 = vector.extract_strided_slice %666 {offsets = [0, 192], sizes = [16, 64], strides = [1, 1]} : vector<16x256xf32> to vector<16x64xf32>
    %671 = arith.mulf %667, %577 : vector<16x64xf32>
    %672 = arith.mulf %668, %670 : vector<16x64xf32>
    %673 = arith.addf %671, %672 : vector<16x64xf32>
    %674 = math.tanh %673 : vector<16x64xf32>
    %675 = arith.mulf %669, %674 : vector<16x64xf32>
    %676 = arith.addf %580, %675 : vector<16x64xf32>
    %677 = tpu.reciprocal %615 {approx = true} : vector<16x32xf32> -> vector<16x32xf32>
    %678 = arith.mulf %653, %677 : vector<16x32xf32>
    %679 = arith.mulf %678, %678 : vector<16x32xf32>
    %680 = arith.subf %638, %600 : vector<16x32xf32>
    %681 = arith.mulf %680, %677 : vector<16x32xf32>
    %682 = arith.mulf %681, %681 : vector<16x32xf32>
    %683 = arith.addf %679, %682 : vector<16x32xf32>
    %cst_125 = arith.constant 1.000000e+00 : f32
    %684 = vector.broadcast %cst_125 : f32 to vector<16x32xf32>
    %685 = arith.subf %683, %684 : vector<16x32xf32>
    %686 = math.log %679 : vector<16x32xf32>
    %687 = arith.subf %685, %686 : vector<16x32xf32>
    %cst_126 = arith.constant 5.000000e-01 : f32
    %688 = vector.broadcast %cst_126 : f32 to vector<16x32xf32>
    %689 = arith.mulf %688, %687 : vector<16x32xf32>
    %690 = arith.addf %594, %689 : vector<16x32xf32>
    %691 = arith.truncf %675 : vector<16x64xf32> to vector<16x64xbf16>
    %cst_127 = arith.constant dense<0.000000e+00> : vector<16x320xf32>
    %692 = tpu.matmul %691, %1, %cst_127 {dimension_numbers = #tpu.dot_dimension_numbers<[1], [0], [0], [1], [0, 0, 1, 1], [], []>} : vector<16x64xbf16>, vector<64x320xbf16>, vector<16x320xf32> -> vector<16x320xf32>
    %693 = vector.extract_strided_slice %692 {offsets = [0, 256], sizes = [16, 64], strides = [1, 1]} : vector<16x320xf32> to vector<16x64xf32>
    %694 = vector.broadcast %4 : vector<1x64xf32> to vector<16x64xf32>
    %695 = arith.addf %693, %694 : vector<16x64xf32>
    %696 = vector.extract_strided_slice %695 {offsets = [0, 0], sizes = [16, 32], strides = [1, 1]} : vector<16x64xf32> to vector<16x32xf32>
    %697 = vector.extract_strided_slice %695 {offsets = [0, 32], sizes = [16, 32], strides = [1, 1]} : vector<16x64xf32> to vector<16x32xf32>
    %cst_128 = arith.constant 0.000000e+00 : f32
    %698 = vector.broadcast %cst_128 : f32 to vector<16x32xf32>
    %699 = arith.maximumf %697, %698 : vector<16x32xf32>
    %700 = vector.broadcast %cst_128 : f32 to vector<16x32xf32>
    %701 = arith.subf %697, %700 : vector<16x32xf32>
    %702 = arith.cmpf one, %701, %701 : vector<16x32xf32>
    %703 = vector.broadcast %cst_128 : f32 to vector<16x32xf32>
    %704 = arith.addf %697, %703 : vector<16x32xf32>
    %705 = math.absf %701 : vector<16x32xf32>
    %cst_129 = arith.constant 0.000000e+00 : f32
    %706 = vector.broadcast %cst_129 : f32 to vector<16x32xf32>
    %707 = arith.subf %706, %705 : vector<16x32xf32>
    %708 = math.exp %707 : vector<16x32xf32>
    %709 = math.log1p %708 : vector<16x32xf32>
    %710 = arith.addf %699, %709 : vector<16x32xf32>
    %711 = arith.select %702, %704, %710 : vector<16x32xi1>, vector<16x32xf32>
    %712 = vector.extract_strided_slice %692 {offsets = [0, 0], sizes = [16, 256], strides = [1, 1]} : vector<16x320xf32> to vector<16x256xf32>
    %713 = arith.addf %712, %12 : vector<16x256xf32>
    %cst_130 = arith.constant 5.000000e-01 : f32
    %714 = vector.broadcast %cst_130 : f32 to vector<16x256xf32>
    %715 = arith.mulf %714, %713 : vector<16x256xf32>
    %716 = math.tanh %715 : vector<16x256xf32>
    %cst_131 = arith.constant 5.000000e-01 : f32
    %717 = vector.broadcast %cst_131 : f32 to vector<16x256xf32>
    %718 = arith.mulf %717, %716 : vector<16x256xf32>
    %cst_132 = arith.constant 5.000000e-01 : f32
    %719 = vector.broadcast %cst_132 : f32 to vector<16x256xf32>
    %720 = arith.addf %718, %719 : vector<16x256xf32>
    %721 = vector.extract_strided_slice %720 {offsets = [0, 0], sizes = [16, 64], strides = [1, 1]} : vector<16x256xf32> to vector<16x64xf32>
    %722 = vector.extract_strided_slice %720 {offsets = [0, 64], sizes = [16, 64], strides = [1, 1]} : vector<16x256xf32> to vector<16x64xf32>
    %723 = vector.extract_strided_slice %720 {offsets = [0, 128], sizes = [16, 64], strides = [1, 1]} : vector<16x256xf32> to vector<16x64xf32>
    %724 = vector.extract_strided_slice %720 {offsets = [0, 192], sizes = [16, 64], strides = [1, 1]} : vector<16x256xf32> to vector<16x64xf32>
    %725 = arith.mulf %721, %631 : vector<16x64xf32>
    %726 = arith.mulf %722, %724 : vector<16x64xf32>
    %727 = arith.addf %725, %726 : vector<16x64xf32>
    %728 = math.tanh %727 : vector<16x64xf32>
    %729 = arith.mulf %723, %728 : vector<16x64xf32>
    %730 = arith.truncf %729 : vector<16x64xf32> to vector<16x64xbf16>
    %cst_133 = arith.constant dense<0.000000e+00> : vector<16x64xf32>
    %731 = tpu.matmul %730, %2, %cst_133 {dimension_numbers = #tpu.dot_dimension_numbers<[1], [0], [0], [1], [0, 0, 1, 1], [], []>} : vector<16x64xbf16>, vector<64x64xbf16>, vector<16x64xf32> -> vector<16x64xf32>
    %732 = vector.broadcast %5 : vector<1x64xf32> to vector<16x64xf32>
    %733 = arith.addf %731, %732 : vector<16x64xf32>
    %734 = vector.extract_strided_slice %733 {offsets = [0, 0], sizes = [16, 32], strides = [1, 1]} : vector<16x64xf32> to vector<16x32xf32>
    %735 = vector.extract_strided_slice %733 {offsets = [0, 32], sizes = [16, 32], strides = [1, 1]} : vector<16x64xf32> to vector<16x32xf32>
    %cst_134 = arith.constant 0.000000e+00 : f32
    %736 = vector.broadcast %cst_134 : f32 to vector<16x32xf32>
    %737 = arith.maximumf %735, %736 : vector<16x32xf32>
    %738 = vector.broadcast %cst_134 : f32 to vector<16x32xf32>
    %739 = arith.subf %735, %738 : vector<16x32xf32>
    %740 = arith.cmpf one, %739, %739 : vector<16x32xf32>
    %741 = vector.broadcast %cst_134 : f32 to vector<16x32xf32>
    %742 = arith.addf %735, %741 : vector<16x32xf32>
    %743 = math.absf %739 : vector<16x32xf32>
    %cst_135 = arith.constant 0.000000e+00 : f32
    %744 = vector.broadcast %cst_135 : f32 to vector<16x32xf32>
    %745 = arith.subf %744, %743 : vector<16x32xf32>
    %746 = math.exp %745 : vector<16x32xf32>
    %747 = math.log1p %746 : vector<16x32xf32>
    %748 = arith.addf %737, %747 : vector<16x32xf32>
    %749 = arith.select %740, %742, %748 : vector<16x32xi1>, vector<16x32xf32>
    %750 = vector.extract_strided_slice %0 {offsets = [0, 224], sizes = [16, 32], strides = [1, 1]} : vector<16x256xf32> to vector<16x32xf32>
    %751 = arith.mulf %749, %750 : vector<16x32xf32>
    %752 = arith.addf %734, %751 : vector<16x32xf32>
    %753 = arith.truncf %752 : vector<16x32xf32> to vector<16x32xbf16>
    %cst_136 = arith.constant dense<0.000000e+00> : vector<16x256xf32>
    %754 = tpu.matmul %753, %3, %cst_136 {dimension_numbers = #tpu.dot_dimension_numbers<[1], [0], [0], [1], [0, 0, 1, 1], [], []>} : vector<16x32xbf16>, vector<32x256xbf16>, vector<16x256xf32> -> vector<16x256xf32>
    %755 = arith.addf %754, %13 : vector<16x256xf32>
    %cst_137 = arith.constant 5.000000e-01 : f32
    %756 = vector.broadcast %cst_137 : f32 to vector<16x256xf32>
    %757 = arith.mulf %756, %755 : vector<16x256xf32>
    %758 = math.tanh %757 : vector<16x256xf32>
    %cst_138 = arith.constant 5.000000e-01 : f32
    %759 = vector.broadcast %cst_138 : f32 to vector<16x256xf32>
    %760 = arith.mulf %759, %758 : vector<16x256xf32>
    %cst_139 = arith.constant 5.000000e-01 : f32
    %761 = vector.broadcast %cst_139 : f32 to vector<16x256xf32>
    %762 = arith.addf %760, %761 : vector<16x256xf32>
    %763 = vector.extract_strided_slice %762 {offsets = [0, 0], sizes = [16, 64], strides = [1, 1]} : vector<16x256xf32> to vector<16x64xf32>
    %764 = vector.extract_strided_slice %762 {offsets = [0, 64], sizes = [16, 64], strides = [1, 1]} : vector<16x256xf32> to vector<16x64xf32>
    %765 = vector.extract_strided_slice %762 {offsets = [0, 128], sizes = [16, 64], strides = [1, 1]} : vector<16x256xf32> to vector<16x64xf32>
    %766 = vector.extract_strided_slice %762 {offsets = [0, 192], sizes = [16, 64], strides = [1, 1]} : vector<16x256xf32> to vector<16x64xf32>
    %767 = arith.mulf %763, %673 : vector<16x64xf32>
    %768 = arith.mulf %764, %766 : vector<16x64xf32>
    %769 = arith.addf %767, %768 : vector<16x64xf32>
    %770 = math.tanh %769 : vector<16x64xf32>
    %771 = arith.mulf %765, %770 : vector<16x64xf32>
    %772 = arith.addf %676, %771 : vector<16x64xf32>
    %773 = tpu.reciprocal %711 {approx = true} : vector<16x32xf32> -> vector<16x32xf32>
    %774 = arith.mulf %749, %773 : vector<16x32xf32>
    %775 = arith.mulf %774, %774 : vector<16x32xf32>
    %776 = arith.subf %734, %696 : vector<16x32xf32>
    %777 = arith.mulf %776, %773 : vector<16x32xf32>
    %778 = arith.mulf %777, %777 : vector<16x32xf32>
    %779 = arith.addf %775, %778 : vector<16x32xf32>
    %cst_140 = arith.constant 1.000000e+00 : f32
    %780 = vector.broadcast %cst_140 : f32 to vector<16x32xf32>
    %781 = arith.subf %779, %780 : vector<16x32xf32>
    %782 = math.log %775 : vector<16x32xf32>
    %783 = arith.subf %781, %782 : vector<16x32xf32>
    %cst_141 = arith.constant 5.000000e-01 : f32
    %784 = vector.broadcast %cst_141 : f32 to vector<16x32xf32>
    %785 = arith.mulf %784, %783 : vector<16x32xf32>
    %786 = arith.addf %690, %785 : vector<16x32xf32>
    %c0_142 = arith.constant 0 : index
    %c0_143 = arith.constant 0 : index
    %787 = vector.load %arg10[%c0_142, %c0_143] : memref<1x64xf32, #tpu.memory_space<vmem>>, vector<1x64xf32>
    %788 = vector.broadcast %787 : vector<1x64xf32> to vector<16x64xf32>
    %789 = arith.mulf %772, %788 : vector<16x64xf32>
    %cst_144 = arith.constant dense<0.000000e+00> : vector<16xf32>
    %790 = vector.multi_reduction <add>, %789, %cst_144 [1] : vector<16x64xf32> to vector<16xf32>
    %791 = vector.shape_cast %790 : vector<16xf32> to vector<16x1xf32>
    %c0_145 = arith.constant 0 : index
    %c0_146 = arith.constant 0 : index
    %792 = vector.load %arg11[%c0_145, %c0_146] : memref<1x1xf32, #tpu.memory_space<vmem>>, vector<1x1xf32>
    %793 = vector.broadcast %792 : vector<1x1xf32> to vector<16x1xf32>
    %794 = arith.addf %791, %793 : vector<16x1xf32>
    %795 = math.tanh %794 : vector<16x1xf32>
    %cst_147 = arith.constant 0.000000e+00 : f32
    %796 = vector.broadcast %cst_147 : f32 to vector<16x128xf32>
    %c0_148 = arith.constant 0 : index
    %c0_149 = arith.constant 0 : index
    %797 = vector.load %arg12[%c0_148, %c0_149] : memref<16x128xf32, #tpu.memory_space<vmem>>, vector<16x128xf32>
    tpu.vector_store %arg12[%c0_148, %c0_149], %796 {strides = array<i32>} : memref<16x128xf32, #tpu.memory_space<vmem>>, vector<16x128xf32>,
    %c0_150 = arith.constant 0 : index
    %c0_151 = arith.constant 0 : index
    %798 = vector.load %arg12[%c0_150, %c0_151] : memref<16x128xf32, #tpu.memory_space<vmem>>, vector<16x1xf32>
    tpu.vector_store %arg12[%c0_150, %c0_151], %795 {strides = array<i32>} : memref<16x128xf32, #tpu.memory_space<vmem>>, vector<16x1xf32>,
    %c0_152 = arith.constant 0 : index
    %c1 = arith.constant 1 : index
    %799 = vector.load %arg12[%c0_152, %c1] : memref<16x128xf32, #tpu.memory_space<vmem>>, vector<16x32xf32>
    tpu.vector_store %arg12[%c0_152, %c1], %786 {strides = array<i32>} : memref<16x128xf32, #tpu.memory_space<vmem>>, vector<16x32xf32>,
    return
  }
  func.func @transform_0(%arg0: i32) -> (i32, i32) {
    %c0_i32 = arith.constant 0 : i32
    %c0_i32_0 = arith.constant 0 : i32
    return %arg0, %c0_i32 : i32, i32
  }
  func.func @transform_1(%arg0: i32) -> (i32, i32) {
    %c0_i32 = arith.constant 0 : i32
    %c0_i32_0 = arith.constant 0 : i32
    return %arg0, %c0_i32 : i32, i32
  }
  func.func @transform_2(%arg0: i32) -> (i32, i32) {
    %c0_i32 = arith.constant 0 : i32
    %c0_i32_0 = arith.constant 0 : i32
    %c0_i32_1 = arith.constant 0 : i32
    return %c0_i32, %c0_i32_0 : i32, i32
  }
  func.func @transform_3(%arg0: i32) -> (i32, i32) {
    %c0_i32 = arith.constant 0 : i32
    %c0_i32_0 = arith.constant 0 : i32
    %c0_i32_1 = arith.constant 0 : i32
    return %c0_i32, %c0_i32_0 : i32, i32
  }
  func.func @transform_4(%arg0: i32) -> (i32, i32) {
    %c0_i32 = arith.constant 0 : i32
    %c0_i32_0 = arith.constant 0 : i32
    %c0_i32_1 = arith.constant 0 : i32
    return %c0_i32, %c0_i32_0 : i32, i32
  }
  func.func @transform_5(%arg0: i32) -> (i32, i32) {
    %c0_i32 = arith.constant 0 : i32
    %c0_i32_0 = arith.constant 0 : i32
    %c0_i32_1 = arith.constant 0 : i32
    return %c0_i32, %c0_i32_0 : i32, i32
  }
  func.func @transform_6(%arg0: i32) -> (i32, i32) {
    %c0_i32 = arith.constant 0 : i32
    %c0_i32_0 = arith.constant 0 : i32
    %c0_i32_1 = arith.constant 0 : i32
    return %c0_i32, %c0_i32_0 : i32, i32
  }
  func.func @transform_7(%arg0: i32) -> (i32, i32) {
    %c0_i32 = arith.constant 0 : i32
    %c0_i32_0 = arith.constant 0 : i32
    %c0_i32_1 = arith.constant 0 : i32
    return %c0_i32, %c0_i32_0 : i32, i32
  }
  func.func @transform_8(%arg0: i32) -> (i32, i32) {
    %c0_i32 = arith.constant 0 : i32
    %c0_i32_0 = arith.constant 0 : i32
    %c0_i32_1 = arith.constant 0 : i32
    return %c0_i32, %c0_i32_0 : i32, i32
  }
  func.func @transform_9(%arg0: i32) -> (i32, i32) {
    %c0_i32 = arith.constant 0 : i32
    %c0_i32_0 = arith.constant 0 : i32
    %c0_i32_1 = arith.constant 0 : i32
    return %c0_i32, %c0_i32_0 : i32, i32
  }
  func.func @transform_10(%arg0: i32) -> (i32, i32) {
    %c0_i32 = arith.constant 0 : i32
    %c0_i32_0 = arith.constant 0 : i32
    %c0_i32_1 = arith.constant 0 : i32
    return %c0_i32, %c0_i32_0 : i32, i32
  }
  func.func @transform_11(%arg0: i32) -> (i32, i32) {
    %c0_i32 = arith.constant 0 : i32
    %c0_i32_0 = arith.constant 0 : i32
    return %arg0, %c0_i32 : i32, i32
  }
}

</mosaic_0001>

<llo_original>
// kernel: tpu_custom_call.1
$region0: #{tpu_custom_call.1}
  #allocation0 [shape = 'u32[]', space=smem, size = 0x4, offset = 0x4, fixed_abs, tag = 'smem constant byte address 0x4 - core index']
  #allocation1 [shape = 'u32[144,128]{1,0:T(1,128)}', space=vmem, size = 0x12000, scoped, tag = 'internal scratch']
  #allocation2 [shape = 'f32[1,1]{1,0:T(1,128)S(1)}', space=vmem, size = 0x200, scoped, tag = 'scoped memory for tpu_custom_call.1']
  %s0 = inlined_call_operand.hbm [shape: bf16[16,161], index: 0, kind: input, shape index: {}]
  %s1 = inlined_call_operand.hbm [shape: f32[16,256], index: 1, kind: input, shape index: {}]
  %s2 = inlined_call_operand.hbm [shape: bf16[161,512], index: 2, kind: input, shape index: {}]
  %s3 = inlined_call_operand.vmem [shape: f32[1,512], index: 3, kind: input, shape index: {}]
  %s4 = inlined_call_operand.hbm [shape: bf16[64,320], index: 4, kind: input, shape index: {}]
  %s5 = inlined_call_operand.vmem [shape: f32[1,64], index: 5, kind: input, shape index: {}]
  %s6 = inlined_call_operand.hbm [shape: bf16[32,256], index: 6, kind: input, shape index: {}]
  %s7 = inlined_call_operand.hbm [shape: bf16[64,64], index: 7, kind: input, shape index: {}]
  %s8 = inlined_call_operand.vmem [shape: f32[1,64], index: 8, kind: input, shape index: {}]
  %s9 = inlined_call_operand.vmem [shape: f32[1,64], index: 9, kind: input, shape index: {}]
  %s10 = inlined_call_operand.<no memory space> [shape: f32[1,1], index: 10, kind: input, shape index: {}]
  %s11 = inlined_call_operand.hbm [shape: f32[16,128], index: 11, kind: output, shape index: {}]
  %s12 = sld [smem:[#allocation0]]
  $region78: #{tpu_custom_call.1} parent=0
    _
  %s14 = ssub.s32 1, %s12
  %s15 = scalar_select 0, %s14, %s12
  %v16 = vstv %s10
  %17 = vst [vmem:[#allocation2] sm:$0x1] %v16
  $region1: #{tpu_custom_call.1} parent=0
    #allocation3 [shape = 'u8[8192]{0}', space=vmem, size = 0x2000, scoped, tag = 'input window, operand 0, single buffered']
    #allocation4 [shape = 's32[1]{0}', space=sflag, size = 0x4, scoped, tag = 'scoped memory for tpu_custom_call.1']
    #allocation5 [shape = 's32[1]{0}', space=sflag, size = 0x4, scoped, tag = 'scoped memory for tpu_custom_call.1']
    #allocation6 [shape = 'u8[16384]{0}', space=vmem, size = 0x4000, scoped, tag = 'input window, operand 1, single buffered']
    #allocation7 [shape = 's32[1]{0}', space=sflag, size = 0x4, scoped, tag = 'scoped memory for tpu_custom_call.1']
    #allocation8 [shape = 'u8[172032]{0}', space=vmem, size = 0x2a000, scoped, tag = 'input window, operand 2, single buffered']
    #allocation9 [shape = 'u8[49152]{0}', space=vmem, size = 0xc000, scoped, tag = 'input window, operand 4, single buffered']
    #allocation10 [shape = 's32[1]{0}', space=sflag, size = 0x4, scoped, tag = 'scoped memory for tpu_custom_call.1']
    #allocation11 [shape = 'u8[16384]{0}', space=vmem, size = 0x4000, scoped, tag = 'input window, operand 6, single buffered']
    #allocation12 [shape = 'u8[16384]{0}', space=vmem, size = 0x4000, scoped, tag = 'input window, operand 7, single buffered']
    #allocation13 [shape = 's32[1]{0}', space=sflag, size = 0x4, scoped, tag = 'scoped memory for tpu_custom_call.1']
    #allocation14 [shape = 'u8[8192]{0}', space=vmem, size = 0x2000, scoped, tag = 'output window, operand 0, single buffered']
    %18 = vsyncpa [#allocation4], 0
    %19 = vsyncpa [#allocation7], 0
    %20 = vsyncpa [#allocation10], 0
    %21 = vsyncpa [#allocation13], 0
    %22 = vsyncpa [#allocation5], 0
    // Predicated region
    $region2: #{tpu_custom_call.1} parent=1 // pred_check
      _
    $region3: #{tpu_custom_call.1} parent=1 // pred_check_branch
      %24 = sbr.rel (0) target = $region5
    $region4: #{tpu_custom_call.1} parent=1 // pred_region
      %s26 = ssub.s32 256, 256
      %27 = vsyncadd [#allocation4], %s26
      %s28 = sshll.u32 [#allocation3], 4
      %s29 = int_to_ptr.vmem [resolvable:$true] %s28
      %34 = dma.hbm_to_vmem [thread:$0]  %s0, 256, %s29, [#allocation4], 128, 128, 8
    $region5: #{tpu_custom_call.1} parent=1 // pred_fallthru
      _
    // Predicated region
    $region6: #{tpu_custom_call.1} parent=1 // pred_check
      _
    $region7: #{tpu_custom_call.1} parent=1 // pred_check_branch
      %36 = sbr.rel (0) target = $region9
    $region8: #{tpu_custom_call.1} parent=1 // pred_region
      %s38 = ssub.s32 512, 512
      %39 = vsyncadd [#allocation7], %s38
      %s40 = sshll.u32 [#allocation6], 4
      %s41 = int_to_ptr.vmem [resolvable:$true] %s40
      %46 = dma.hbm_to_vmem [thread:$0]  %s1, 512, %s41, [#allocation7], 256, 256, 16
    $region9: #{tpu_custom_call.1} parent=1 // pred_fallthru
      _
    // Predicated region
    $region10: #{tpu_custom_call.1} parent=1 // pred_check
      _
    $region11: #{tpu_custom_call.1} parent=1 // pred_check_branch
      %48 = sbr.rel (0) target = $region13
    $region12: #{tpu_custom_call.1} parent=1 // pred_region
      %s50 = ssub.s32 5376, 5376
      %51 = vsyncadd [#allocation7], %s50
      %s52 = sshll.u32 [#allocation8], 4
      %s53 = int_to_ptr.vmem [resolvable:$true] %s52
      %58 = dma.hbm_to_vmem [thread:$0]  %s2, 5376, %s53, [#allocation7], 256, 256, 16
    $region13: #{tpu_custom_call.1} parent=1 // pred_fallthru
      _
    // Predicated region
    $region14: #{tpu_custom_call.1} parent=1 // pred_check
      _
    $region15: #{tpu_custom_call.1} parent=1 // pred_check_branch
      %60 = sbr.rel (0) target = $region17
    $region16: #{tpu_custom_call.1} parent=1 // pred_region
      _
    $region17: #{tpu_custom_call.1} parent=1 // pred_fallthru
      _
    // Predicated region
    $region18: #{tpu_custom_call.1} parent=1 // pred_check
      _
    $region19: #{tpu_custom_call.1} parent=1 // pred_check_branch
      %62 = sbr.rel (0) target = $region21
    $region20: #{tpu_custom_call.1} parent=1 // pred_region
      %s64 = ssub.s32 1536, 1536
      %65 = vsyncadd [#allocation10], %s64
      %s66 = sshll.u32 [#allocation9], 4
      %s67 = int_to_ptr.vmem [resolvable:$true] %s66
      %72 = dma.hbm_to_vmem [thread:$0]  %s4, 1536, %s67, [#allocation10], 192, 192, 12
    $region21: #{tpu_custom_call.1} parent=1 // pred_fallthru
      _
    // Predicated region
    $region22: #{tpu_custom_call.1} parent=1 // pred_check
      _
    $region23: #{tpu_custom_call.1} parent=1 // pred_check_branch
      %74 = sbr.rel (0) target = $region25
    $region24: #{tpu_custom_call.1} parent=1 // pred_region
      _
    $region25: #{tpu_custom_call.1} parent=1 // pred_fallthru
      _
    // Predicated region
    $region26: #{tpu_custom_call.1} parent=1 // pred_check
      _
    $region27: #{tpu_custom_call.1} parent=1 // pred_check_branch
      %76 = sbr.rel (0) target = $region29
    $region28: #{tpu_custom_call.1} parent=1 // pred_region
      %s78 = ssub.s32 512, 512
      %79 = vsyncadd [#allocation10], %s78
      %s80 = sshll.u32 [#allocation11], 4
      %s81 = int_to_ptr.vmem [resolvable:$true] %s80
      %86 = dma.hbm_to_vmem [thread:$0]  %s6, 512, %s81, [#allocation10], 128, 128, 8
    $region29: #{tpu_custom_call.1} parent=1 // pred_fallthru
      _
    // Predicated region
    $region30: #{tpu_custom_call.1} parent=1 // pred_check
      _
    $region31: #{tpu_custom_call.1} parent=1 // pred_check_branch
      %88 = sbr.rel (0) target = $region33
    $region32: #{tpu_custom_call.1} parent=1 // pred_region
      %s90 = ssub.s32 512, 512
      %91 = vsyncadd [#allocation13], %s90
      %s92 = sshll.u32 [#allocation12], 4
      %s93 = int_to_ptr.vmem [resolvable:$true] %s92
      %98 = dma.hbm_to_vmem [thread:$0]  %s7, 512, %s93, [#allocation13], 64, 64, 4
    $region33: #{tpu_custom_call.1} parent=1 // pred_fallthru
      _
    // Predicated region
    $region34: #{tpu_custom_call.1} parent=1 // pred_check
      _
    $region35: #{tpu_custom_call.1} parent=1 // pred_check_branch
      %100 = sbr.rel (0) target = $region37
    $region36: #{tpu_custom_call.1} parent=1 // pred_region
      _
    $region37: #{tpu_custom_call.1} parent=1 // pred_fallthru
      _
    // Predicated region
    $region38: #{tpu_custom_call.1} parent=1 // pred_check
      _
    $region39: #{tpu_custom_call.1} parent=1 // pred_check_branch
      %102 = sbr.rel (0) target = $region41
    $region40: #{tpu_custom_call.1} parent=1 // pred_region
      _
    $region41: #{tpu_custom_call.1} parent=1 // pred_fallthru
      _
    // Predicated region
    $region42: #{tpu_custom_call.1} parent=1 // pred_check
      _
    $region43: #{tpu_custom_call.1} parent=1 // pred_check_branch
      %104 = sbr.rel (0) target = $region45
    $region44: #{tpu_custom_call.1} parent=1 // pred_region
      _
    $region45: #{tpu_custom_call.1} parent=1 // pred_fallthru
      _
    // Predicated region
    $region46: #{tpu_custom_call.1} parent=1 // pred_check
      _
    $region47: #{tpu_custom_call.1} parent=1 // pred_check_branch
      %106 = sbr.rel (0) target = $region49
    $region48: #{tpu_custom_call.1} parent=1 // pred_region
      %107 = dma.done [#allocation4], 256
    $region49: #{tpu_custom_call.1} parent=1 // pred_fallthru
      _
    // Predicated region
    $region50: #{tpu_custom_call.1} parent=1 // pred_check
      _
    $region51: #{tpu_custom_call.1} parent=1 // pred_check_branch
      %109 = sbr.rel (0) target = $region53
    $region52: #{tpu_custom_call.1} parent=1 // pred_region
      %110 = dma.done [#allocation7], 512
    $region53: #{tpu_custom_call.1} parent=1 // pred_fallthru
      _
    // Predicated region
    $region54: #{tpu_custom_call.1} parent=1 // pred_check
      _
    $region55: #{tpu_custom_call.1} parent=1 // pred_check_branch
      %112 = sbr.rel (0) target = $region57
    $region56: #{tpu_custom_call.1} parent=1 // pred_region
      %113 = dma.done [#allocation7], 5376
    $region57: #{tpu_custom_call.1} parent=1 // pred_fallthru
      _
    // Predicated region
    $region58: #{tpu_custom_call.1} parent=1 // pred_check
      _
    $region59: #{tpu_custom_call.1} parent=1 // pred_check_branch
      %115 = sbr.rel (0) target = $region61
    $region60: #{tpu_custom_call.1} parent=1 // pred_region
      %116 = dma.done [#allocation10], 1536
    $region61: #{tpu_custom_call.1} parent=1 // pred_fallthru
      _
    // Predicated region
    $region62: #{tpu_custom_call.1} parent=1 // pred_check
      _
    $region63: #{tpu_custom_call.1} parent=1 // pred_check_branch
      %118 = sbr.rel (0) target = $region65
    $region64: #{tpu_custom_call.1} parent=1 // pred_region
      %119 = dma.done [#allocation10], 512
    $region65: #{tpu_custom_call.1} parent=1 // pred_fallthru
      _
    // Predicated region
    $region66: #{tpu_custom_call.1} parent=1 // pred_check
      _
    $region67: #{tpu_custom_call.1} parent=1 // pred_check_branch
      %121 = sbr.rel (0) target = $region69
    $region68: #{tpu_custom_call.1} parent=1 // pred_region
      %122 = dma.done [#allocation13], 512
    $region69: #{tpu_custom_call.1} parent=1 // pred_fallthru
      _
    %v124 = vld [vmem:[#allocation6] sm:$0xff]
    %v125 = vld [vmem:[#allocation6 + $0x8] sm:$0xff]
    %v126 = vld [vmem:[#allocation6 + $0x10] sm:$0xff]
    %v127 = vld [vmem:[#allocation6 + $0x18] sm:$0xff]
    %v128 = vld [vmem:[#allocation9] sm:$0xff]
    %v129 = vld [vmem:[#allocation9 + $0x8] sm:$0xf]
    %v130 = vld [vmem:[#allocation9 + $0xc] sm:$0xff]
    %v131 = vld [vmem:[#allocation9 + $0x14] sm:$0xf]
    %v132 = vld [vmem:[#allocation9 + $0x18] sm:$0xff]
    %v133 = vld [vmem:[#allocation9 + $0x20] sm:$0xf]
    %v134 = vld [vmem:[#allocation9 + $0x24] sm:$0xff]
    %v135 = vld [vmem:[#allocation9 + $0x2c] sm:$0xf]
    %v136 = vld [vmem:[#allocation9 + $0x30] sm:$0xff]
    %v137 = vld [vmem:[#allocation9 + $0x38] sm:$0xf]
    %v138 = vld [vmem:[#allocation9 + $0x3c] sm:$0xff]
    %v139 = vld [vmem:[#allocation9 + $0x44] sm:$0xf]
    %v140 = vld [vmem:[#allocation9 + $0x48] sm:$0xff]
    %v141 = vld [vmem:[#allocation9 + $0x50] sm:$0xf]
    %v142 = vld [vmem:[#allocation9 + $0x54] sm:$0xff]
    %v143 = vld [vmem:[#allocation9 + $0x5c] sm:$0xf]
    %v144 = vld [vmem:[#allocation12] sm:$0xf]
    %v145 = vld [vmem:[#allocation12 + $0x4] sm:$0xf]
    %v146 = vld [vmem:[#allocation12 + $0x8] sm:$0xf]
    %v147 = vld [vmem:[#allocation12 + $0xc] sm:$0xf]
    %v148 = vld [vmem:[#allocation12 + $0x10] sm:$0xf]
    %v149 = vld [vmem:[#allocation12 + $0x14] sm:$0xf]
    %v150 = vld [vmem:[#allocation12 + $0x18] sm:$0xf]
    %v151 = vld [vmem:[#allocation12 + $0x1c] sm:$0xf]
    %v152 = vld [vmem:[#allocation11] sm:$0xff]
    %v153 = vld [vmem:[#allocation11 + $0x8] sm:$0xff]
    %v154 = vld [vmem:[#allocation11 + $0x10] sm:$0xff]
    %v155 = vld [vmem:[#allocation11 + $0x18] sm:$0xff]
    %v156 = vld [vmem:[%s5] sm:$0x1]
    %v157 = vld [vmem:[%s8] sm:$0x1]
    %v158 = vld [vmem:[#allocation3] sm:$0xff]
    %v159 = vld [vmem:[#allocation3 + $0x8] sm:$0xff]
    %v160 = vld [vmem:[#allocation8] sm:$0xff]
    %v161 = vld [vmem:[#allocation8 + $0x8] sm:$0xff]
    %v162 = vld [vmem:[#allocation8 + $0x10] sm:$0xff]
    %v163 = vld [vmem:[#allocation8 + $0x18] sm:$0xff]
    %v164 = vld [vmem:[#allocation8 + $0x20] sm:$0xff]
    %v165 = vld [vmem:[#allocation8 + $0x28] sm:$0xff]
    %v166 = vld [vmem:[#allocation8 + $0x30] sm:$0xff]
    %v167 = vld [vmem:[#allocation8 + $0x38] sm:$0xff]
    %v168 = vld [vmem:[#allocation8 + $0x40] sm:$0xff]
    %v169 = vld [vmem:[#allocation8 + $0x48] sm:$0xff]
    %v170 = vld [vmem:[#allocation8 + $0x50] sm:$0xff]
    %v171 = vld [vmem:[#allocation8 + $0x58] sm:$0xff]
    %v172 = vld [vmem:[#allocation8 + $0x60] sm:$0xff]
    %v173 = vld [vmem:[#allocation8 + $0x68] sm:$0xff]
    %v174 = vld [vmem:[#allocation8 + $0x70] sm:$0xff]
    %v175 = vld [vmem:[#allocation8 + $0x78] sm:$0xff]
    %v176 = vld [vmem:[#allocation8 + $0x80] sm:$0xff]
    %v177 = vld [vmem:[#allocation8 + $0x88] sm:$0xff]
    %v178 = vld [vmem:[#allocation8 + $0x90] sm:$0xff]
    %v179 = vld [vmem:[#allocation8 + $0x98] sm:$0xff]
    %v180 = vld [vmem:[#allocation8 + $0xa0] sm:$0xff]
    %v181 = vld [vmem:[#allocation8 + $0xa8] sm:$0xff]
    %v182 = vld [vmem:[#allocation8 + $0xb0] sm:$0xff]
    %v183 = vld [vmem:[#allocation8 + $0xb8] sm:$0xff]
    %v184 = vld [vmem:[#allocation8 + $0xc0] sm:$0xff]
    %v185 = vld [vmem:[#allocation8 + $0xc8] sm:$0xff]
    %v186 = vld [vmem:[#allocation8 + $0xd0] sm:$0xff]
    %v187 = vld [vmem:[#allocation8 + $0xd8] sm:$0xff]
    %v188 = vld [vmem:[#allocation8 + $0xe0] sm:$0xff]
    %v189 = vld [vmem:[#allocation8 + $0xe8] sm:$0xff]
    %v190 = vld [vmem:[#allocation8 + $0xf0] sm:$0xff]
    %v191 = vld [vmem:[#allocation8 + $0xf8] sm:$0xff]
    %v192 = vld [vmem:[#allocation8 + $0x100] sm:$0xff]
    %v193 = vld [vmem:[#allocation8 + $0x108] sm:$0xff]
    %v194 = vld [vmem:[#allocation8 + $0x110] sm:$0xff]
    %v195 = vld [vmem:[#allocation8 + $0x118] sm:$0xff]
    %v196 = vld [vmem:[#allocation8 + $0x120] sm:$0xff]
    %v197 = vld [vmem:[#allocation8 + $0x128] sm:$0xff]
    %v198 = vld [vmem:[#allocation8 + $0x130] sm:$0xff]
    %v199 = vld [vmem:[#allocation8 + $0x138] sm:$0xff]
    %v200 = vld [vmem:[#allocation8 + $0x140] sm:$0x11]
    %v201 = vld [vmem:[#allocation8 + $0x148] sm:$0x11]
    %v202 = vld [vmem:[%s3] sm:$0xf]
    %v204 = vlaneseq
    %v205 = vshrl.u32 %v204, 7
    %v206 = vsub.s32 0, %v205
    %v207 = vrot.slane %v202, %v206
    %v208 = vlaneseq
    %v209 = vshrl.u32 %v208, 7
    %v210 = vsub.s32 1, %v209
    %v211 = vrot.slane %v202, %v210
    %v212 = vlaneseq
    %v213 = vshrl.u32 %v212, 7
    %v214 = vsub.s32 2, %v213
    %v215 = vrot.slane %v202, %v214
    %v216 = vlaneseq
    %v217 = vshrl.u32 %v216, 7
    %v218 = vsub.s32 3, %v217
    %v219 = vrot.slane %v202, %v218
    %v226 = vunpack.c.l.b16 %v158
    %v227 = vunpack.c.h.b16 %v158
    %v228 = vunpack.c.l.b16 %v159
    %v229 = vunpack.c.h.b16 %v159
    %v230 = vpack.c.b16 %v228, %v226
    %v231 = vpack.c.b16 %v229, %v227
    %v275 = vunpack.c.l.b16 %v160
    %v276 = vunpack.c.h.b16 %v160
    %v277 = vunpack.c.l.b16 %v161
    %v278 = vunpack.c.h.b16 %v161
    %v279 = vunpack.c.l.b16 %v162
    %v280 = vunpack.c.h.b16 %v162
    %v281 = vunpack.c.l.b16 %v163
    %v282 = vunpack.c.h.b16 %v163
    %v283 = vunpack.c.l.b16 %v164
    %v284 = vunpack.c.h.b16 %v164
    %v285 = vunpack.c.l.b16 %v165
    %v286 = vunpack.c.h.b16 %v165
    %v287 = vunpack.c.l.b16 %v166
    %v288 = vunpack.c.h.b16 %v166
    %v289 = vunpack.c.l.b16 %v167
    %v290 = vunpack.c.h.b16 %v167
    %v291 = vunpack.c.l.b16 %v168
    %v292 = vunpack.c.h.b16 %v168
    %v293 = vunpack.c.l.b16 %v169
    %v294 = vunpack.c.h.b16 %v169
    %v295 = vunpack.c.l.b16 %v170
    %v296 = vunpack.c.h.b16 %v170
    %v297 = vunpack.c.l.b16 %v171
    %v298 = vunpack.c.h.b16 %v171
    %v299 = vunpack.c.l.b16 %v172
    %v300 = vunpack.c.h.b16 %v172
    %v301 = vunpack.c.l.b16 %v173
    %v302 = vunpack.c.h.b16 %v173
    %v303 = vunpack.c.l.b16 %v174
    %v304 = vunpack.c.h.b16 %v174
    %v305 = vunpack.c.l.b16 %v175
    %v306 = vunpack.c.h.b16 %v175
    %v307 = vunpack.c.l.b16 %v176
    %v308 = vunpack.c.h.b16 %v176
    %v309 = vunpack.c.l.b16 %v177
    %v310 = vunpack.c.h.b16 %v177
    %v311 = vunpack.c.l.b16 %v178
    %v312 = vunpack.c.h.b16 %v178
    %v313 = vunpack.c.l.b16 %v179
    %v314 = vunpack.c.h.b16 %v179
    %v315 = vunpack.c.l.b16 %v180
    %v316 = vunpack.c.h.b16 %v180
    %v317 = vunpack.c.l.b16 %v181
    %v318 = vunpack.c.h.b16 %v181
    %v319 = vunpack.c.l.b16 %v182
    %v320 = vunpack.c.h.b16 %v182
    %v321 = vunpack.c.l.b16 %v183
    %v322 = vunpack.c.h.b16 %v183
    %v323 = vunpack.c.l.b16 %v184
    %v324 = vunpack.c.h.b16 %v184
    %v325 = vunpack.c.l.b16 %v185
    %v326 = vunpack.c.h.b16 %v185
    %v327 = vunpack.c.l.b16 %v186
    %v328 = vunpack.c.h.b16 %v186
    %v329 = vunpack.c.l.b16 %v187
    %v330 = vunpack.c.h.b16 %v187
    %v331 = vunpack.c.l.b16 %v188
    %v332 = vunpack.c.h.b16 %v188
    %v333 = vunpack.c.l.b16 %v189
    %v334 = vunpack.c.h.b16 %v189
    %v335 = vunpack.c.l.b16 %v190
    %v336 = vunpack.c.h.b16 %v190
    %v337 = vunpack.c.l.b16 %v191
    %v338 = vunpack.c.h.b16 %v191
    %v339 = vunpack.c.l.b16 %v192
    %v340 = vunpack.c.h.b16 %v192
    %v341 = vunpack.c.l.b16 %v193
    %v342 = vunpack.c.h.b16 %v193
    %v343 = vunpack.c.l.b16 %v194
    %v344 = vunpack.c.h.b16 %v194
    %v345 = vunpack.c.l.b16 %v195
    %v346 = vunpack.c.h.b16 %v195
    %v347 = vunpack.c.l.b16 %v196
    %v348 = vunpack.c.h.b16 %v196
    %v349 = vunpack.c.l.b16 %v197
    %v350 = vunpack.c.h.b16 %v197
    %v351 = vunpack.c.l.b16 %v198
    %v352 = vunpack.c.h.b16 %v198
    %v353 = vunpack.c.l.b16 %v199
    %v354 = vunpack.c.h.b16 %v199
    %v355 = vunpack.c.l.b16 %v200
    %v356 = vunpack.c.h.b16 %v200
    %v357 = vunpack.c.l.b16 %v201
    %v358 = vunpack.c.h.b16 %v201
    %v359 = vpack.c.b16 %v279, %v275
    %v360 = vpack.c.b16 %v280, %v276
    %v361 = vpack.c.b16 %v281, %v277
    %v362 = vpack.c.b16 %v282, %v278
    %v363 = vpack.c.b16 %v287, %v283
    %v364 = vpack.c.b16 %v288, %v284
    %v365 = vpack.c.b16 %v289, %v285
    %v366 = vpack.c.b16 %v290, %v286
    %v367 = vpack.c.b16 %v295, %v291
    %v368 = vpack.c.b16 %v296, %v292
    %v369 = vpack.c.b16 %v297, %v293
    %v370 = vpack.c.b16 %v298, %v294
    %v371 = vpack.c.b16 %v303, %v299
    %v372 = vpack.c.b16 %v304, %v300
    %v373 = vpack.c.b16 %v305, %v301
    %v374 = vpack.c.b16 %v306, %v302
    %v375 = vpack.c.b16 %v311, %v307
    %v376 = vpack.c.b16 %v312, %v308
    %v377 = vpack.c.b16 %v313, %v309
    %v378 = vpack.c.b16 %v314, %v310
    %v379 = vpack.c.b16 %v319, %v315
    %v380 = vpack.c.b16 %v320, %v316
    %v381 = vpack.c.b16 %v321, %v317
    %v382 = vpack.c.b16 %v322, %v318
    %v383 = vpack.c.b16 %v327, %v323
    %v384 = vpack.c.b16 %v328, %v324
    %v385 = vpack.c.b16 %v329, %v325
    %v386 = vpack.c.b16 %v330, %v326
    %v387 = vpack.c.b16 %v335, %v331
    %v388 = vpack.c.b16 %v336, %v332
    %v389 = vpack.c.b16 %v337, %v333
    %v390 = vpack.c.b16 %v338, %v334
    %v391 = vpack.c.b16 %v343, %v339
    %v392 = vpack.c.b16 %v344, %v340
    %v393 = vpack.c.b16 %v345, %v341
    %v394 = vpack.c.b16 %v346, %v342
    %v395 = vpack.c.b16 %v351, %v347
    %v396 = vpack.c.b16 %v352, %v348
    %v397 = vpack.c.b16 %v353, %v349
    %v398 = vpack.c.b16 %v354, %v350
    %v399 = vpack.c.b16 %v355, %v355
    %v400 = vpack.c.b16 %v356, %v356
    %v401 = vpack.c.b16 %v357, %v357
    %v402 = vpack.c.b16 %v358, %v358
    %vm443 = vcmask 269312
    %v445 = vsel %vm443, %v231, 0
    %vm447 = vcmask 1040384
    %v448 = vsel 0, 4294967295, 65535
    %v449 = vsel %vm447, %v448, 0
    %v451 = vand.u32 %v399, %v449
    %v454 = vand.u32 %v400, %v449
    %v457 = vand.u32 %v401, %v449
    %v460 = vand.u32 %v402, %v449
    %462 = vmatprep.subr.bf16.mxu0 %v360
    %463 = vmatpush1.bf16.msra.mxu0 %v359
    %464 = vmatprep.subr.bf16.mxu0 %v364
    %465 = vmatpush1.bf16.msra.mxu0 %v363
    %466 = vmatprep.subr.bf16.mxu0 %v368
    %467 = vmatpush1.bf16.msra.mxu0 %v367
    %468 = vmatprep.subr.bf16.mxu0 %v372
    %469 = vmatpush1.bf16.msra.mxu0 %v371
    %470 = vmatprep.subr.bf16.mxu0 %v376
    %471 = vmatpush1.bf16.msra.mxu0 %v375
    %472 = vmatprep.subr.bf16.mxu0 %v380
    %473 = vmatpush1.bf16.msra.mxu0 %v379
    %474 = vmatprep.subr.bf16.mxu0 %v384
    %475 = vmatpush1.bf16.msra.mxu0 %v383
    %476 = vmatprep.subr.bf16.mxu0 %v388
    %477 = vmatpush1.bf16.msra.mxu0 %v387
    %478 = vmatprep.subr.bf16.mxu0 %v392
    %479 = vmatpush1.bf16.msra.mxu0 %v391
    %480 = vmatprep.subr.bf16.mxu0 %v396
    %481 = vmatpush1.bf16.msra.mxu0 %v395
    %482 = vmatprep.subr.bf16.mxu0 %v454
    %483 = vmatpush1.bf16.msra.mxu0 %v451
    %484 = vmatprep.subr.bf16.mxu0 0
    %485 = vmatpush1.bf16.msra.mxu0 0
    %486 = vmatprep.subr.bf16.mxu0 0
    %487 = vmatpush1.bf16.msra.mxu0 0
    %488 = vmatprep.subr.bf16.mxu0 0
    %489 = vmatpush1.bf16.msra.mxu0 0
    %490 = vmatprep.subr.bf16.mxu0 0
    %491 = vmatpush1.bf16.msra.mxu0 0
    %492 = vmatprep.subr.bf16.mxu0 0
    %493 = vmatpush1.bf16.msra.mxu0 0
    %494 = vmatprep.mubr.bf16.mxu0 %v445
    %495 = vmatmul.mubr.bf16.gmra.mrb[0].mxu0 %v230
    %v496 = vpop.f32.mrb[0].mxu0
    %v497 = vadd.f32 %v207, %v496
    %v498 = vpop.f32.mrb[0].mxu0
    %v499 = vadd.f32 %v211, %v498
    %v500 = vpop.f32.mrb[0].mxu0
    %v501 = vadd.f32 %v207, %v500
    %v502 = vpop.f32.mrb[0].mxu0
    %v503 = vadd.f32 %v211, %v502
    %504 = vdwg.mxu0
    %505 = vmatprep.subr.bf16.mxu0 %v362
    %506 = vmatpush1.bf16.msra.mxu0 %v361
    %507 = vmatprep.subr.bf16.mxu0 %v366
    %508 = vmatpush1.bf16.msra.mxu0 %v365
    %509 = vmatprep.subr.bf16.mxu0 %v370
    %510 = vmatpush1.bf16.msra.mxu0 %v369
    %511 = vmatprep.subr.bf16.mxu0 %v374
    %512 = vmatpush1.bf16.msra.mxu0 %v373
    %513 = vmatprep.subr.bf16.mxu0 %v378
    %514 = vmatpush1.bf16.msra.mxu0 %v377
    %515 = vmatprep.subr.bf16.mxu0 %v382
    %516 = vmatpush1.bf16.msra.mxu0 %v381
    %517 = vmatprep.subr.bf16.mxu0 %v386
    %518 = vmatpush1.bf16.msra.mxu0 %v385
    %519 = vmatprep.subr.bf16.mxu0 %v390
    %520 = vmatpush1.bf16.msra.mxu0 %v389
    %521 = vmatprep.subr.bf16.mxu0 %v394
    %522 = vmatpush1.bf16.msra.mxu0 %v393
    %523 = vmatprep.subr.bf16.mxu0 %v398
    %524 = vmatpush1.bf16.msra.mxu0 %v397
    %525 = vmatprep.subr.bf16.mxu0 %v460
    %526 = vmatpush1.bf16.msra.mxu0 %v457
    %527 = vmatprep.subr.bf16.mxu0 0
    %528 = vmatpush1.bf16.msra.mxu0 0
    %529 = vmatprep.subr.bf16.mxu0 0
    %530 = vmatpush1.bf16.msra.mxu0 0
    %531 = vmatprep.subr.bf16.mxu0 0
    %532 = vmatpush1.bf16.msra.mxu0 0
    %533 = vmatprep.subr.bf16.mxu0 0
    %534 = vmatpush1.bf16.msra.mxu0 0
    %535 = vmatprep.subr.bf16.mxu0 0
    %536 = vmatpush1.bf16.msra.mxu0 0
    %537 = vmatprep.mubr.bf16.mxu0 %v445
    %538 = vmatmul.mubr.bf16.gmra.mrb[0].mxu0 %v230
    %v539 = vpop.f32.mrb[0].mxu0
    %v540 = vadd.f32 %v215, %v539
    %v541 = vpop.f32.mrb[0].mxu0
    %v542 = vadd.f32 %v219, %v541
    %v543 = vpop.f32.mrb[0].mxu0
    %v544 = vadd.f32 %v215, %v543
    %v545 = vpop.f32.mrb[0].mxu0
    %v546 = vadd.f32 %v219, %v545
    %547 = vdwg.mxu0
    %v564 = vunpack.c.l.b16 %v128
    %v565 = vunpack.c.h.b16 %v128
    %v566 = vunpack.c.l.b16 %v129
    %v567 = vunpack.c.l.b16 %v130
    %v568 = vunpack.c.h.b16 %v130
    %v569 = vunpack.c.l.b16 %v131
    %v570 = vunpack.c.l.b16 %v132
    %v571 = vunpack.c.h.b16 %v132
    %v572 = vunpack.c.l.b16 %v133
    %v573 = vunpack.c.l.b16 %v134
    %v574 = vunpack.c.h.b16 %v134
    %v575 = vunpack.c.l.b16 %v135
    %v576 = vunpack.c.l.b16 %v136
    %v577 = vunpack.c.h.b16 %v136
    %v578 = vunpack.c.l.b16 %v137
    %v579 = vunpack.c.l.b16 %v138
    %v580 = vunpack.c.h.b16 %v138
    %v581 = vunpack.c.l.b16 %v139
    %v582 = vunpack.c.l.b16 %v140
    %v583 = vunpack.c.h.b16 %v140
    %v584 = vunpack.c.l.b16 %v141
    %v585 = vunpack.c.l.b16 %v142
    %v586 = vunpack.c.h.b16 %v142
    %v587 = vunpack.c.l.b16 %v143
    %v588 = vpack.c.b16 %v567, %v564
    %v589 = vpack.c.b16 %v568, %v565
    %v590 = vpack.c.b16 %v569, %v566
    %v591 = vpack.c.b16 %v573, %v570
    %v592 = vpack.c.b16 %v574, %v571
    %v593 = vpack.c.b16 %v575, %v572
    %v594 = vpack.c.b16 %v579, %v576
    %v595 = vpack.c.b16 %v580, %v577
    %v596 = vpack.c.b16 %v581, %v578
    %v597 = vpack.c.b16 %v585, %v582
    %v598 = vpack.c.b16 %v586, %v583
    %v599 = vpack.c.b16 %v587, %v584
    %vm612 = vcmask 523264
    %v614 = vsel %vm612, 0, 0
    %616 = vmatprep.subr.bf16.mxu0 %v589
    %617 = vmatpush1.bf16.msra.mxu0 %v588
    %618 = vmatprep.subr.bf16.mxu0 %v592
    %619 = vmatpush1.bf16.msra.mxu0 %v591
    %620 = vmatprep.subr.bf16.mxu0 %v595
    %621 = vmatpush1.bf16.msra.mxu0 %v594
    %622 = vmatprep.subr.bf16.mxu0 %v598
    %623 = vmatpush1.bf16.msra.mxu0 %v597
    %624 = vmatprep.subr.bf16.mxu0 0
    %625 = vmatpush1.bf16.msra.mxu0 0
    %626 = vmatprep.subr.bf16.mxu0 0
    %627 = vmatpush1.bf16.msra.mxu0 0
    %628 = vmatprep.subr.bf16.mxu0 0
    %629 = vmatpush1.bf16.msra.mxu0 0
    %630 = vmatprep.subr.bf16.mxu0 0
    %631 = vmatpush1.bf16.msra.mxu0 0
    %632 = vmatprep.subr.bf16.mxu0 0
    %633 = vmatpush1.bf16.msra.mxu0 0
    %634 = vmatprep.subr.bf16.mxu0 0
    %635 = vmatpush1.bf16.msra.mxu0 0
    %636 = vmatprep.subr.bf16.mxu0 0
    %637 = vmatpush1.bf16.msra.mxu0 0
    %638 = vmatprep.subr.bf16.mxu0 0
    %639 = vmatpush1.bf16.msra.mxu0 0
    %640 = vmatprep.subr.bf16.mxu0 0
    %641 = vmatpush1.bf16.msra.mxu0 0
    %642 = vmatprep.subr.bf16.mxu0 0
    %643 = vmatpush1.bf16.msra.mxu0 0
    %644 = vmatprep.subr.bf16.mxu0 0
    %645 = vmatpush1.bf16.msra.mxu0 0
    %646 = vmatprep.subr.bf16.mxu0 0
    %647 = vmatpush1.bf16.msra.mxu0 0
    %648 = vmatprep.mubr.bf16.mxu0 0
    %649 = vmatmul.mubr.bf16.gmra.mrb[0].mxu0 %v614
    %v650 = vpop.f32.mrb[0].mxu0
    %v651 = vadd.f32 0.0, %v650
    %v652 = vpop.f32.mrb[0].mxu0
    %v653 = vadd.f32 0.0, %v652
    %v654 = vpop.f32.mrb[0].mxu0
    %v655 = vadd.f32 0.0, %v654
    %v656 = vpop.f32.mrb[0].mxu0
    %v657 = vadd.f32 0.0, %v656
    %658 = vdwg.mxu0
    %659 = vmatprep.subr.bf16.mxu0 0
    %660 = vmatpush1.bf16.msra.mxu0 %v590
    %661 = vmatprep.subr.bf16.mxu0 0
    %662 = vmatpush1.bf16.msra.mxu0 %v593
    %663 = vmatprep.subr.bf16.mxu0 0
    %664 = vmatpush1.bf16.msra.mxu0 %v596
    %665 = vmatprep.subr.bf16.mxu0 0
    %666 = vmatpush1.bf16.msra.mxu0 %v599
    %667 = vmatprep.subr.bf16.mxu0 0
    %668 = vmatpush1.bf16.msra.mxu0 0
    %669 = vmatprep.subr.bf16.mxu0 0
    %670 = vmatpush1.bf16.msra.mxu0 0
    %671 = vmatprep.subr.bf16.mxu0 0
    %672 = vmatpush1.bf16.msra.mxu0 0
    %673 = vmatprep.subr.bf16.mxu0 0
    %674 = vmatpush1.bf16.msra.mxu0 0
    %675 = vmatprep.subr.bf16.mxu0 0
    %676 = vmatpush1.bf16.msra.mxu0 0
    %677 = vmatprep.subr.bf16.mxu0 0
    %678 = vmatpush1.bf16.msra.mxu0 0
    %679 = vmatprep.subr.bf16.mxu0 0
    %680 = vmatpush1.bf16.msra.mxu0 0
    %681 = vmatprep.subr.bf16.mxu0 0
    %682 = vmatpush1.bf16.msra.mxu0 0
    %683 = vmatprep.subr.bf16.mxu0 0
    %684 = vmatpush1.bf16.msra.mxu0 0
    %685 = vmatprep.subr.bf16.mxu0 0
    %686 = vmatpush1.bf16.msra.mxu0 0
    %687 = vmatprep.subr.bf16.mxu0 0
    %688 = vmatpush1.bf16.msra.mxu0 0
    %689 = vmatprep.subr.bf16.mxu0 0
    %690 = vmatpush1.bf16.msra.mxu0 0
    %691 = vmatprep.mubr.bf16.mxu0 0
    %692 = vmatmul.mubr.bf16.gmra.mrb[0].mxu0 %v614
    %v693 = vpop.f32.mrb[0].mxu0
    %v694 = vadd.f32 0.0, %v693
    %v695 = vpop.f32.mrb[0].mxu0
    %v696 = vpop.f32.mrb[0].mxu0
    %v697 = vadd.f32 0.0, %v696
    %v698 = vpop.f32.mrb[0].mxu0
    %699 = vdwg.mxu0
    %v701 = vlaneseq
    %v702 = vshrl.u32 %v701, 7
    %v703 = vsub.s32 0, %v702
    %v704 = vrot.slane %v156, %v703
    %v706 = vadd.f32 %v694, %v704
    %v707 = vadd.f32 %v697, %v704
    %v708 = vmax.f32 %v706, 0.0
    %v709 = vmax.f32 %v707, 0.0
    %vm710 = vcmp.ne.f32.partialorder %v706, %v706
    %vm711 = vcmp.ne.f32.partialorder %v707, %v707
    %v712 = vadd.f32 %v706, 0.0
    %v713 = vadd.f32 %v707, 0.0
    %v714 = vand.u32 2147483647, %v706
    %v715 = vand.u32 2147483647, %v707
    %v716 = vsub.f32 0.0, %v714
    %v717 = vsub.f32 0.0, %v715
    %v718 = vmul.f32 %v716, 1.442695
    %v719 = vpow.pop %v718
    %v720 = vmul.f32 %v717, 1.442695
    %v721 = vpow.pop %v720
    %v722 = vadd.f32 %v719, 1.0
    %v723 = vlog2.pop %v722
    %v724 = vmul.f32 %v723, 0.6931472
    %v725 = vmul.f32 -0.5, %v719
    %v726 = vadd.f32 %v725, 1.0
    %v727 = vmul.f32 %v726, %v719
    %v728 = vand.u32 2147483647, %v719
    %vm729 = vcmp.lt.f32.partialorder %v728, 0.0004427343
    %v730 = vsel %vm729, %v727, %v724
    %v731 = vadd.f32 %v721, 1.0
    %v732 = vlog2.pop %v731
    %v733 = vmul.f32 %v732, 0.6931472
    %v734 = vmul.f32 -0.5, %v721
    %v735 = vadd.f32 %v734, 1.0
    %v736 = vmul.f32 %v735, %v721
    %v737 = vand.u32 2147483647, %v721
    %vm738 = vcmp.lt.f32.partialorder %v737, 0.0004427343
    %v739 = vsel %vm738, %v736, %v733
    %v740 = vadd.f32 %v708, %v730
    %v741 = vadd.f32 %v709, %v739
    %v742 = vsel %vm710, %v712, %v740
    %v743 = vsel %vm711, %v713, %v741
    %v744 = vadd.f32 %v651, %v497
    %v745 = vadd.f32 %v653, %v499
    %v746 = vadd.f32 %v655, %v501
    %v747 = vadd.f32 %v657, %v503
    %v748 = vmul.f32 %v744, 0.5
    %v749 = vmul.f32 %v745, 0.5
    %v750 = vmul.f32 %v746, 0.5
    %v751 = vmul.f32 %v747, 0.5
    %v752 = vtanh.pop %v748
    %v753 = vtanh.pop %v749
    %v754 = vtanh.pop %v750
    %v755 = vtanh.pop %v751
    %v756 = vmul.f32 %v752, 0.5
    %v757 = vmul.f32 %v753, 0.5
    %v758 = vmul.f32 %v754, 0.5
    %v759 = vmul.f32 %v755, 0.5
    %v760 = vadd.f32 %v756, 0.5
    %v761 = vadd.f32 %v757, 0.5
    %v762 = vadd.f32 %v758, 0.5
    %v763 = vadd.f32 %v759, 0.5
    %v764 = vmul.f32 %v760, 0.0
    %v765 = vmul.f32 %v762, 0.0
    %v766 = vmul.f32 %v760, %v761
    %v767 = vmul.f32 %v762, %v763
    %770 = vrot.lane.b32.xlu0 %v766, 64
    %v771 = vpop.permute.xlu0 %770
    %772 = vrot.lane.b32.xlu0 %v767, 64
    %v773 = vpop.permute.xlu0 %772
    %v776 = vadd.f32 %v764, %v771
    %v777 = vadd.f32 %v765, %v773
    %v778 = vtanh.pop %v776
    %v779 = vtanh.pop %v777
    %v780 = vmul.f32 %v761, %v778
    %v781 = vmul.f32 %v763, %v779
    %v782 = vpack.c.bf16 %v781, %v780
    %v784 = vlaneseq
    %v785 = vshrl.u32 %v784, 7
    %v786 = vsub.s32 0, %v785
    %v787 = vrot.slane %v157, %v786
    %v797 = vunpack.c.l.b16 %v144
    %v798 = vunpack.c.l.b16 %v145
    %v799 = vunpack.c.l.b16 %v146
    %v800 = vunpack.c.l.b16 %v147
    %v801 = vunpack.c.l.b16 %v148
    %v802 = vunpack.c.l.b16 %v149
    %v803 = vunpack.c.l.b16 %v150
    %v804 = vunpack.c.l.b16 %v151
    %v805 = vpack.c.b16 %v798, %v797
    %v806 = vpack.c.b16 %v800, %v799
    %v807 = vpack.c.b16 %v802, %v801
    %v808 = vpack.c.b16 %v804, %v803
    %v814 = vsel %vm612, %v782, 0
    %816 = vmatprep.subr.bf16.mxu0 0
    %817 = vmatpush1.bf16.msra.mxu0 %v805
    %818 = vmatprep.subr.bf16.mxu0 0
    %819 = vmatpush1.bf16.msra.mxu0 %v806
    %820 = vmatprep.subr.bf16.mxu0 0
    %821 = vmatpush1.bf16.msra.mxu0 %v807
    %822 = vmatprep.subr.bf16.mxu0 0
    %823 = vmatpush1.bf16.msra.mxu0 %v808
    %824 = vmatprep.subr.bf16.mxu0 0
    %825 = vmatpush1.bf16.msra.mxu0 0
    %826 = vmatprep.subr.bf16.mxu0 0
    %827 = vmatpush1.bf16.msra.mxu0 0
    %828 = vmatprep.subr.bf16.mxu0 0
    %829 = vmatpush1.bf16.msra.mxu0 0
    %830 = vmatprep.subr.bf16.mxu0 0
    %831 = vmatpush1.bf16.msra.mxu0 0
    %832 = vmatprep.subr.bf16.mxu0 0
    %833 = vmatpush1.bf16.msra.mxu0 0
    %834 = vmatprep.subr.bf16.mxu0 0
    %835 = vmatpush1.bf16.msra.mxu0 0
    %836 = vmatprep.subr.bf16.mxu0 0
    %837 = vmatpush1.bf16.msra.mxu0 0
    %838 = vmatprep.subr.bf16.mxu0 0
    %839 = vmatpush1.bf16.msra.mxu0 0
    %840 = vmatprep.subr.bf16.mxu0 0
    %841 = vmatpush1.bf16.msra.mxu0 0
    %842 = vmatprep.subr.bf16.mxu0 0
    %843 = vmatpush1.bf16.msra.mxu0 0
    %844 = vmatprep.subr.bf16.mxu0 0
    %845 = vmatpush1.bf16.msra.mxu0 0
    %846 = vmatprep.subr.bf16.mxu0 0
    %847 = vmatpush1.bf16.msra.mxu0 0
    %848 = vmatprep.mubr.bf16.mxu0 0
    %849 = vmatmul.mubr.bf16.gmra.mrb[0].mxu0 %v814
    %v850 = vpop.f32.mrb[0].mxu0
    %v851 = vadd.f32 %v787, %v850
    %v852 = vpop.f32.mrb[0].mxu0
    %v853 = vpop.f32.mrb[0].mxu0
    %v854 = vadd.f32 %v787, %v853
    %v855 = vpop.f32.mrb[0].mxu0
    %856 = vdwg.mxu0
    %v857 = vmax.f32 %v851, 0.0
    %v858 = vmax.f32 %v854, 0.0
    %vm859 = vcmp.ne.f32.partialorder %v851, %v851
    %vm860 = vcmp.ne.f32.partialorder %v854, %v854
    %v861 = vadd.f32 %v851, 0.0
    %v862 = vadd.f32 %v854, 0.0
    %v863 = vand.u32 2147483647, %v851
    %v864 = vand.u32 2147483647, %v854
    %v865 = vsub.f32 0.0, %v863
    %v866 = vsub.f32 0.0, %v864
    %v867 = vmul.f32 %v865, 1.442695
    %v868 = vpow.pop %v867
    %v869 = vmul.f32 %v866, 1.442695
    %v870 = vpow.pop %v869
    %v871 = vadd.f32 %v868, 1.0
    %v872 = vlog2.pop %v871
    %v873 = vmul.f32 %v872, 0.6931472
    %v874 = vmul.f32 -0.5, %v868
    %v875 = vadd.f32 %v874, 1.0
    %v876 = vmul.f32 %v875, %v868
    %v877 = vand.u32 2147483647, %v868
    %vm878 = vcmp.lt.f32.partialorder %v877, 0.0004427343
    %v879 = vsel %vm878, %v876, %v873
    %v880 = vadd.f32 %v870, 1.0
    %v881 = vlog2.pop %v880
    %v882 = vmul.f32 %v881, 0.6931472
    %v883 = vmul.f32 -0.5, %v870
    %v884 = vadd.f32 %v883, 1.0
    %v885 = vmul.f32 %v884, %v870
    %v886 = vand.u32 2147483647, %v870
    %vm887 = vcmp.lt.f32.partialorder %v886, 0.0004427343
    %v888 = vsel %vm887, %v885, %v882
    %v889 = vadd.f32 %v857, %v879
    %v890 = vadd.f32 %v858, %v888
    %v891 = vsel %vm859, %v861, %v889
    %v892 = vsel %vm860, %v862, %v890
    %895 = vrot.lane.b32.xlu0 %v124, 32
    %v896 = vpop.permute.xlu0 %895
    %897 = vrot.lane.b32.xlu0 %v126, 32
    %v898 = vpop.permute.xlu0 %897
    %v901 = vmul.f32 %v891, %v896
    %v902 = vmul.f32 %v892, %v898
    %905 = vrot.lane.b32.xlu0 %v901, 96
    %v906 = vpop.permute.xlu0 %905
    %907 = vrot.lane.b32.xlu0 %v902, 96
    %v908 = vpop.permute.xlu0 %907
    %v911 = vadd.f32 %v851, %v906
    %v912 = vadd.f32 %v854, %v908
    %v913 = vpack.c.bf16 %v912, %v911
    %v918 = vunpack.c.l.b16 %v152
    %v919 = vunpack.c.h.b16 %v152
    %v920 = vunpack.c.l.b16 %v153
    %v921 = vunpack.c.h.b16 %v153
    %v922 = vunpack.c.l.b16 %v154
    %v923 = vunpack.c.h.b16 %v154
    %v924 = vunpack.c.l.b16 %v155
    %v925 = vunpack.c.h.b16 %v155
    %v926 = vpack.c.b16 %v920, %v918
    %v927 = vpack.c.b16 %v921, %v919
    %v928 = vpack.c.b16 %v924, %v922
    %v929 = vpack.c.b16 %v925, %v923
    %vm934 = vcmask 261120
    %v936 = vsel %vm934, %v913, 0
    %938 = vmatprep.subr.bf16.mxu0 %v927
    %939 = vmatpush1.bf16.msra.mxu0 %v926
    %940 = vmatprep.subr.bf16.mxu0 %v929
    %941 = vmatpush1.bf16.msra.mxu0 %v928
    %942 = vmatprep.subr.bf16.mxu0 0
    %943 = vmatpush1.bf16.msra.mxu0 0
    %944 = vmatprep.subr.bf16.mxu0 0
    %945 = vmatpush1.bf16.msra.mxu0 0
    %946 = vmatprep.subr.bf16.mxu0 0
    %947 = vmatpush1.bf16.msra.mxu0 0
    %948 = vmatprep.subr.bf16.mxu0 0
    %949 = vmatpush1.bf16.msra.mxu0 0
    %950 = vmatprep.subr.bf16.mxu0 0
    %951 = vmatpush1.bf16.msra.mxu0 0
    %952 = vmatprep.subr.bf16.mxu0 0
    %953 = vmatpush1.bf16.msra.mxu0 0
    %954 = vmatprep.subr.bf16.mxu0 0
    %955 = vmatpush1.bf16.msra.mxu0 0
    %956 = vmatprep.subr.bf16.mxu0 0
    %957 = vmatpush1.bf16.msra.mxu0 0
    %958 = vmatprep.subr.bf16.mxu0 0
    %959 = vmatpush1.bf16.msra.mxu0 0
    %960 = vmatprep.subr.bf16.mxu0 0
    %961 = vmatpush1.bf16.msra.mxu0 0
    %962 = vmatprep.subr.bf16.mxu0 0
    %963 = vmatpush1.bf16.msra.mxu0 0
    %964 = vmatprep.subr.bf16.mxu0 0
    %965 = vmatpush1.bf16.msra.mxu0 0
    %966 = vmatprep.subr.bf16.mxu0 0
    %967 = vmatpush1.bf16.msra.mxu0 0
    %968 = vmatprep.subr.bf16.mxu0 0
    %969 = vmatpush1.bf16.msra.mxu0 0
    %970 = vmatprep.mubr.bf16.mxu0 0
    %971 = vmatmul.mubr.bf16.gmra.mrb[0].mxu0 %v936
    %v972 = vpop.f32.mrb[0].mxu0
    %v973 = vadd.f32 %v540, %v972
    %v974 = vpop.f32.mrb[0].mxu0
    %v975 = vadd.f32 %v542, %v974
    %v976 = vpop.f32.mrb[0].mxu0
    %v977 = vadd.f32 %v544, %v976
    %v978 = vpop.f32.mrb[0].mxu0
    %v979 = vadd.f32 %v546, %v978
    %980 = vdwg.mxu0
    %v981 = vmul.f32 %v973, 0.5
    %v982 = vmul.f32 %v975, 0.5
    %v983 = vmul.f32 %v977, 0.5
    %v984 = vmul.f32 %v979, 0.5
    %v985 = vtanh.pop %v981
    %v986 = vtanh.pop %v982
    %v987 = vtanh.pop %v983
    %v988 = vtanh.pop %v984
    %v989 = vmul.f32 %v985, 0.5
    %v990 = vmul.f32 %v986, 0.5
    %v991 = vmul.f32 %v987, 0.5
    %v992 = vmul.f32 %v988, 0.5
    %v993 = vadd.f32 %v989, 0.5
    %v994 = vadd.f32 %v990, 0.5
    %v995 = vadd.f32 %v991, 0.5
    %v996 = vadd.f32 %v992, 0.5
    %v997 = vmul.f32 %v993, 0.0
    %v998 = vmul.f32 %v995, 0.0
    %v999 = vmul.f32 %v993, %v994
    %v1000 = vmul.f32 %v995, %v996
    %1003 = vrot.lane.b32.xlu0 %v999, 64
    %v1004 = vpop.permute.xlu0 %1003
    %1005 = vrot.lane.b32.xlu0 %v1000, 64
    %v1006 = vpop.permute.xlu0 %1005
    %v1009 = vadd.f32 %v997, %v1004
    %v1010 = vadd.f32 %v998, %v1006
    %v1011 = vtanh.pop %v1009
    %v1012 = vtanh.pop %v1010
    %v1013 = vmul.f32 %v994, %v1011
    %v1014 = vmul.f32 %v996, %v1012
    %v1015 = vadd.f32 %v1013, 0.0
    %v1016 = vadd.f32 %v1014, 0.0
    %v1017 = vrcp.pop %v742
    %v1018 = vrcp.pop %v743
    %v1019 = vmul.f32 %v891, %v1017
    %v1020 = vmul.f32 %v892, %v1018
    %v1021 = vmul.f32 %v1019, %v1019
    %v1022 = vmul.f32 %v1020, %v1020
    %v1023 = vsub.f32 %v851, %v706
    %v1024 = vsub.f32 %v854, %v707
    %1027 = vrot.lane.b32.xlu0 %v1017, 96
    %v1028 = vpop.permute.xlu0 %1027
    %1029 = vrot.lane.b32.xlu0 %v1018, 96
    %v1030 = vpop.permute.xlu0 %1029
    %v1033 = vmul.f32 %v1023, %v1028
    %v1034 = vmul.f32 %v1024, %v1030
    %v1035 = vmul.f32 %v1033, %v1033
    %v1036 = vmul.f32 %v1034, %v1034
    %1039 = vrot.lane.b32.xlu0 %v1035, 32
    %v1040 = vpop.permute.xlu0 %1039
    %1041 = vrot.lane.b32.xlu0 %v1036, 32
    %v1042 = vpop.permute.xlu0 %1041
    %v1045 = vadd.f32 %v1021, %v1040
    %v1046 = vadd.f32 %v1022, %v1042
    %v1047 = vsub.f32 %v1045, 1.0
    %v1048 = vsub.f32 %v1046, 1.0
    %v1049 = vlog2.pop %v1021
    %v1050 = vmul.f32 %v1049, 0.6931472
    %v1051 = vlog2.pop %v1022
    %v1052 = vmul.f32 %v1051, 0.6931472
    %v1053 = vsub.f32 %v1047, %v1050
    %v1054 = vsub.f32 %v1048, %v1052
    %v1055 = vmul.f32 %v1053, 0.5
    %v1056 = vmul.f32 %v1054, 0.5
    %v1057 = vadd.f32 %v1055, 0.0
    %v1058 = vadd.f32 %v1056, 0.0
    %v1059 = vpack.c.bf16 %v1014, %v1013
    %v1061 = vsel %vm612, %v1059, 0
    %1063 = vmatprep.subr.bf16.mxu0 %v589
    %1064 = vmatpush1.bf16.msra.mxu0 %v588
    %1065 = vmatprep.subr.bf16.mxu0 %v592
    %1066 = vmatpush1.bf16.msra.mxu0 %v591
    %1067 = vmatprep.subr.bf16.mxu0 %v595
    %1068 = vmatpush1.bf16.msra.mxu0 %v594
    %1069 = vmatprep.subr.bf16.mxu0 %v598
    %1070 = vmatpush1.bf16.msra.mxu0 %v597
    %1071 = vmatprep.subr.bf16.mxu0 0
    %1072 = vmatpush1.bf16.msra.mxu0 0
    %1073 = vmatprep.subr.bf16.mxu0 0
    %1074 = vmatpush1.bf16.msra.mxu0 0
    %1075 = vmatprep.subr.bf16.mxu0 0
    %1076 = vmatpush1.bf16.msra.mxu0 0
    %1077 = vmatprep.subr.bf16.mxu0 0
    %1078 = vmatpush1.bf16.msra.mxu0 0
    %1079 = vmatprep.subr.bf16.mxu0 0
    %1080 = vmatpush1.bf16.msra.mxu0 0
    %1081 = vmatprep.subr.bf16.mxu0 0
    %1082 = vmatpush1.bf16.msra.mxu0 0
    %1083 = vmatprep.subr.bf16.mxu0 0
    %1084 = vmatpush1.bf16.msra.mxu0 0
    %1085 = vmatprep.subr.bf16.mxu0 0
    %1086 = vmatpush1.bf16.msra.mxu0 0
    %1087 = vmatprep.subr.bf16.mxu0 0
    %1088 = vmatpush1.bf16.msra.mxu0 0
    %1089 = vmatprep.subr.bf16.mxu0 0
    %1090 = vmatpush1.bf16.msra.mxu0 0
    %1091 = vmatprep.subr.bf16.mxu0 0
    %1092 = vmatpush1.bf16.msra.mxu0 0
    %1093 = vmatprep.subr.bf16.mxu0 0
    %1094 = vmatpush1.bf16.msra.mxu0 0
    %1095 = vmatprep.mubr.bf16.mxu0 0
    %1096 = vmatmul.mubr.bf16.gmra.mrb[0].mxu0 %v1061
    %v1097 = vpop.f32.mrb[0].mxu0
    %v1098 = vadd.f32 0.0, %v1097
    %v1099 = vpop.f32.mrb[0].mxu0
    %v1100 = vadd.f32 0.0, %v1099
    %v1101 = vpop.f32.mrb[0].mxu0
    %v1102 = vadd.f32 0.0, %v1101
    %v1103 = vpop.f32.mrb[0].mxu0
    %v1104 = vadd.f32 0.0, %v1103
    %1105 = vdwg.mxu0
    %1106 = vmatprep.subr.bf16.mxu0 0
    %1107 = vmatpush1.bf16.msra.mxu0 %v590
    %1108 = vmatprep.subr.bf16.mxu0 0
    %1109 = vmatpush1.bf16.msra.mxu0 %v593
    %1110 = vmatprep.subr.bf16.mxu0 0
    %1111 = vmatpush1.bf16.msra.mxu0 %v596
    %1112 = vmatprep.subr.bf16.mxu0 0
    %1113 = vmatpush1.bf16.msra.mxu0 %v599
    %1114 = vmatprep.subr.bf16.mxu0 0
    %1115 = vmatpush1.bf16.msra.mxu0 0
    %1116 = vmatprep.subr.bf16.mxu0 0
    %1117 = vmatpush1.bf16.msra.mxu0 0
    %1118 = vmatprep.subr.bf16.mxu0 0
    %1119 = vmatpush1.bf16.msra.mxu0 0
    %1120 = vmatprep.subr.bf16.mxu0 0
    %1121 = vmatpush1.bf16.msra.mxu0 0
    %1122 = vmatprep.subr.bf16.mxu0 0
    %1123 = vmatpush1.bf16.msra.mxu0 0
    %1124 = vmatprep.subr.bf16.mxu0 0
    %1125 = vmatpush1.bf16.msra.mxu0 0
    %1126 = vmatprep.subr.bf16.mxu0 0
    %1127 = vmatpush1.bf16.msra.mxu0 0
    %1128 = vmatprep.subr.bf16.mxu0 0
    %1129 = vmatpush1.bf16.msra.mxu0 0
    %1130 = vmatprep.subr.bf16.mxu0 0
    %1131 = vmatpush1.bf16.msra.mxu0 0
    %1132 = vmatprep.subr.bf16.mxu0 0
    %1133 = vmatpush1.bf16.msra.mxu0 0
    %1134 = vmatprep.subr.bf16.mxu0 0
    %1135 = vmatpush1.bf16.msra.mxu0 0
    %1136 = vmatprep.subr.bf16.mxu0 0
    %1137 = vmatpush1.bf16.msra.mxu0 0
    %1138 = vmatprep.mubr.bf16.mxu0 0
    %1139 = vmatmul.mubr.bf16.gmra.mrb[0].mxu0 %v1061
    %v1140 = vpop.f32.mrb[0].mxu0
    %v1141 = vadd.f32 0.0, %v1140
    %v1142 = vpop.f32.mrb[0].mxu0
    %v1143 = vpop.f32.mrb[0].mxu0
    %v1144 = vadd.f32 0.0, %v1143
    %v1145 = vpop.f32.mrb[0].mxu0
    %1146 = vdwg.mxu0
    %v1147 = vadd.f32 %v1141, %v704
    %v1148 = vadd.f32 %v1144, %v704
    %v1149 = vmax.f32 %v1147, 0.0
    %v1150 = vmax.f32 %v1148, 0.0
    %vm1151 = vcmp.ne.f32.partialorder %v1147, %v1147
    %vm1152 = vcmp.ne.f32.partialorder %v1148, %v1148
    %v1153 = vadd.f32 %v1147, 0.0
    %v1154 = vadd.f32 %v1148, 0.0
    %v1155 = vand.u32 2147483647, %v1147
    %v1156 = vand.u32 2147483647, %v1148
    %v1157 = vsub.f32 0.0, %v1155
    %v1158 = vsub.f32 0.0, %v1156
    %v1159 = vmul.f32 %v1157, 1.442695
    %v1160 = vpow.pop %v1159
    %v1161 = vmul.f32 %v1158, 1.442695
    %v1162 = vpow.pop %v1161
    %v1163 = vadd.f32 %v1160, 1.0
    %v1164 = vlog2.pop %v1163
    %v1165 = vmul.f32 %v1164, 0.6931472
    %v1166 = vmul.f32 -0.5, %v1160
    %v1167 = vadd.f32 %v1166, 1.0
    %v1168 = vmul.f32 %v1167, %v1160
    %v1169 = vand.u32 2147483647, %v1160
    %vm1170 = vcmp.lt.f32.partialorder %v1169, 0.0004427343
    %v1171 = vsel %vm1170, %v1168, %v1165
    %v1172 = vadd.f32 %v1162, 1.0
    %v1173 = vlog2.pop %v1172
    %v1174 = vmul.f32 %v1173, 0.6931472
    %v1175 = vmul.f32 -0.5, %v1162
    %v1176 = vadd.f32 %v1175, 1.0
    %v1177 = vmul.f32 %v1176, %v1162
    %v1178 = vand.u32 2147483647, %v1162
    %vm1179 = vcmp.lt.f32.partialorder %v1178, 0.0004427343
    %v1180 = vsel %vm1179, %v1177, %v1174
    %v1181 = vadd.f32 %v1149, %v1171
    %v1182 = vadd.f32 %v1150, %v1180
    %v1183 = vsel %vm1151, %v1153, %v1181
    %v1184 = vsel %vm1152, %v1154, %v1182
    %v1185 = vadd.f32 %v1098, %v497
    %v1186 = vadd.f32 %v1100, %v499
    %v1187 = vadd.f32 %v1102, %v501
    %v1188 = vadd.f32 %v1104, %v503
    %v1189 = vmul.f32 %v1185, 0.5
    %v1190 = vmul.f32 %v1186, 0.5
    %v1191 = vmul.f32 %v1187, 0.5
    %v1192 = vmul.f32 %v1188, 0.5
    %v1193 = vtanh.pop %v1189
    %v1194 = vtanh.pop %v1190
    %v1195 = vtanh.pop %v1191
    %v1196 = vtanh.pop %v1192
    %v1197 = vmul.f32 %v1193, 0.5
    %v1198 = vmul.f32 %v1194, 0.5
    %v1199 = vmul.f32 %v1195, 0.5
    %v1200 = vmul.f32 %v1196, 0.5
    %v1201 = vadd.f32 %v1197, 0.5
    %v1202 = vadd.f32 %v1198, 0.5
    %v1203 = vadd.f32 %v1199, 0.5
    %v1204 = vadd.f32 %v1200, 0.5
    %v1205 = vmul.f32 %v1201, %v776
    %v1206 = vmul.f32 %v1203, %v777
    %v1207 = vmul.f32 %v1201, %v1202
    %v1208 = vmul.f32 %v1203, %v1204
    %1211 = vrot.lane.b32.xlu0 %v1207, 64
    %v1212 = vpop.permute.xlu0 %1211
    %1213 = vrot.lane.b32.xlu0 %v1208, 64
    %v1214 = vpop.permute.xlu0 %1213
    %v1217 = vadd.f32 %v1205, %v1212
    %v1218 = vadd.f32 %v1206, %v1214
    %v1219 = vtanh.pop %v1217
    %v1220 = vtanh.pop %v1218
    %v1221 = vmul.f32 %v1202, %v1219
    %v1222 = vmul.f32 %v1204, %v1220
    %v1223 = vpack.c.bf16 %v1222, %v1221
    %v1225 = vsel %vm612, %v1223, 0
    %1227 = vmatprep.subr.bf16.mxu0 0
    %1228 = vmatpush1.bf16.msra.mxu0 %v805
    %1229 = vmatprep.subr.bf16.mxu0 0
    %1230 = vmatpush1.bf16.msra.mxu0 %v806
    %1231 = vmatprep.subr.bf16.mxu0 0
    %1232 = vmatpush1.bf16.msra.mxu0 %v807
    %1233 = vmatprep.subr.bf16.mxu0 0
    %1234 = vmatpush1.bf16.msra.mxu0 %v808
    %1235 = vmatprep.subr.bf16.mxu0 0
    %1236 = vmatpush1.bf16.msra.mxu0 0
    %1237 = vmatprep.subr.bf16.mxu0 0
    %1238 = vmatpush1.bf16.msra.mxu0 0
    %1239 = vmatprep.subr.bf16.mxu0 0
    %1240 = vmatpush1.bf16.msra.mxu0 0
    %1241 = vmatprep.subr.bf16.mxu0 0
    %1242 = vmatpush1.bf16.msra.mxu0 0
    %1243 = vmatprep.subr.bf16.mxu0 0
    %1244 = vmatpush1.bf16.msra.mxu0 0
    %1245 = vmatprep.subr.bf16.mxu0 0
    %1246 = vmatpush1.bf16.msra.mxu0 0
    %1247 = vmatprep.subr.bf16.mxu0 0
    %1248 = vmatpush1.bf16.msra.mxu0 0
    %1249 = vmatprep.subr.bf16.mxu0 0
    %1250 = vmatpush1.bf16.msra.mxu0 0
    %1251 = vmatprep.subr.bf16.mxu0 0
    %1252 = vmatpush1.bf16.msra.mxu0 0
    %1253 = vmatprep.subr.bf16.mxu0 0
    %1254 = vmatpush1.bf16.msra.mxu0 0
    %1255 = vmatprep.subr.bf16.mxu0 0
    %1256 = vmatpush1.bf16.msra.mxu0 0
    %1257 = vmatprep.subr.bf16.mxu0 0
    %1258 = vmatpush1.bf16.msra.mxu0 0
    %1259 = vmatprep.mubr.bf16.mxu0 0
    %1260 = vmatmul.mubr.bf16.gmra.mrb[0].mxu0 %v1225
    %v1261 = vpop.f32.mrb[0].mxu0
    %v1262 = vadd.f32 %v787, %v1261
    %v1263 = vpop.f32.mrb[0].mxu0
    %v1264 = vpop.f32.mrb[0].mxu0
    %v1265 = vadd.f32 %v787, %v1264
    %v1266 = vpop.f32.mrb[0].mxu0
    %1267 = vdwg.mxu0
    %v1268 = vmax.f32 %v1262, 0.0
    %v1269 = vmax.f32 %v1265, 0.0
    %vm1270 = vcmp.ne.f32.partialorder %v1262, %v1262
    %vm1271 = vcmp.ne.f32.partialorder %v1265, %v1265
    %v1272 = vadd.f32 %v1262, 0.0
    %v1273 = vadd.f32 %v1265, 0.0
    %v1274 = vand.u32 2147483647, %v1262
    %v1275 = vand.u32 2147483647, %v1265
    %v1276 = vsub.f32 0.0, %v1274
    %v1277 = vsub.f32 0.0, %v1275
    %v1278 = vmul.f32 %v1276, 1.442695
    %v1279 = vpow.pop %v1278
    %v1280 = vmul.f32 %v1277, 1.442695
    %v1281 = vpow.pop %v1280
    %v1282 = vadd.f32 %v1279, 1.0
    %v1283 = vlog2.pop %v1282
    %v1284 = vmul.f32 %v1283, 0.6931472
    %v1285 = vmul.f32 -0.5, %v1279
    %v1286 = vadd.f32 %v1285, 1.0
    %v1287 = vmul.f32 %v1286, %v1279
    %v1288 = vand.u32 2147483647, %v1279
    %vm1289 = vcmp.lt.f32.partialorder %v1288, 0.0004427343
    %v1290 = vsel %vm1289, %v1287, %v1284
    %v1291 = vadd.f32 %v1281, 1.0
    %v1292 = vlog2.pop %v1291
    %v1293 = vmul.f32 %v1292, 0.6931472
    %v1294 = vmul.f32 -0.5, %v1281
    %v1295 = vadd.f32 %v1294, 1.0
    %v1296 = vmul.f32 %v1295, %v1281
    %v1297 = vand.u32 2147483647, %v1281
    %vm1298 = vcmp.lt.f32.partialorder %v1297, 0.0004427343
    %v1299 = vsel %vm1298, %v1296, %v1293
    %v1300 = vadd.f32 %v1268, %v1290
    %v1301 = vadd.f32 %v1269, %v1299
    %v1302 = vsel %vm1270, %v1272, %v1300
    %v1303 = vsel %vm1271, %v1273, %v1301
    %v1304 = vmul.f32 %v1302, %v124
    %v1305 = vmul.f32 %v1303, %v126
    %1308 = vrot.lane.b32.xlu0 %v1304, 96
    %v1309 = vpop.permute.xlu0 %1308
    %1310 = vrot.lane.b32.xlu0 %v1305, 96
    %v1311 = vpop.permute.xlu0 %1310
    %v1314 = vadd.f32 %v1262, %v1309
    %v1315 = vadd.f32 %v1265, %v1311
    %v1316 = vpack.c.bf16 %v1315, %v1314
    %v1318 = vsel %vm934, %v1316, 0
    %1320 = vmatprep.subr.bf16.mxu0 %v927
    %1321 = vmatpush1.bf16.msra.mxu0 %v926
    %1322 = vmatprep.subr.bf16.mxu0 %v929
    %1323 = vmatpush1.bf16.msra.mxu0 %v928
    %1324 = vmatprep.subr.bf16.mxu0 0
    %1325 = vmatpush1.bf16.msra.mxu0 0
    %1326 = vmatprep.subr.bf16.mxu0 0
    %1327 = vmatpush1.bf16.msra.mxu0 0
    %1328 = vmatprep.subr.bf16.mxu0 0
    %1329 = vmatpush1.bf16.msra.mxu0 0
    %1330 = vmatprep.subr.bf16.mxu0 0
    %1331 = vmatpush1.bf16.msra.mxu0 0
    %1332 = vmatprep.subr.bf16.mxu0 0
    %1333 = vmatpush1.bf16.msra.mxu0 0
    %1334 = vmatprep.subr.bf16.mxu0 0
    %1335 = vmatpush1.bf16.msra.mxu0 0
    %1336 = vmatprep.subr.bf16.mxu0 0
    %1337 = vmatpush1.bf16.msra.mxu0 0
    %1338 = vmatprep.subr.bf16.mxu0 0
    %1339 = vmatpush1.bf16.msra.mxu0 0
    %1340 = vmatprep.subr.bf16.mxu0 0
    %1341 = vmatpush1.bf16.msra.mxu0 0
    %1342 = vmatprep.subr.bf16.mxu0 0
    %1343 = vmatpush1.bf16.msra.mxu0 0
    %1344 = vmatprep.subr.bf16.mxu0 0
    %1345 = vmatpush1.bf16.msra.mxu0 0
    %1346 = vmatprep.subr.bf16.mxu0 0
    %1347 = vmatpush1.bf16.msra.mxu0 0
    %1348 = vmatprep.subr.bf16.mxu0 0
    %1349 = vmatpush1.bf16.msra.mxu0 0
    %1350 = vmatprep.subr.bf16.mxu0 0
    %1351 = vmatpush1.bf16.msra.mxu0 0
    %1352 = vmatprep.mubr.bf16.mxu0 0
    %1353 = vmatmul.mubr.bf16.gmra.mrb[0].mxu0 %v1318
    %v1354 = vpop.f32.mrb[0].mxu0
    %v1355 = vadd.f32 %v540, %v1354
    %v1356 = vpop.f32.mrb[0].mxu0
    %v1357 = vadd.f32 %v542, %v1356
    %v1358 = vpop.f32.mrb[0].mxu0
    %v1359 = vadd.f32 %v544, %v1358
    %v1360 = vpop.f32.mrb[0].mxu0
    %v1361 = vadd.f32 %v546, %v1360
    %1362 = vdwg.mxu0
    %v1363 = vmul.f32 %v1355, 0.5
    %v1364 = vmul.f32 %v1357, 0.5
    %v1365 = vmul.f32 %v1359, 0.5
    %v1366 = vmul.f32 %v1361, 0.5
    %v1367 = vtanh.pop %v1363
    %v1368 = vtanh.pop %v1364
    %v1369 = vtanh.pop %v1365
    %v1370 = vtanh.pop %v1366
    %v1371 = vmul.f32 %v1367, 0.5
    %v1372 = vmul.f32 %v1368, 0.5
    %v1373 = vmul.f32 %v1369, 0.5
    %v1374 = vmul.f32 %v1370, 0.5
    %v1375 = vadd.f32 %v1371, 0.5
    %v1376 = vadd.f32 %v1372, 0.5
    %v1377 = vadd.f32 %v1373, 0.5
    %v1378 = vadd.f32 %v1374, 0.5
    %v1379 = vmul.f32 %v1375, %v1009
    %v1380 = vmul.f32 %v1377, %v1010
    %v1381 = vmul.f32 %v1375, %v1376
    %v1382 = vmul.f32 %v1377, %v1378
    %1385 = vrot.lane.b32.xlu0 %v1381, 64
    %v1386 = vpop.permute.xlu0 %1385
    %1387 = vrot.lane.b32.xlu0 %v1382, 64
    %v1388 = vpop.permute.xlu0 %1387
    %v1391 = vadd.f32 %v1379, %v1386
    %v1392 = vadd.f32 %v1380, %v1388
    %v1393 = vtanh.pop %v1391
    %v1394 = vtanh.pop %v1392
    %v1395 = vmul.f32 %v1376, %v1393
    %v1396 = vmul.f32 %v1378, %v1394
    %v1397 = vadd.f32 %v1015, %v1395
    %v1398 = vadd.f32 %v1016, %v1396
    %v1399 = vrcp.pop %v1183
    %v1400 = vrcp.pop %v1184
    %v1401 = vmul.f32 %v1302, %v1399
    %v1402 = vmul.f32 %v1303, %v1400
    %v1403 = vmul.f32 %v1401, %v1401
    %v1404 = vmul.f32 %v1402, %v1402
    %v1405 = vsub.f32 %v1262, %v1147
    %v1406 = vsub.f32 %v1265, %v1148
    %1409 = vrot.lane.b32.xlu0 %v1399, 96
    %v1410 = vpop.permute.xlu0 %1409
    %1411 = vrot.lane.b32.xlu0 %v1400, 96
    %v1412 = vpop.permute.xlu0 %1411
    %v1415 = vmul.f32 %v1405, %v1410
    %v1416 = vmul.f32 %v1406, %v1412
    %v1417 = vmul.f32 %v1415, %v1415
    %v1418 = vmul.f32 %v1416, %v1416
    %1421 = vrot.lane.b32.xlu0 %v1417, 32
    %v1422 = vpop.permute.xlu0 %1421
    %1423 = vrot.lane.b32.xlu0 %v1418, 32
    %v1424 = vpop.permute.xlu0 %1423
    %v1427 = vadd.f32 %v1403, %v1422
    %v1428 = vadd.f32 %v1404, %v1424
    %v1429 = vsub.f32 %v1427, 1.0
    %v1430 = vsub.f32 %v1428, 1.0
    %v1431 = vlog2.pop %v1403
    %v1432 = vmul.f32 %v1431, 0.6931472
    %v1433 = vlog2.pop %v1404
    %v1434 = vmul.f32 %v1433, 0.6931472
    %v1435 = vsub.f32 %v1429, %v1432
    %v1436 = vsub.f32 %v1430, %v1434
    %v1437 = vmul.f32 %v1435, 0.5
    %v1438 = vmul.f32 %v1436, 0.5
    %v1439 = vadd.f32 %v1057, %v1437
    %v1440 = vadd.f32 %v1058, %v1438
    %v1441 = vpack.c.bf16 %v1396, %v1395
    %v1443 = vsel %vm612, %v1441, 0
    %1445 = vmatprep.subr.bf16.mxu0 %v589
    %1446 = vmatpush1.bf16.msra.mxu0 %v588
    %1447 = vmatprep.subr.bf16.mxu0 %v592
    %1448 = vmatpush1.bf16.msra.mxu0 %v591
    %1449 = vmatprep.subr.bf16.mxu0 %v595
    %1450 = vmatpush1.bf16.msra.mxu0 %v594
    %1451 = vmatprep.subr.bf16.mxu0 %v598
    %1452 = vmatpush1.bf16.msra.mxu0 %v597
    %1453 = vmatprep.subr.bf16.mxu0 0
    %1454 = vmatpush1.bf16.msra.mxu0 0
    %1455 = vmatprep.subr.bf16.mxu0 0
    %1456 = vmatpush1.bf16.msra.mxu0 0
    %1457 = vmatprep.subr.bf16.mxu0 0
    %1458 = vmatpush1.bf16.msra.mxu0 0
    %1459 = vmatprep.subr.bf16.mxu0 0
    %1460 = vmatpush1.bf16.msra.mxu0 0
    %1461 = vmatprep.subr.bf16.mxu0 0
    %1462 = vmatpush1.bf16.msra.mxu0 0
    %1463 = vmatprep.subr.bf16.mxu0 0
    %1464 = vmatpush1.bf16.msra.mxu0 0
    %1465 = vmatprep.subr.bf16.mxu0 0
    %1466 = vmatpush1.bf16.msra.mxu0 0
    %1467 = vmatprep.subr.bf16.mxu0 0
    %1468 = vmatpush1.bf16.msra.mxu0 0
    %1469 = vmatprep.subr.bf16.mxu0 0
    %1470 = vmatpush1.bf16.msra.mxu0 0
    %1471 = vmatprep.subr.bf16.mxu0 0
    %1472 = vmatpush1.bf16.msra.mxu0 0
    %1473 = vmatprep.subr.bf16.mxu0 0
    %1474 = vmatpush1.bf16.msra.mxu0 0
    %1475 = vmatprep.subr.bf16.mxu0 0
    %1476 = vmatpush1.bf16.msra.mxu0 0
    %1477 = vmatprep.mubr.bf16.mxu0 0
    %1478 = vmatmul.mubr.bf16.gmra.mrb[0].mxu0 %v1443
    %v1479 = vpop.f32.mrb[0].mxu0
    %v1480 = vadd.f32 0.0, %v1479
    %v1481 = vpop.f32.mrb[0].mxu0
    %v1482 = vadd.f32 0.0, %v1481
    %v1483 = vpop.f32.mrb[0].mxu0
    %v1484 = vadd.f32 0.0, %v1483
    %v1485 = vpop.f32.mrb[0].mxu0
    %v1486 = vadd.f32 0.0, %v1485
    %1487 = vdwg.mxu0
    %1488 = vmatprep.subr.bf16.mxu0 0
    %1489 = vmatpush1.bf16.msra.mxu0 %v590
    %1490 = vmatprep.subr.bf16.mxu0 0
    %1491 = vmatpush1.bf16.msra.mxu0 %v593
    %1492 = vmatprep.subr.bf16.mxu0 0
    %1493 = vmatpush1.bf16.msra.mxu0 %v596
    %1494 = vmatprep.subr.bf16.mxu0 0
    %1495 = vmatpush1.bf16.msra.mxu0 %v599
    %1496 = vmatprep.subr.bf16.mxu0 0
    %1497 = vmatpush1.bf16.msra.mxu0 0
    %1498 = vmatprep.subr.bf16.mxu0 0
    %1499 = vmatpush1.bf16.msra.mxu0 0
    %1500 = vmatprep.subr.bf16.mxu0 0
    %1501 = vmatpush1.bf16.msra.mxu0 0
    %1502 = vmatprep.subr.bf16.mxu0 0
    %1503 = vmatpush1.bf16.msra.mxu0 0
    %1504 = vmatprep.subr.bf16.mxu0 0
    %1505 = vmatpush1.bf16.msra.mxu0 0
    %1506 = vmatprep.subr.bf16.mxu0 0
    %1507 = vmatpush1.bf16.msra.mxu0 0
    %1508 = vmatprep.subr.bf16.mxu0 0
    %1509 = vmatpush1.bf16.msra.mxu0 0
    %1510 = vmatprep.subr.bf16.mxu0 0
    %1511 = vmatpush1.bf16.msra.mxu0 0
    %1512 = vmatprep.subr.bf16.mxu0 0
    %1513 = vmatpush1.bf16.msra.mxu0 0
    %1514 = vmatprep.subr.bf16.mxu0 0
    %1515 = vmatpush1.bf16.msra.mxu0 0
    %1516 = vmatprep.subr.bf16.mxu0 0
    %1517 = vmatpush1.bf16.msra.mxu0 0
    %1518 = vmatprep.subr.bf16.mxu0 0
    %1519 = vmatpush1.bf16.msra.mxu0 0
    %1520 = vmatprep.mubr.bf16.mxu0 0
    %1521 = vmatmul.mubr.bf16.gmra.mrb[0].mxu0 %v1443
    %v1522 = vpop.f32.mrb[0].mxu0
    %v1523 = vadd.f32 0.0, %v1522
    %v1524 = vpop.f32.mrb[0].mxu0
    %v1525 = vpop.f32.mrb[0].mxu0
    %v1526 = vadd.f32 0.0, %v1525
    %v1527 = vpop.f32.mrb[0].mxu0
    %1528 = vdwg.mxu0
    %v1529 = vadd.f32 %v1523, %v704
    %v1530 = vadd.f32 %v1526, %v704
    %v1531 = vmax.f32 %v1529, 0.0
    %v1532 = vmax.f32 %v1530, 0.0
    %vm1533 = vcmp.ne.f32.partialorder %v1529, %v1529
    %vm1534 = vcmp.ne.f32.partialorder %v1530, %v1530
    %v1535 = vadd.f32 %v1529, 0.0
    %v1536 = vadd.f32 %v1530, 0.0
    %v1537 = vand.u32 2147483647, %v1529
    %v1538 = vand.u32 2147483647, %v1530
    %v1539 = vsub.f32 0.0, %v1537
    %v1540 = vsub.f32 0.0, %v1538
    %v1541 = vmul.f32 %v1539, 1.442695
    %v1542 = vpow.pop %v1541
    %v1543 = vmul.f32 %v1540, 1.442695
    %v1544 = vpow.pop %v1543
    %v1545 = vadd.f32 %v1542, 1.0
    %v1546 = vlog2.pop %v1545
    %v1547 = vmul.f32 %v1546, 0.6931472
    %v1548 = vmul.f32 -0.5, %v1542
    %v1549 = vadd.f32 %v1548, 1.0
    %v1550 = vmul.f32 %v1549, %v1542
    %v1551 = vand.u32 2147483647, %v1542
    %vm1552 = vcmp.lt.f32.partialorder %v1551, 0.0004427343
    %v1553 = vsel %vm1552, %v1550, %v1547
    %v1554 = vadd.f32 %v1544, 1.0
    %v1555 = vlog2.pop %v1554
    %v1556 = vmul.f32 %v1555, 0.6931472
    %v1557 = vmul.f32 -0.5, %v1544
    %v1558 = vadd.f32 %v1557, 1.0
    %v1559 = vmul.f32 %v1558, %v1544
    %v1560 = vand.u32 2147483647, %v1544
    %vm1561 = vcmp.lt.f32.partialorder %v1560, 0.0004427343
    %v1562 = vsel %vm1561, %v1559, %v1556
    %v1563 = vadd.f32 %v1531, %v1553
    %v1564 = vadd.f32 %v1532, %v1562
    %v1565 = vsel %vm1533, %v1535, %v1563
    %v1566 = vsel %vm1534, %v1536, %v1564
    %v1567 = vadd.f32 %v1480, %v497
    %v1568 = vadd.f32 %v1482, %v499
    %v1569 = vadd.f32 %v1484, %v501
    %v1570 = vadd.f32 %v1486, %v503
    %v1571 = vmul.f32 %v1567, 0.5
    %v1572 = vmul.f32 %v1568, 0.5
    %v1573 = vmul.f32 %v1569, 0.5
    %v1574 = vmul.f32 %v1570, 0.5
    %v1575 = vtanh.pop %v1571
    %v1576 = vtanh.pop %v1572
    %v1577 = vtanh.pop %v1573
    %v1578 = vtanh.pop %v1574
    %v1579 = vmul.f32 %v1575, 0.5
    %v1580 = vmul.f32 %v1576, 0.5
    %v1581 = vmul.f32 %v1577, 0.5
    %v1582 = vmul.f32 %v1578, 0.5
    %v1583 = vadd.f32 %v1579, 0.5
    %v1584 = vadd.f32 %v1580, 0.5
    %v1585 = vadd.f32 %v1581, 0.5
    %v1586 = vadd.f32 %v1582, 0.5
    %v1587 = vmul.f32 %v1583, %v1217
    %v1588 = vmul.f32 %v1585, %v1218
    %v1589 = vmul.f32 %v1583, %v1584
    %v1590 = vmul.f32 %v1585, %v1586
    %1593 = vrot.lane.b32.xlu0 %v1589, 64
    %v1594 = vpop.permute.xlu0 %1593
    %1595 = vrot.lane.b32.xlu0 %v1590, 64
    %v1596 = vpop.permute.xlu0 %1595
    %v1599 = vadd.f32 %v1587, %v1594
    %v1600 = vadd.f32 %v1588, %v1596
    %v1601 = vtanh.pop %v1599
    %v1602 = vtanh.pop %v1600
    %v1603 = vmul.f32 %v1584, %v1601
    %v1604 = vmul.f32 %v1586, %v1602
    %v1605 = vpack.c.bf16 %v1604, %v1603
    %v1607 = vsel %vm612, %v1605, 0
    %1609 = vmatprep.subr.bf16.mxu0 0
    %1610 = vmatpush1.bf16.msra.mxu0 %v805
    %1611 = vmatprep.subr.bf16.mxu0 0
    %1612 = vmatpush1.bf16.msra.mxu0 %v806
    %1613 = vmatprep.subr.bf16.mxu0 0
    %1614 = vmatpush1.bf16.msra.mxu0 %v807
    %1615 = vmatprep.subr.bf16.mxu0 0
    %1616 = vmatpush1.bf16.msra.mxu0 %v808
    %1617 = vmatprep.subr.bf16.mxu0 0
    %1618 = vmatpush1.bf16.msra.mxu0 0
    %1619 = vmatprep.subr.bf16.mxu0 0
    %1620 = vmatpush1.bf16.msra.mxu0 0
    %1621 = vmatprep.subr.bf16.mxu0 0
    %1622 = vmatpush1.bf16.msra.mxu0 0
    %1623 = vmatprep.subr.bf16.mxu0 0
    %1624 = vmatpush1.bf16.msra.mxu0 0
    %1625 = vmatprep.subr.bf16.mxu0 0
    %1626 = vmatpush1.bf16.msra.mxu0 0
    %1627 = vmatprep.subr.bf16.mxu0 0
    %1628 = vmatpush1.bf16.msra.mxu0 0
    %1629 = vmatprep.subr.bf16.mxu0 0
    %1630 = vmatpush1.bf16.msra.mxu0 0
    %1631 = vmatprep.subr.bf16.mxu0 0
    %1632 = vmatpush1.bf16.msra.mxu0 0
    %1633 = vmatprep.subr.bf16.mxu0 0
    %1634 = vmatpush1.bf16.msra.mxu0 0
    %1635 = vmatprep.subr.bf16.mxu0 0
    %1636 = vmatpush1.bf16.msra.mxu0 0
    %1637 = vmatprep.subr.bf16.mxu0 0
    %1638 = vmatpush1.bf16.msra.mxu0 0
    %1639 = vmatprep.subr.bf16.mxu0 0
    %1640 = vmatpush1.bf16.msra.mxu0 0
    %1641 = vmatprep.mubr.bf16.mxu0 0
    %1642 = vmatmul.mubr.bf16.gmra.mrb[0].mxu0 %v1607
    %v1643 = vpop.f32.mrb[0].mxu0
    %v1644 = vadd.f32 %v787, %v1643
    %v1645 = vpop.f32.mrb[0].mxu0
    %v1646 = vpop.f32.mrb[0].mxu0
    %v1647 = vadd.f32 %v787, %v1646
    %v1648 = vpop.f32.mrb[0].mxu0
    %1649 = vdwg.mxu0
    %v1650 = vmax.f32 %v1644, 0.0
    %v1651 = vmax.f32 %v1647, 0.0
    %vm1652 = vcmp.ne.f32.partialorder %v1644, %v1644
    %vm1653 = vcmp.ne.f32.partialorder %v1647, %v1647
    %v1654 = vadd.f32 %v1644, 0.0
    %v1655 = vadd.f32 %v1647, 0.0
    %v1656 = vand.u32 2147483647, %v1644
    %v1657 = vand.u32 2147483647, %v1647
    %v1658 = vsub.f32 0.0, %v1656
    %v1659 = vsub.f32 0.0, %v1657
    %v1660 = vmul.f32 %v1658, 1.442695
    %v1661 = vpow.pop %v1660
    %v1662 = vmul.f32 %v1659, 1.442695
    %v1663 = vpow.pop %v1662
    %v1664 = vadd.f32 %v1661, 1.0
    %v1665 = vlog2.pop %v1664
    %v1666 = vmul.f32 %v1665, 0.6931472
    %v1667 = vmul.f32 -0.5, %v1661
    %v1668 = vadd.f32 %v1667, 1.0
    %v1669 = vmul.f32 %v1668, %v1661
    %v1670 = vand.u32 2147483647, %v1661
    %vm1671 = vcmp.lt.f32.partialorder %v1670, 0.0004427343
    %v1672 = vsel %vm1671, %v1669, %v1666
    %v1673 = vadd.f32 %v1663, 1.0
    %v1674 = vlog2.pop %v1673
    %v1675 = vmul.f32 %v1674, 0.6931472
    %v1676 = vmul.f32 -0.5, %v1663
    %v1677 = vadd.f32 %v1676, 1.0
    %v1678 = vmul.f32 %v1677, %v1663
    %v1679 = vand.u32 2147483647, %v1663
    %vm1680 = vcmp.lt.f32.partialorder %v1679, 0.0004427343
    %v1681 = vsel %vm1680, %v1678, %v1675
    %v1682 = vadd.f32 %v1650, %v1672
    %v1683 = vadd.f32 %v1651, %v1681
    %v1684 = vsel %vm1652, %v1654, %v1682
    %v1685 = vsel %vm1653, %v1655, %v1683
    %1686 = vrot.lane.b32.xlu0 %v124, 96
    %v1687 = vpop.permute.xlu0 %1686
    %1688 = vrot.lane.b32.xlu0 %v126, 96
    %v1689 = vpop.permute.xlu0 %1688
    %v1692 = vmul.f32 %v1684, %v1687
    %v1693 = vmul.f32 %v1685, %v1689
    %1696 = vrot.lane.b32.xlu0 %v1692, 96
    %v1697 = vpop.permute.xlu0 %1696
    %1698 = vrot.lane.b32.xlu0 %v1693, 96
    %v1699 = vpop.permute.xlu0 %1698
    %v1702 = vadd.f32 %v1644, %v1697
    %v1703 = vadd.f32 %v1647, %v1699
    %v1704 = vpack.c.bf16 %v1703, %v1702
    %v1706 = vsel %vm934, %v1704, 0
    %1708 = vmatprep.subr.bf16.mxu0 %v927
    %1709 = vmatpush1.bf16.msra.mxu0 %v926
    %1710 = vmatprep.subr.bf16.mxu0 %v929
    %1711 = vmatpush1.bf16.msra.mxu0 %v928
    %1712 = vmatprep.subr.bf16.mxu0 0
    %1713 = vmatpush1.bf16.msra.mxu0 0
    %1714 = vmatprep.subr.bf16.mxu0 0
    %1715 = vmatpush1.bf16.msra.mxu0 0
    %1716 = vmatprep.subr.bf16.mxu0 0
    %1717 = vmatpush1.bf16.msra.mxu0 0
    %1718 = vmatprep.subr.bf16.mxu0 0
    %1719 = vmatpush1.bf16.msra.mxu0 0
    %1720 = vmatprep.subr.bf16.mxu0 0
    %1721 = vmatpush1.bf16.msra.mxu0 0
    %1722 = vmatprep.subr.bf16.mxu0 0
    %1723 = vmatpush1.bf16.msra.mxu0 0
    %1724 = vmatprep.subr.bf16.mxu0 0
    %1725 = vmatpush1.bf16.msra.mxu0 0
    %1726 = vmatprep.subr.bf16.mxu0 0
    %1727 = vmatpush1.bf16.msra.mxu0 0
    %1728 = vmatprep.subr.bf16.mxu0 0
    %1729 = vmatpush1.bf16.msra.mxu0 0
    %1730 = vmatprep.subr.bf16.mxu0 0
    %1731 = vmatpush1.bf16.msra.mxu0 0
    %1732 = vmatprep.subr.bf16.mxu0 0
    %1733 = vmatpush1.bf16.msra.mxu0 0
    %1734 = vmatprep.subr.bf16.mxu0 0
    %1735 = vmatpush1.bf16.msra.mxu0 0
    %1736 = vmatprep.subr.bf16.mxu0 0
    %1737 = vmatpush1.bf16.msra.mxu0 0
    %1738 = vmatprep.subr.bf16.mxu0 0
    %1739 = vmatpush1.bf16.msra.mxu0 0
    %1740 = vmatprep.mubr.bf16.mxu0 0
    %1741 = vmatmul.mubr.bf16.gmra.mrb[0].mxu0 %v1706
    %v1742 = vpop.f32.mrb[0].mxu0
    %v1743 = vadd.f32 %v540, %v1742
    %v1744 = vpop.f32.mrb[0].mxu0
    %v1745 = vadd.f32 %v542, %v1744
    %v1746 = vpop.f32.mrb[0].mxu0
    %v1747 = vadd.f32 %v544, %v1746
    %v1748 = vpop.f32.mrb[0].mxu0
    %v1749 = vadd.f32 %v546, %v1748
    %1750 = vdwg.mxu0
    %v1751 = vmul.f32 %v1743, 0.5
    %v1752 = vmul.f32 %v1745, 0.5
    %v1753 = vmul.f32 %v1747, 0.5
    %v1754 = vmul.f32 %v1749, 0.5
    %v1755 = vtanh.pop %v1751
    %v1756 = vtanh.pop %v1752
    %v1757 = vtanh.pop %v1753
    %v1758 = vtanh.pop %v1754
    %v1759 = vmul.f32 %v1755, 0.5
    %v1760 = vmul.f32 %v1756, 0.5
    %v1761 = vmul.f32 %v1757, 0.5
    %v1762 = vmul.f32 %v1758, 0.5
    %v1763 = vadd.f32 %v1759, 0.5
    %v1764 = vadd.f32 %v1760, 0.5
    %v1765 = vadd.f32 %v1761, 0.5
    %v1766 = vadd.f32 %v1762, 0.5
    %v1767 = vmul.f32 %v1763, %v1391
    %v1768 = vmul.f32 %v1765, %v1392
    %v1769 = vmul.f32 %v1763, %v1764
    %v1770 = vmul.f32 %v1765, %v1766
    %1773 = vrot.lane.b32.xlu0 %v1769, 64
    %v1774 = vpop.permute.xlu0 %1773
    %1775 = vrot.lane.b32.xlu0 %v1770, 64
    %v1776 = vpop.permute.xlu0 %1775
    %v1779 = vadd.f32 %v1767, %v1774
    %v1780 = vadd.f32 %v1768, %v1776
    %v1781 = vtanh.pop %v1779
    %v1782 = vtanh.pop %v1780
    %v1783 = vmul.f32 %v1764, %v1781
    %v1784 = vmul.f32 %v1766, %v1782
    %v1785 = vadd.f32 %v1397, %v1783
    %v1786 = vadd.f32 %v1398, %v1784
    %v1787 = vrcp.pop %v1565
    %v1788 = vrcp.pop %v1566
    %v1789 = vmul.f32 %v1684, %v1787
    %v1790 = vmul.f32 %v1685, %v1788
    %v1791 = vmul.f32 %v1789, %v1789
    %v1792 = vmul.f32 %v1790, %v1790
    %v1793 = vsub.f32 %v1644, %v1529
    %v1794 = vsub.f32 %v1647, %v1530
    %1797 = vrot.lane.b32.xlu0 %v1787, 96
    %v1798 = vpop.permute.xlu0 %1797
    %1799 = vrot.lane.b32.xlu0 %v1788, 96
    %v1800 = vpop.permute.xlu0 %1799
    %v1803 = vmul.f32 %v1793, %v1798
    %v1804 = vmul.f32 %v1794, %v1800
    %v1805 = vmul.f32 %v1803, %v1803
    %v1806 = vmul.f32 %v1804, %v1804
    %1809 = vrot.lane.b32.xlu0 %v1805, 32
    %v1810 = vpop.permute.xlu0 %1809
    %1811 = vrot.lane.b32.xlu0 %v1806, 32
    %v1812 = vpop.permute.xlu0 %1811
    %v1815 = vadd.f32 %v1791, %v1810
    %v1816 = vadd.f32 %v1792, %v1812
    %v1817 = vsub.f32 %v1815, 1.0
    %v1818 = vsub.f32 %v1816, 1.0
    %v1819 = vlog2.pop %v1791
    %v1820 = vmul.f32 %v1819, 0.6931472
    %v1821 = vlog2.pop %v1792
    %v1822 = vmul.f32 %v1821, 0.6931472
    %v1823 = vsub.f32 %v1817, %v1820
    %v1824 = vsub.f32 %v1818, %v1822
    %v1825 = vmul.f32 %v1823, 0.5
    %v1826 = vmul.f32 %v1824, 0.5
    %v1827 = vadd.f32 %v1439, %v1825
    %v1828 = vadd.f32 %v1440, %v1826
    %v1829 = vpack.c.bf16 %v1784, %v1783
    %v1831 = vsel %vm612, %v1829, 0
    %1833 = vmatprep.subr.bf16.mxu0 %v589
    %1834 = vmatpush1.bf16.msra.mxu0 %v588
    %1835 = vmatprep.subr.bf16.mxu0 %v592
    %1836 = vmatpush1.bf16.msra.mxu0 %v591
    %1837 = vmatprep.subr.bf16.mxu0 %v595
    %1838 = vmatpush1.bf16.msra.mxu0 %v594
    %1839 = vmatprep.subr.bf16.mxu0 %v598
    %1840 = vmatpush1.bf16.msra.mxu0 %v597
    %1841 = vmatprep.subr.bf16.mxu0 0
    %1842 = vmatpush1.bf16.msra.mxu0 0
    %1843 = vmatprep.subr.bf16.mxu0 0
    %1844 = vmatpush1.bf16.msra.mxu0 0
    %1845 = vmatprep.subr.bf16.mxu0 0
    %1846 = vmatpush1.bf16.msra.mxu0 0
    %1847 = vmatprep.subr.bf16.mxu0 0
    %1848 = vmatpush1.bf16.msra.mxu0 0
    %1849 = vmatprep.subr.bf16.mxu0 0
    %1850 = vmatpush1.bf16.msra.mxu0 0
    %1851 = vmatprep.subr.bf16.mxu0 0
    %1852 = vmatpush1.bf16.msra.mxu0 0
    %1853 = vmatprep.subr.bf16.mxu0 0
    %1854 = vmatpush1.bf16.msra.mxu0 0
    %1855 = vmatprep.subr.bf16.mxu0 0
    %1856 = vmatpush1.bf16.msra.mxu0 0
    %1857 = vmatprep.subr.bf16.mxu0 0
    %1858 = vmatpush1.bf16.msra.mxu0 0
    %1859 = vmatprep.subr.bf16.mxu0 0
    %1860 = vmatpush1.bf16.msra.mxu0 0
    %1861 = vmatprep.subr.bf16.mxu0 0
    %1862 = vmatpush1.bf16.msra.mxu0 0
    %1863 = vmatprep.subr.bf16.mxu0 0
    %1864 = vmatpush1.bf16.msra.mxu0 0
    %1865 = vmatprep.mubr.bf16.mxu0 0
    %1866 = vmatmul.mubr.bf16.gmra.mrb[0].mxu0 %v1831
    %v1867 = vpop.f32.mrb[0].mxu0
    %v1868 = vadd.f32 0.0, %v1867
    %v1869 = vpop.f32.mrb[0].mxu0
    %v1870 = vadd.f32 0.0, %v1869
    %v1871 = vpop.f32.mrb[0].mxu0
    %v1872 = vadd.f32 0.0, %v1871
    %v1873 = vpop.f32.mrb[0].mxu0
    %v1874 = vadd.f32 0.0, %v1873
    %1875 = vdwg.mxu0
    %1876 = vmatprep.subr.bf16.mxu0 0
    %1877 = vmatpush1.bf16.msra.mxu0 %v590
    %1878 = vmatprep.subr.bf16.mxu0 0
    %1879 = vmatpush1.bf16.msra.mxu0 %v593
    %1880 = vmatprep.subr.bf16.mxu0 0
    %1881 = vmatpush1.bf16.msra.mxu0 %v596
    %1882 = vmatprep.subr.bf16.mxu0 0
    %1883 = vmatpush1.bf16.msra.mxu0 %v599
    %1884 = vmatprep.subr.bf16.mxu0 0
    %1885 = vmatpush1.bf16.msra.mxu0 0
    %1886 = vmatprep.subr.bf16.mxu0 0
    %1887 = vmatpush1.bf16.msra.mxu0 0
    %1888 = vmatprep.subr.bf16.mxu0 0
    %1889 = vmatpush1.bf16.msra.mxu0 0
    %1890 = vmatprep.subr.bf16.mxu0 0
    %1891 = vmatpush1.bf16.msra.mxu0 0
    %1892 = vmatprep.subr.bf16.mxu0 0
    %1893 = vmatpush1.bf16.msra.mxu0 0
    %1894 = vmatprep.subr.bf16.mxu0 0
    %1895 = vmatpush1.bf16.msra.mxu0 0
    %1896 = vmatprep.subr.bf16.mxu0 0
    %1897 = vmatpush1.bf16.msra.mxu0 0
    %1898 = vmatprep.subr.bf16.mxu0 0
    %1899 = vmatpush1.bf16.msra.mxu0 0
    %1900 = vmatprep.subr.bf16.mxu0 0
    %1901 = vmatpush1.bf16.msra.mxu0 0
    %1902 = vmatprep.subr.bf16.mxu0 0
    %1903 = vmatpush1.bf16.msra.mxu0 0
    %1904 = vmatprep.subr.bf16.mxu0 0
    %1905 = vmatpush1.bf16.msra.mxu0 0
    %1906 = vmatprep.subr.bf16.mxu0 0
    %1907 = vmatpush1.bf16.msra.mxu0 0
    %1908 = vmatprep.mubr.bf16.mxu0 0
    %1909 = vmatmul.mubr.bf16.gmra.mrb[0].mxu0 %v1831
    %v1910 = vpop.f32.mrb[0].mxu0
    %v1911 = vadd.f32 0.0, %v1910
    %v1912 = vpop.f32.mrb[0].mxu0
    %v1913 = vpop.f32.mrb[0].mxu0
    %v1914 = vadd.f32 0.0, %v1913
    %v1915 = vpop.f32.mrb[0].mxu0
    %1916 = vdwg.mxu0
    %v1917 = vadd.f32 %v1911, %v704
    %v1918 = vadd.f32 %v1914, %v704
    %v1919 = vmax.f32 %v1917, 0.0
    %v1920 = vmax.f32 %v1918, 0.0
    %vm1921 = vcmp.ne.f32.partialorder %v1917, %v1917
    %vm1922 = vcmp.ne.f32.partialorder %v1918, %v1918
    %v1923 = vadd.f32 %v1917, 0.0
    %v1924 = vadd.f32 %v1918, 0.0
    %v1925 = vand.u32 2147483647, %v1917
    %v1926 = vand.u32 2147483647, %v1918
    %v1927 = vsub.f32 0.0, %v1925
    %v1928 = vsub.f32 0.0, %v1926
    %v1929 = vmul.f32 %v1927, 1.442695
    %v1930 = vpow.pop %v1929
    %v1931 = vmul.f32 %v1928, 1.442695
    %v1932 = vpow.pop %v1931
    %v1933 = vadd.f32 %v1930, 1.0
    %v1934 = vlog2.pop %v1933
    %v1935 = vmul.f32 %v1934, 0.6931472
    %v1936 = vmul.f32 -0.5, %v1930
    %v1937 = vadd.f32 %v1936, 1.0
    %v1938 = vmul.f32 %v1937, %v1930
    %v1939 = vand.u32 2147483647, %v1930
    %vm1940 = vcmp.lt.f32.partialorder %v1939, 0.0004427343
    %v1941 = vsel %vm1940, %v1938, %v1935
    %v1942 = vadd.f32 %v1932, 1.0
    %v1943 = vlog2.pop %v1942
    %v1944 = vmul.f32 %v1943, 0.6931472
    %v1945 = vmul.f32 -0.5, %v1932
    %v1946 = vadd.f32 %v1945, 1.0
    %v1947 = vmul.f32 %v1946, %v1932
    %v1948 = vand.u32 2147483647, %v1932
    %vm1949 = vcmp.lt.f32.partialorder %v1948, 0.0004427343
    %v1950 = vsel %vm1949, %v1947, %v1944
    %v1951 = vadd.f32 %v1919, %v1941
    %v1952 = vadd.f32 %v1920, %v1950
    %v1953 = vsel %vm1921, %v1923, %v1951
    %v1954 = vsel %vm1922, %v1924, %v1952
    %v1955 = vadd.f32 %v1868, %v497
    %v1956 = vadd.f32 %v1870, %v499
    %v1957 = vadd.f32 %v1872, %v501
    %v1958 = vadd.f32 %v1874, %v503
    %v1959 = vmul.f32 %v1955, 0.5
    %v1960 = vmul.f32 %v1956, 0.5
    %v1961 = vmul.f32 %v1957, 0.5
    %v1962 = vmul.f32 %v1958, 0.5
    %v1963 = vtanh.pop %v1959
    %v1964 = vtanh.pop %v1960
    %v1965 = vtanh.pop %v1961
    %v1966 = vtanh.pop %v1962
    %v1967 = vmul.f32 %v1963, 0.5
    %v1968 = vmul.f32 %v1964, 0.5
    %v1969 = vmul.f32 %v1965, 0.5
    %v1970 = vmul.f32 %v1966, 0.5
    %v1971 = vadd.f32 %v1967, 0.5
    %v1972 = vadd.f32 %v1968, 0.5
    %v1973 = vadd.f32 %v1969, 0.5
    %v1974 = vadd.f32 %v1970, 0.5
    %v1975 = vmul.f32 %v1971, %v1599
    %v1976 = vmul.f32 %v1973, %v1600
    %v1977 = vmul.f32 %v1971, %v1972
    %v1978 = vmul.f32 %v1973, %v1974
    %1981 = vrot.lane.b32.xlu0 %v1977, 64
    %v1982 = vpop.permute.xlu0 %1981
    %1983 = vrot.lane.b32.xlu0 %v1978, 64
    %v1984 = vpop.permute.xlu0 %1983
    %v1987 = vadd.f32 %v1975, %v1982
    %v1988 = vadd.f32 %v1976, %v1984
    %v1989 = vtanh.pop %v1987
    %v1990 = vtanh.pop %v1988
    %v1991 = vmul.f32 %v1972, %v1989
    %v1992 = vmul.f32 %v1974, %v1990
    %v1993 = vpack.c.bf16 %v1992, %v1991
    %v1995 = vsel %vm612, %v1993, 0
    %1997 = vmatprep.subr.bf16.mxu0 0
    %1998 = vmatpush1.bf16.msra.mxu0 %v805
    %1999 = vmatprep.subr.bf16.mxu0 0
    %2000 = vmatpush1.bf16.msra.mxu0 %v806
    %2001 = vmatprep.subr.bf16.mxu0 0
    %2002 = vmatpush1.bf16.msra.mxu0 %v807
    %2003 = vmatprep.subr.bf16.mxu0 0
    %2004 = vmatpush1.bf16.msra.mxu0 %v808
    %2005 = vmatprep.subr.bf16.mxu0 0
    %2006 = vmatpush1.bf16.msra.mxu0 0
    %2007 = vmatprep.subr.bf16.mxu0 0
    %2008 = vmatpush1.bf16.msra.mxu0 0
    %2009 = vmatprep.subr.bf16.mxu0 0
    %2010 = vmatpush1.bf16.msra.mxu0 0
    %2011 = vmatprep.subr.bf16.mxu0 0
    %2012 = vmatpush1.bf16.msra.mxu0 0
    %2013 = vmatprep.subr.bf16.mxu0 0
    %2014 = vmatpush1.bf16.msra.mxu0 0
    %2015 = vmatprep.subr.bf16.mxu0 0
    %2016 = vmatpush1.bf16.msra.mxu0 0
    %2017 = vmatprep.subr.bf16.mxu0 0
    %2018 = vmatpush1.bf16.msra.mxu0 0
    %2019 = vmatprep.subr.bf16.mxu0 0
    %2020 = vmatpush1.bf16.msra.mxu0 0
    %2021 = vmatprep.subr.bf16.mxu0 0
    %2022 = vmatpush1.bf16.msra.mxu0 0
    %2023 = vmatprep.subr.bf16.mxu0 0
    %2024 = vmatpush1.bf16.msra.mxu0 0
    %2025 = vmatprep.subr.bf16.mxu0 0
    %2026 = vmatpush1.bf16.msra.mxu0 0
    %2027 = vmatprep.subr.bf16.mxu0 0
    %2028 = vmatpush1.bf16.msra.mxu0 0
    %2029 = vmatprep.mubr.bf16.mxu0 0
    %2030 = vmatmul.mubr.bf16.gmra.mrb[0].mxu0 %v1995
    %v2031 = vpop.f32.mrb[0].mxu0
    %v2032 = vadd.f32 %v787, %v2031
    %v2033 = vpop.f32.mrb[0].mxu0
    %v2034 = vpop.f32.mrb[0].mxu0
    %v2035 = vadd.f32 %v787, %v2034
    %v2036 = vpop.f32.mrb[0].mxu0
    %2037 = vdwg.mxu0
    %v2038 = vmax.f32 %v2032, 0.0
    %v2039 = vmax.f32 %v2035, 0.0
    %vm2040 = vcmp.ne.f32.partialorder %v2032, %v2032
    %vm2041 = vcmp.ne.f32.partialorder %v2035, %v2035
    %v2042 = vadd.f32 %v2032, 0.0
    %v2043 = vadd.f32 %v2035, 0.0
    %v2044 = vand.u32 2147483647, %v2032
    %v2045 = vand.u32 2147483647, %v2035
    %v2046 = vsub.f32 0.0, %v2044
    %v2047 = vsub.f32 0.0, %v2045
    %v2048 = vmul.f32 %v2046, 1.442695
    %v2049 = vpow.pop %v2048
    %v2050 = vmul.f32 %v2047, 1.442695
    %v2051 = vpow.pop %v2050
    %v2052 = vadd.f32 %v2049, 1.0
    %v2053 = vlog2.pop %v2052
    %v2054 = vmul.f32 %v2053, 0.6931472
    %v2055 = vmul.f32 -0.5, %v2049
    %v2056 = vadd.f32 %v2055, 1.0
    %v2057 = vmul.f32 %v2056, %v2049
    %v2058 = vand.u32 2147483647, %v2049
    %vm2059 = vcmp.lt.f32.partialorder %v2058, 0.0004427343
    %v2060 = vsel %vm2059, %v2057, %v2054
    %v2061 = vadd.f32 %v2051, 1.0
    %v2062 = vlog2.pop %v2061
    %v2063 = vmul.f32 %v2062, 0.6931472
    %v2064 = vmul.f32 -0.5, %v2051
    %v2065 = vadd.f32 %v2064, 1.0
    %v2066 = vmul.f32 %v2065, %v2051
    %v2067 = vand.u32 2147483647, %v2051
    %vm2068 = vcmp.lt.f32.partialorder %v2067, 0.0004427343
    %v2069 = vsel %vm2068, %v2066, %v2063
    %v2070 = vadd.f32 %v2038, %v2060
    %v2071 = vadd.f32 %v2039, %v2069
    %v2072 = vsel %vm2040, %v2042, %v2070
    %v2073 = vsel %vm2041, %v2043, %v2071
    %2074 = vrot.lane.b32.xlu0 %v124, 64
    %v2075 = vpop.permute.xlu0 %2074
    %2076 = vrot.lane.b32.xlu0 %v126, 64
    %v2077 = vpop.permute.xlu0 %2076
    %v2080 = vmul.f32 %v2072, %v2075
    %v2081 = vmul.f32 %v2073, %v2077
    %2084 = vrot.lane.b32.xlu0 %v2080, 96
    %v2085 = vpop.permute.xlu0 %2084
    %2086 = vrot.lane.b32.xlu0 %v2081, 96
    %v2087 = vpop.permute.xlu0 %2086
    %v2090 = vadd.f32 %v2032, %v2085
    %v2091 = vadd.f32 %v2035, %v2087
    %v2092 = vpack.c.bf16 %v2091, %v2090
    %v2094 = vsel %vm934, %v2092, 0
    %2096 = vmatprep.subr.bf16.mxu0 %v927
    %2097 = vmatpush1.bf16.msra.mxu0 %v926
    %2098 = vmatprep.subr.bf16.mxu0 %v929
    %2099 = vmatpush1.bf16.msra.mxu0 %v928
    %2100 = vmatprep.subr.bf16.mxu0 0
    %2101 = vmatpush1.bf16.msra.mxu0 0
    %2102 = vmatprep.subr.bf16.mxu0 0
    %2103 = vmatpush1.bf16.msra.mxu0 0
    %2104 = vmatprep.subr.bf16.mxu0 0
    %2105 = vmatpush1.bf16.msra.mxu0 0
    %2106 = vmatprep.subr.bf16.mxu0 0
    %2107 = vmatpush1.bf16.msra.mxu0 0
    %2108 = vmatprep.subr.bf16.mxu0 0
    %2109 = vmatpush1.bf16.msra.mxu0 0
    %2110 = vmatprep.subr.bf16.mxu0 0
    %2111 = vmatpush1.bf16.msra.mxu0 0
    %2112 = vmatprep.subr.bf16.mxu0 0
    %2113 = vmatpush1.bf16.msra.mxu0 0
    %2114 = vmatprep.subr.bf16.mxu0 0
    %2115 = vmatpush1.bf16.msra.mxu0 0
    %2116 = vmatprep.subr.bf16.mxu0 0
    %2117 = vmatpush1.bf16.msra.mxu0 0
    %2118 = vmatprep.subr.bf16.mxu0 0
    %2119 = vmatpush1.bf16.msra.mxu0 0
    %2120 = vmatprep.subr.bf16.mxu0 0
    %2121 = vmatpush1.bf16.msra.mxu0 0
    %2122 = vmatprep.subr.bf16.mxu0 0
    %2123 = vmatpush1.bf16.msra.mxu0 0
    %2124 = vmatprep.subr.bf16.mxu0 0
    %2125 = vmatpush1.bf16.msra.mxu0 0
    %2126 = vmatprep.subr.bf16.mxu0 0
    %2127 = vmatpush1.bf16.msra.mxu0 0
    %2128 = vmatprep.mubr.bf16.mxu0 0
    %2129 = vmatmul.mubr.bf16.gmra.mrb[0].mxu0 %v2094
    %v2130 = vpop.f32.mrb[0].mxu0
    %v2131 = vadd.f32 %v540, %v2130
    %v2132 = vpop.f32.mrb[0].mxu0
    %v2133 = vadd.f32 %v542, %v2132
    %v2134 = vpop.f32.mrb[0].mxu0
    %v2135 = vadd.f32 %v544, %v2134
    %v2136 = vpop.f32.mrb[0].mxu0
    %v2137 = vadd.f32 %v546, %v2136
    %2138 = vdwg.mxu0
    %v2139 = vmul.f32 %v2131, 0.5
    %v2140 = vmul.f32 %v2133, 0.5
    %v2141 = vmul.f32 %v2135, 0.5
    %v2142 = vmul.f32 %v2137, 0.5
    %v2143 = vtanh.pop %v2139
    %v2144 = vtanh.pop %v2140
    %v2145 = vtanh.pop %v2141
    %v2146 = vtanh.pop %v2142
    %v2147 = vmul.f32 %v2143, 0.5
    %v2148 = vmul.f32 %v2144, 0.5
    %v2149 = vmul.f32 %v2145, 0.5
    %v2150 = vmul.f32 %v2146, 0.5
    %v2151 = vadd.f32 %v2147, 0.5
    %v2152 = vadd.f32 %v2148, 0.5
    %v2153 = vadd.f32 %v2149, 0.5
    %v2154 = vadd.f32 %v2150, 0.5
    %v2155 = vmul.f32 %v2151, %v1779
    %v2156 = vmul.f32 %v2153, %v1780
    %v2157 = vmul.f32 %v2151, %v2152
    %v2158 = vmul.f32 %v2153, %v2154
    %2161 = vrot.lane.b32.xlu0 %v2157, 64
    %v2162 = vpop.permute.xlu0 %2161
    %2163 = vrot.lane.b32.xlu0 %v2158, 64
    %v2164 = vpop.permute.xlu0 %2163
    %v2167 = vadd.f32 %v2155, %v2162
    %v2168 = vadd.f32 %v2156, %v2164
    %v2169 = vtanh.pop %v2167
    %v2170 = vtanh.pop %v2168
    %v2171 = vmul.f32 %v2152, %v2169
    %v2172 = vmul.f32 %v2154, %v2170
    %v2173 = vadd.f32 %v1785, %v2171
    %v2174 = vadd.f32 %v1786, %v2172
    %v2175 = vrcp.pop %v1953
    %v2176 = vrcp.pop %v1954
    %v2177 = vmul.f32 %v2072, %v2175
    %v2178 = vmul.f32 %v2073, %v2176
    %v2179 = vmul.f32 %v2177, %v2177
    %v2180 = vmul.f32 %v2178, %v2178
    %v2181 = vsub.f32 %v2032, %v1917
    %v2182 = vsub.f32 %v2035, %v1918
    %2185 = vrot.lane.b32.xlu0 %v2175, 96
    %v2186 = vpop.permute.xlu0 %2185
    %2187 = vrot.lane.b32.xlu0 %v2176, 96
    %v2188 = vpop.permute.xlu0 %2187
    %v2191 = vmul.f32 %v2181, %v2186
    %v2192 = vmul.f32 %v2182, %v2188
    %v2193 = vmul.f32 %v2191, %v2191
    %v2194 = vmul.f32 %v2192, %v2192
    %2197 = vrot.lane.b32.xlu0 %v2193, 32
    %v2198 = vpop.permute.xlu0 %2197
    %2199 = vrot.lane.b32.xlu0 %v2194, 32
    %v2200 = vpop.permute.xlu0 %2199
    %v2203 = vadd.f32 %v2179, %v2198
    %v2204 = vadd.f32 %v2180, %v2200
    %v2205 = vsub.f32 %v2203, 1.0
    %v2206 = vsub.f32 %v2204, 1.0
    %v2207 = vlog2.pop %v2179
    %v2208 = vmul.f32 %v2207, 0.6931472
    %v2209 = vlog2.pop %v2180
    %v2210 = vmul.f32 %v2209, 0.6931472
    %v2211 = vsub.f32 %v2205, %v2208
    %v2212 = vsub.f32 %v2206, %v2210
    %v2213 = vmul.f32 %v2211, 0.5
    %v2214 = vmul.f32 %v2212, 0.5
    %v2215 = vadd.f32 %v1827, %v2213
    %v2216 = vadd.f32 %v1828, %v2214
    %v2217 = vpack.c.bf16 %v2172, %v2171
    %v2219 = vsel %vm612, %v2217, 0
    %2221 = vmatprep.subr.bf16.mxu0 %v589
    %2222 = vmatpush1.bf16.msra.mxu0 %v588
    %2223 = vmatprep.subr.bf16.mxu0 %v592
    %2224 = vmatpush1.bf16.msra.mxu0 %v591
    %2225 = vmatprep.subr.bf16.mxu0 %v595
    %2226 = vmatpush1.bf16.msra.mxu0 %v594
    %2227 = vmatprep.subr.bf16.mxu0 %v598
    %2228 = vmatpush1.bf16.msra.mxu0 %v597
    %2229 = vmatprep.subr.bf16.mxu0 0
    %2230 = vmatpush1.bf16.msra.mxu0 0
    %2231 = vmatprep.subr.bf16.mxu0 0
    %2232 = vmatpush1.bf16.msra.mxu0 0
    %2233 = vmatprep.subr.bf16.mxu0 0
    %2234 = vmatpush1.bf16.msra.mxu0 0
    %2235 = vmatprep.subr.bf16.mxu0 0
    %2236 = vmatpush1.bf16.msra.mxu0 0
    %2237 = vmatprep.subr.bf16.mxu0 0
    %2238 = vmatpush1.bf16.msra.mxu0 0
    %2239 = vmatprep.subr.bf16.mxu0 0
    %2240 = vmatpush1.bf16.msra.mxu0 0
    %2241 = vmatprep.subr.bf16.mxu0 0
    %2242 = vmatpush1.bf16.msra.mxu0 0
    %2243 = vmatprep.subr.bf16.mxu0 0
    %2244 = vmatpush1.bf16.msra.mxu0 0
    %2245 = vmatprep.subr.bf16.mxu0 0
    %2246 = vmatpush1.bf16.msra.mxu0 0
    %2247 = vmatprep.subr.bf16.mxu0 0
    %2248 = vmatpush1.bf16.msra.mxu0 0
    %2249 = vmatprep.subr.bf16.mxu0 0
    %2250 = vmatpush1.bf16.msra.mxu0 0
    %2251 = vmatprep.subr.bf16.mxu0 0
    %2252 = vmatpush1.bf16.msra.mxu0 0
    %2253 = vmatprep.mubr.bf16.mxu0 0
    %2254 = vmatmul.mubr.bf16.gmra.mrb[0].mxu0 %v2219
    %v2255 = vpop.f32.mrb[0].mxu0
    %v2256 = vadd.f32 0.0, %v2255
    %v2257 = vpop.f32.mrb[0].mxu0
    %v2258 = vadd.f32 0.0, %v2257
    %v2259 = vpop.f32.mrb[0].mxu0
    %v2260 = vadd.f32 0.0, %v2259
    %v2261 = vpop.f32.mrb[0].mxu0
    %v2262 = vadd.f32 0.0, %v2261
    %2263 = vdwg.mxu0
    %2264 = vmatprep.subr.bf16.mxu0 0
    %2265 = vmatpush1.bf16.msra.mxu0 %v590
    %2266 = vmatprep.subr.bf16.mxu0 0
    %2267 = vmatpush1.bf16.msra.mxu0 %v593
    %2268 = vmatprep.subr.bf16.mxu0 0
    %2269 = vmatpush1.bf16.msra.mxu0 %v596
    %2270 = vmatprep.subr.bf16.mxu0 0
    %2271 = vmatpush1.bf16.msra.mxu0 %v599
    %2272 = vmatprep.subr.bf16.mxu0 0
    %2273 = vmatpush1.bf16.msra.mxu0 0
    %2274 = vmatprep.subr.bf16.mxu0 0
    %2275 = vmatpush1.bf16.msra.mxu0 0
    %2276 = vmatprep.subr.bf16.mxu0 0
    %2277 = vmatpush1.bf16.msra.mxu0 0
    %2278 = vmatprep.subr.bf16.mxu0 0
    %2279 = vmatpush1.bf16.msra.mxu0 0
    %2280 = vmatprep.subr.bf16.mxu0 0
    %2281 = vmatpush1.bf16.msra.mxu0 0
    %2282 = vmatprep.subr.bf16.mxu0 0
    %2283 = vmatpush1.bf16.msra.mxu0 0
    %2284 = vmatprep.subr.bf16.mxu0 0
    %2285 = vmatpush1.bf16.msra.mxu0 0
    %2286 = vmatprep.subr.bf16.mxu0 0
    %2287 = vmatpush1.bf16.msra.mxu0 0
    %2288 = vmatprep.subr.bf16.mxu0 0
    %2289 = vmatpush1.bf16.msra.mxu0 0
    %2290 = vmatprep.subr.bf16.mxu0 0
    %2291 = vmatpush1.bf16.msra.mxu0 0
    %2292 = vmatprep.subr.bf16.mxu0 0
    %2293 = vmatpush1.bf16.msra.mxu0 0
    %2294 = vmatprep.subr.bf16.mxu0 0
    %2295 = vmatpush1.bf16.msra.mxu0 0
    %2296 = vmatprep.mubr.bf16.mxu0 0
    %2297 = vmatmul.mubr.bf16.gmra.mrb[0].mxu0 %v2219
    %v2298 = vpop.f32.mrb[0].mxu0
    %v2299 = vadd.f32 0.0, %v2298
    %v2300 = vpop.f32.mrb[0].mxu0
    %v2301 = vpop.f32.mrb[0].mxu0
    %v2302 = vadd.f32 0.0, %v2301
    %v2303 = vpop.f32.mrb[0].mxu0
    %2304 = vdwg.mxu0
    %v2305 = vadd.f32 %v2299, %v704
    %v2306 = vadd.f32 %v2302, %v704
    %v2307 = vmax.f32 %v2305, 0.0
    %v2308 = vmax.f32 %v2306, 0.0
    %vm2309 = vcmp.ne.f32.partialorder %v2305, %v2305
    %vm2310 = vcmp.ne.f32.partialorder %v2306, %v2306
    %v2311 = vadd.f32 %v2305, 0.0
    %v2312 = vadd.f32 %v2306, 0.0
    %v2313 = vand.u32 2147483647, %v2305
    %v2314 = vand.u32 2147483647, %v2306
    %v2315 = vsub.f32 0.0, %v2313
    %v2316 = vsub.f32 0.0, %v2314
    %v2317 = vmul.f32 %v2315, 1.442695
    %v2318 = vpow.pop %v2317
    %v2319 = vmul.f32 %v2316, 1.442695
    %v2320 = vpow.pop %v2319
    %v2321 = vadd.f32 %v2318, 1.0
    %v2322 = vlog2.pop %v2321
    %v2323 = vmul.f32 %v2322, 0.6931472
    %v2324 = vmul.f32 -0.5, %v2318
    %v2325 = vadd.f32 %v2324, 1.0
    %v2326 = vmul.f32 %v2325, %v2318
    %v2327 = vand.u32 2147483647, %v2318
    %vm2328 = vcmp.lt.f32.partialorder %v2327, 0.0004427343
    %v2329 = vsel %vm2328, %v2326, %v2323
    %v2330 = vadd.f32 %v2320, 1.0
    %v2331 = vlog2.pop %v2330
    %v2332 = vmul.f32 %v2331, 0.6931472
    %v2333 = vmul.f32 -0.5, %v2320
    %v2334 = vadd.f32 %v2333, 1.0
    %v2335 = vmul.f32 %v2334, %v2320
    %v2336 = vand.u32 2147483647, %v2320
    %vm2337 = vcmp.lt.f32.partialorder %v2336, 0.0004427343
    %v2338 = vsel %vm2337, %v2335, %v2332
    %v2339 = vadd.f32 %v2307, %v2329
    %v2340 = vadd.f32 %v2308, %v2338
    %v2341 = vsel %vm2309, %v2311, %v2339
    %v2342 = vsel %vm2310, %v2312, %v2340
    %v2343 = vadd.f32 %v2256, %v497
    %v2344 = vadd.f32 %v2258, %v499
    %v2345 = vadd.f32 %v2260, %v501
    %v2346 = vadd.f32 %v2262, %v503
    %v2347 = vmul.f32 %v2343, 0.5
    %v2348 = vmul.f32 %v2344, 0.5
    %v2349 = vmul.f32 %v2345, 0.5
    %v2350 = vmul.f32 %v2346, 0.5
    %v2351 = vtanh.pop %v2347
    %v2352 = vtanh.pop %v2348
    %v2353 = vtanh.pop %v2349
    %v2354 = vtanh.pop %v2350
    %v2355 = vmul.f32 %v2351, 0.5
    %v2356 = vmul.f32 %v2352, 0.5
    %v2357 = vmul.f32 %v2353, 0.5
    %v2358 = vmul.f32 %v2354, 0.5
    %v2359 = vadd.f32 %v2355, 0.5
    %v2360 = vadd.f32 %v2356, 0.5
    %v2361 = vadd.f32 %v2357, 0.5
    %v2362 = vadd.f32 %v2358, 0.5
    %v2363 = vmul.f32 %v2359, %v1987
    %v2364 = vmul.f32 %v2361, %v1988
    %v2365 = vmul.f32 %v2359, %v2360
    %v2366 = vmul.f32 %v2361, %v2362
    %2369 = vrot.lane.b32.xlu0 %v2365, 64
    %v2370 = vpop.permute.xlu0 %2369
    %2371 = vrot.lane.b32.xlu0 %v2366, 64
    %v2372 = vpop.permute.xlu0 %2371
    %v2375 = vadd.f32 %v2363, %v2370
    %v2376 = vadd.f32 %v2364, %v2372
    %v2377 = vtanh.pop %v2375
    %v2378 = vtanh.pop %v2376
    %v2379 = vmul.f32 %v2360, %v2377
    %v2380 = vmul.f32 %v2362, %v2378
    %v2381 = vpack.c.bf16 %v2380, %v2379
    %v2383 = vsel %vm612, %v2381, 0
    %2385 = vmatprep.subr.bf16.mxu0 0
    %2386 = vmatpush1.bf16.msra.mxu0 %v805
    %2387 = vmatprep.subr.bf16.mxu0 0
    %2388 = vmatpush1.bf16.msra.mxu0 %v806
    %2389 = vmatprep.subr.bf16.mxu0 0
    %2390 = vmatpush1.bf16.msra.mxu0 %v807
    %2391 = vmatprep.subr.bf16.mxu0 0
    %2392 = vmatpush1.bf16.msra.mxu0 %v808
    %2393 = vmatprep.subr.bf16.mxu0 0
    %2394 = vmatpush1.bf16.msra.mxu0 0
    %2395 = vmatprep.subr.bf16.mxu0 0
    %2396 = vmatpush1.bf16.msra.mxu0 0
    %2397 = vmatprep.subr.bf16.mxu0 0
    %2398 = vmatpush1.bf16.msra.mxu0 0
    %2399 = vmatprep.subr.bf16.mxu0 0
    %2400 = vmatpush1.bf16.msra.mxu0 0
    %2401 = vmatprep.subr.bf16.mxu0 0
    %2402 = vmatpush1.bf16.msra.mxu0 0
    %2403 = vmatprep.subr.bf16.mxu0 0
    %2404 = vmatpush1.bf16.msra.mxu0 0
    %2405 = vmatprep.subr.bf16.mxu0 0
    %2406 = vmatpush1.bf16.msra.mxu0 0
    %2407 = vmatprep.subr.bf16.mxu0 0
    %2408 = vmatpush1.bf16.msra.mxu0 0
    %2409 = vmatprep.subr.bf16.mxu0 0
    %2410 = vmatpush1.bf16.msra.mxu0 0
    %2411 = vmatprep.subr.bf16.mxu0 0
    %2412 = vmatpush1.bf16.msra.mxu0 0
    %2413 = vmatprep.subr.bf16.mxu0 0
    %2414 = vmatpush1.bf16.msra.mxu0 0
    %2415 = vmatprep.subr.bf16.mxu0 0
    %2416 = vmatpush1.bf16.msra.mxu0 0
    %2417 = vmatprep.mubr.bf16.mxu0 0
    %2418 = vmatmul.mubr.bf16.gmra.mrb[0].mxu0 %v2383
    %v2419 = vpop.f32.mrb[0].mxu0
    %v2420 = vadd.f32 %v787, %v2419
    %v2421 = vpop.f32.mrb[0].mxu0
    %v2422 = vpop.f32.mrb[0].mxu0
    %v2423 = vadd.f32 %v787, %v2422
    %v2424 = vpop.f32.mrb[0].mxu0
    %2425 = vdwg.mxu0
    %v2426 = vmax.f32 %v2420, 0.0
    %v2427 = vmax.f32 %v2423, 0.0
    %vm2428 = vcmp.ne.f32.partialorder %v2420, %v2420
    %vm2429 = vcmp.ne.f32.partialorder %v2423, %v2423
    %v2430 = vadd.f32 %v2420, 0.0
    %v2431 = vadd.f32 %v2423, 0.0
    %v2432 = vand.u32 2147483647, %v2420
    %v2433 = vand.u32 2147483647, %v2423
    %v2434 = vsub.f32 0.0, %v2432
    %v2435 = vsub.f32 0.0, %v2433
    %v2436 = vmul.f32 %v2434, 1.442695
    %v2437 = vpow.pop %v2436
    %v2438 = vmul.f32 %v2435, 1.442695
    %v2439 = vpow.pop %v2438
    %v2440 = vadd.f32 %v2437, 1.0
    %v2441 = vlog2.pop %v2440
    %v2442 = vmul.f32 %v2441, 0.6931472
    %v2443 = vmul.f32 -0.5, %v2437
    %v2444 = vadd.f32 %v2443, 1.0
    %v2445 = vmul.f32 %v2444, %v2437
    %v2446 = vand.u32 2147483647, %v2437
    %vm2447 = vcmp.lt.f32.partialorder %v2446, 0.0004427343
    %v2448 = vsel %vm2447, %v2445, %v2442
    %v2449 = vadd.f32 %v2439, 1.0
    %v2450 = vlog2.pop %v2449
    %v2451 = vmul.f32 %v2450, 0.6931472
    %v2452 = vmul.f32 -0.5, %v2439
    %v2453 = vadd.f32 %v2452, 1.0
    %v2454 = vmul.f32 %v2453, %v2439
    %v2455 = vand.u32 2147483647, %v2439
    %vm2456 = vcmp.lt.f32.partialorder %v2455, 0.0004427343
    %v2457 = vsel %vm2456, %v2454, %v2451
    %v2458 = vadd.f32 %v2426, %v2448
    %v2459 = vadd.f32 %v2427, %v2457
    %v2460 = vsel %vm2428, %v2430, %v2458
    %v2461 = vsel %vm2429, %v2431, %v2459
    %2464 = vrot.lane.b32.xlu0 %v125, 32
    %v2465 = vpop.permute.xlu0 %2464
    %2466 = vrot.lane.b32.xlu0 %v127, 32
    %v2467 = vpop.permute.xlu0 %2466
    %v2470 = vmul.f32 %v2460, %v2465
    %v2471 = vmul.f32 %v2461, %v2467
    %2474 = vrot.lane.b32.xlu0 %v2470, 96
    %v2475 = vpop.permute.xlu0 %2474
    %2476 = vrot.lane.b32.xlu0 %v2471, 96
    %v2477 = vpop.permute.xlu0 %2476
    %v2480 = vadd.f32 %v2420, %v2475
    %v2481 = vadd.f32 %v2423, %v2477
    %v2482 = vpack.c.bf16 %v2481, %v2480
    %v2484 = vsel %vm934, %v2482, 0
    %2486 = vmatprep.subr.bf16.mxu0 %v927
    %2487 = vmatpush1.bf16.msra.mxu0 %v926
    %2488 = vmatprep.subr.bf16.mxu0 %v929
    %2489 = vmatpush1.bf16.msra.mxu0 %v928
    %2490 = vmatprep.subr.bf16.mxu0 0
    %2491 = vmatpush1.bf16.msra.mxu0 0
    %2492 = vmatprep.subr.bf16.mxu0 0
    %2493 = vmatpush1.bf16.msra.mxu0 0
    %2494 = vmatprep.subr.bf16.mxu0 0
    %2495 = vmatpush1.bf16.msra.mxu0 0
    %2496 = vmatprep.subr.bf16.mxu0 0
    %2497 = vmatpush1.bf16.msra.mxu0 0
    %2498 = vmatprep.subr.bf16.mxu0 0
    %2499 = vmatpush1.bf16.msra.mxu0 0
    %2500 = vmatprep.subr.bf16.mxu0 0
    %2501 = vmatpush1.bf16.msra.mxu0 0
    %2502 = vmatprep.subr.bf16.mxu0 0
    %2503 = vmatpush1.bf16.msra.mxu0 0
    %2504 = vmatprep.subr.bf16.mxu0 0
    %2505 = vmatpush1.bf16.msra.mxu0 0
    %2506 = vmatprep.subr.bf16.mxu0 0
    %2507 = vmatpush1.bf16.msra.mxu0 0
    %2508 = vmatprep.subr.bf16.mxu0 0
    %2509 = vmatpush1.bf16.msra.mxu0 0
    %2510 = vmatprep.subr.bf16.mxu0 0
    %2511 = vmatpush1.bf16.msra.mxu0 0
    %2512 = vmatprep.subr.bf16.mxu0 0
    %2513 = vmatpush1.bf16.msra.mxu0 0
    %2514 = vmatprep.subr.bf16.mxu0 0
    %2515 = vmatpush1.bf16.msra.mxu0 0
    %2516 = vmatprep.subr.bf16.mxu0 0
    %2517 = vmatpush1.bf16.msra.mxu0 0
    %2518 = vmatprep.mubr.bf16.mxu0 0
    %2519 = vmatmul.mubr.bf16.gmra.mrb[0].mxu0 %v2484
    %v2520 = vpop.f32.mrb[0].mxu0
    %v2521 = vadd.f32 %v540, %v2520
    %v2522 = vpop.f32.mrb[0].mxu0
    %v2523 = vadd.f32 %v542, %v2522
    %v2524 = vpop.f32.mrb[0].mxu0
    %v2525 = vadd.f32 %v544, %v2524
    %v2526 = vpop.f32.mrb[0].mxu0
    %v2527 = vadd.f32 %v546, %v2526
    %2528 = vdwg.mxu0
    %v2529 = vmul.f32 %v2521, 0.5
    %v2530 = vmul.f32 %v2523, 0.5
    %v2531 = vmul.f32 %v2525, 0.5
    %v2532 = vmul.f32 %v2527, 0.5
    %v2533 = vtanh.pop %v2529
    %v2534 = vtanh.pop %v2530
    %v2535 = vtanh.pop %v2531
    %v2536 = vtanh.pop %v2532
    %v2537 = vmul.f32 %v2533, 0.5
    %v2538 = vmul.f32 %v2534, 0.5
    %v2539 = vmul.f32 %v2535, 0.5
    %v2540 = vmul.f32 %v2536, 0.5
    %v2541 = vadd.f32 %v2537, 0.5
    %v2542 = vadd.f32 %v2538, 0.5
    %v2543 = vadd.f32 %v2539, 0.5
    %v2544 = vadd.f32 %v2540, 0.5
    %v2545 = vmul.f32 %v2541, %v2167
    %v2546 = vmul.f32 %v2543, %v2168
    %v2547 = vmul.f32 %v2541, %v2542
    %v2548 = vmul.f32 %v2543, %v2544
    %2551 = vrot.lane.b32.xlu0 %v2547, 64
    %v2552 = vpop.permute.xlu0 %2551
    %2553 = vrot.lane.b32.xlu0 %v2548, 64
    %v2554 = vpop.permute.xlu0 %2553
    %v2557 = vadd.f32 %v2545, %v2552
    %v2558 = vadd.f32 %v2546, %v2554
    %v2559 = vtanh.pop %v2557
    %v2560 = vtanh.pop %v2558
    %v2561 = vmul.f32 %v2542, %v2559
    %v2562 = vmul.f32 %v2544, %v2560
    %v2563 = vadd.f32 %v2173, %v2561
    %v2564 = vadd.f32 %v2174, %v2562
    %v2565 = vrcp.pop %v2341
    %v2566 = vrcp.pop %v2342
    %v2567 = vmul.f32 %v2460, %v2565
    %v2568 = vmul.f32 %v2461, %v2566
    %v2569 = vmul.f32 %v2567, %v2567
    %v2570 = vmul.f32 %v2568, %v2568
    %v2571 = vsub.f32 %v2420, %v2305
    %v2572 = vsub.f32 %v2423, %v2306
    %2575 = vrot.lane.b32.xlu0 %v2565, 96
    %v2576 = vpop.permute.xlu0 %2575
    %2577 = vrot.lane.b32.xlu0 %v2566, 96
    %v2578 = vpop.permute.xlu0 %2577
    %v2581 = vmul.f32 %v2571, %v2576
    %v2582 = vmul.f32 %v2572, %v2578
    %v2583 = vmul.f32 %v2581, %v2581
    %v2584 = vmul.f32 %v2582, %v2582
    %2587 = vrot.lane.b32.xlu0 %v2583, 32
    %v2588 = vpop.permute.xlu0 %2587
    %2589 = vrot.lane.b32.xlu0 %v2584, 32
    %v2590 = vpop.permute.xlu0 %2589
    %v2593 = vadd.f32 %v2569, %v2588
    %v2594 = vadd.f32 %v2570, %v2590
    %v2595 = vsub.f32 %v2593, 1.0
    %v2596 = vsub.f32 %v2594, 1.0
    %v2597 = vlog2.pop %v2569
    %v2598 = vmul.f32 %v2597, 0.6931472
    %v2599 = vlog2.pop %v2570
    %v2600 = vmul.f32 %v2599, 0.6931472
    %v2601 = vsub.f32 %v2595, %v2598
    %v2602 = vsub.f32 %v2596, %v2600
    %v2603 = vmul.f32 %v2601, 0.5
    %v2604 = vmul.f32 %v2602, 0.5
    %v2605 = vadd.f32 %v2215, %v2603
    %v2606 = vadd.f32 %v2216, %v2604
    %v2607 = vpack.c.bf16 %v2562, %v2561
    %v2609 = vsel %vm612, %v2607, 0
    %2611 = vmatprep.subr.bf16.mxu0 %v589
    %2612 = vmatpush1.bf16.msra.mxu0 %v588
    %2613 = vmatprep.subr.bf16.mxu0 %v592
    %2614 = vmatpush1.bf16.msra.mxu0 %v591
    %2615 = vmatprep.subr.bf16.mxu0 %v595
    %2616 = vmatpush1.bf16.msra.mxu0 %v594
    %2617 = vmatprep.subr.bf16.mxu0 %v598
    %2618 = vmatpush1.bf16.msra.mxu0 %v597
    %2619 = vmatprep.subr.bf16.mxu0 0
    %2620 = vmatpush1.bf16.msra.mxu0 0
    %2621 = vmatprep.subr.bf16.mxu0 0
    %2622 = vmatpush1.bf16.msra.mxu0 0
    %2623 = vmatprep.subr.bf16.mxu0 0
    %2624 = vmatpush1.bf16.msra.mxu0 0
    %2625 = vmatprep.subr.bf16.mxu0 0
    %2626 = vmatpush1.bf16.msra.mxu0 0
    %2627 = vmatprep.subr.bf16.mxu0 0
    %2628 = vmatpush1.bf16.msra.mxu0 0
    %2629 = vmatprep.subr.bf16.mxu0 0
    %2630 = vmatpush1.bf16.msra.mxu0 0
    %2631 = vmatprep.subr.bf16.mxu0 0
    %2632 = vmatpush1.bf16.msra.mxu0 0
    %2633 = vmatprep.subr.bf16.mxu0 0
    %2634 = vmatpush1.bf16.msra.mxu0 0
    %2635 = vmatprep.subr.bf16.mxu0 0
    %2636 = vmatpush1.bf16.msra.mxu0 0
    %2637 = vmatprep.subr.bf16.mxu0 0
    %2638 = vmatpush1.bf16.msra.mxu0 0
    %2639 = vmatprep.subr.bf16.mxu0 0
    %2640 = vmatpush1.bf16.msra.mxu0 0
    %2641 = vmatprep.subr.bf16.mxu0 0
    %2642 = vmatpush1.bf16.msra.mxu0 0
    %2643 = vmatprep.mubr.bf16.mxu0 0
    %2644 = vmatmul.mubr.bf16.gmra.mrb[0].mxu0 %v2609
    %v2645 = vpop.f32.mrb[0].mxu0
    %v2646 = vadd.f32 0.0, %v2645
    %v2647 = vpop.f32.mrb[0].mxu0
    %v2648 = vadd.f32 0.0, %v2647
    %v2649 = vpop.f32.mrb[0].mxu0
    %v2650 = vadd.f32 0.0, %v2649
    %v2651 = vpop.f32.mrb[0].mxu0
    %v2652 = vadd.f32 0.0, %v2651
    %2653 = vdwg.mxu0
    %2654 = vmatprep.subr.bf16.mxu0 0
    %2655 = vmatpush1.bf16.msra.mxu0 %v590
    %2656 = vmatprep.subr.bf16.mxu0 0
    %2657 = vmatpush1.bf16.msra.mxu0 %v593
    %2658 = vmatprep.subr.bf16.mxu0 0
    %2659 = vmatpush1.bf16.msra.mxu0 %v596
    %2660 = vmatprep.subr.bf16.mxu0 0
    %2661 = vmatpush1.bf16.msra.mxu0 %v599
    %2662 = vmatprep.subr.bf16.mxu0 0
    %2663 = vmatpush1.bf16.msra.mxu0 0
    %2664 = vmatprep.subr.bf16.mxu0 0
    %2665 = vmatpush1.bf16.msra.mxu0 0
    %2666 = vmatprep.subr.bf16.mxu0 0
    %2667 = vmatpush1.bf16.msra.mxu0 0
    %2668 = vmatprep.subr.bf16.mxu0 0
    %2669 = vmatpush1.bf16.msra.mxu0 0
    %2670 = vmatprep.subr.bf16.mxu0 0
    %2671 = vmatpush1.bf16.msra.mxu0 0
    %2672 = vmatprep.subr.bf16.mxu0 0
    %2673 = vmatpush1.bf16.msra.mxu0 0
    %2674 = vmatprep.subr.bf16.mxu0 0
    %2675 = vmatpush1.bf16.msra.mxu0 0
    %2676 = vmatprep.subr.bf16.mxu0 0
    %2677 = vmatpush1.bf16.msra.mxu0 0
    %2678 = vmatprep.subr.bf16.mxu0 0
    %2679 = vmatpush1.bf16.msra.mxu0 0
    %2680 = vmatprep.subr.bf16.mxu0 0
    %2681 = vmatpush1.bf16.msra.mxu0 0
    %2682 = vmatprep.subr.bf16.mxu0 0
    %2683 = vmatpush1.bf16.msra.mxu0 0
    %2684 = vmatprep.subr.bf16.mxu0 0
    %2685 = vmatpush1.bf16.msra.mxu0 0
    %2686 = vmatprep.mubr.bf16.mxu0 0
    %2687 = vmatmul.mubr.bf16.gmra.mrb[0].mxu0 %v2609
    %v2688 = vpop.f32.mrb[0].mxu0
    %v2689 = vadd.f32 0.0, %v2688
    %v2690 = vpop.f32.mrb[0].mxu0
    %v2691 = vpop.f32.mrb[0].mxu0
    %v2692 = vadd.f32 0.0, %v2691
    %v2693 = vpop.f32.mrb[0].mxu0
    %2694 = vdwg.mxu0
    %v2695 = vadd.f32 %v2689, %v704
    %v2696 = vadd.f32 %v2692, %v704
    %v2697 = vmax.f32 %v2695, 0.0
    %v2698 = vmax.f32 %v2696, 0.0
    %vm2699 = vcmp.ne.f32.partialorder %v2695, %v2695
    %vm2700 = vcmp.ne.f32.partialorder %v2696, %v2696
    %v2701 = vadd.f32 %v2695, 0.0
    %v2702 = vadd.f32 %v2696, 0.0
    %v2703 = vand.u32 2147483647, %v2695
    %v2704 = vand.u32 2147483647, %v2696
    %v2705 = vsub.f32 0.0, %v2703
    %v2706 = vsub.f32 0.0, %v2704
    %v2707 = vmul.f32 %v2705, 1.442695
    %v2708 = vpow.pop %v2707
    %v2709 = vmul.f32 %v2706, 1.442695
    %v2710 = vpow.pop %v2709
    %v2711 = vadd.f32 %v2708, 1.0
    %v2712 = vlog2.pop %v2711
    %v2713 = vmul.f32 %v2712, 0.6931472
    %v2714 = vmul.f32 -0.5, %v2708
    %v2715 = vadd.f32 %v2714, 1.0
    %v2716 = vmul.f32 %v2715, %v2708
    %v2717 = vand.u32 2147483647, %v2708
    %vm2718 = vcmp.lt.f32.partialorder %v2717, 0.0004427343
    %v2719 = vsel %vm2718, %v2716, %v2713
    %v2720 = vadd.f32 %v2710, 1.0
    %v2721 = vlog2.pop %v2720
    %v2722 = vmul.f32 %v2721, 0.6931472
    %v2723 = vmul.f32 -0.5, %v2710
    %v2724 = vadd.f32 %v2723, 1.0
    %v2725 = vmul.f32 %v2724, %v2710
    %v2726 = vand.u32 2147483647, %v2710
    %vm2727 = vcmp.lt.f32.partialorder %v2726, 0.0004427343
    %v2728 = vsel %vm2727, %v2725, %v2722
    %v2729 = vadd.f32 %v2697, %v2719
    %v2730 = vadd.f32 %v2698, %v2728
    %v2731 = vsel %vm2699, %v2701, %v2729
    %v2732 = vsel %vm2700, %v2702, %v2730
    %v2733 = vadd.f32 %v2646, %v497
    %v2734 = vadd.f32 %v2648, %v499
    %v2735 = vadd.f32 %v2650, %v501
    %v2736 = vadd.f32 %v2652, %v503
    %v2737 = vmul.f32 %v2733, 0.5
    %v2738 = vmul.f32 %v2734, 0.5
    %v2739 = vmul.f32 %v2735, 0.5
    %v2740 = vmul.f32 %v2736, 0.5
    %v2741 = vtanh.pop %v2737
    %v2742 = vtanh.pop %v2738
    %v2743 = vtanh.pop %v2739
    %v2744 = vtanh.pop %v2740
    %v2745 = vmul.f32 %v2741, 0.5
    %v2746 = vmul.f32 %v2742, 0.5
    %v2747 = vmul.f32 %v2743, 0.5
    %v2748 = vmul.f32 %v2744, 0.5
    %v2749 = vadd.f32 %v2745, 0.5
    %v2750 = vadd.f32 %v2746, 0.5
    %v2751 = vadd.f32 %v2747, 0.5
    %v2752 = vadd.f32 %v2748, 0.5
    %v2753 = vmul.f32 %v2749, %v2375
    %v2754 = vmul.f32 %v2751, %v2376
    %v2755 = vmul.f32 %v2749, %v2750
    %v2756 = vmul.f32 %v2751, %v2752
    %2759 = vrot.lane.b32.xlu0 %v2755, 64
    %v2760 = vpop.permute.xlu0 %2759
    %2761 = vrot.lane.b32.xlu0 %v2756, 64
    %v2762 = vpop.permute.xlu0 %2761
    %v2765 = vadd.f32 %v2753, %v2760
    %v2766 = vadd.f32 %v2754, %v2762
    %v2767 = vtanh.pop %v2765
    %v2768 = vtanh.pop %v2766
    %v2769 = vmul.f32 %v2750, %v2767
    %v2770 = vmul.f32 %v2752, %v2768
    %v2771 = vpack.c.bf16 %v2770, %v2769
    %v2773 = vsel %vm612, %v2771, 0
    %2775 = vmatprep.subr.bf16.mxu0 0
    %2776 = vmatpush1.bf16.msra.mxu0 %v805
    %2777 = vmatprep.subr.bf16.mxu0 0
    %2778 = vmatpush1.bf16.msra.mxu0 %v806
    %2779 = vmatprep.subr.bf16.mxu0 0
    %2780 = vmatpush1.bf16.msra.mxu0 %v807
    %2781 = vmatprep.subr.bf16.mxu0 0
    %2782 = vmatpush1.bf16.msra.mxu0 %v808
    %2783 = vmatprep.subr.bf16.mxu0 0
    %2784 = vmatpush1.bf16.msra.mxu0 0
    %2785 = vmatprep.subr.bf16.mxu0 0
    %2786 = vmatpush1.bf16.msra.mxu0 0
    %2787 = vmatprep.subr.bf16.mxu0 0
    %2788 = vmatpush1.bf16.msra.mxu0 0
    %2789 = vmatprep.subr.bf16.mxu0 0
    %2790 = vmatpush1.bf16.msra.mxu0 0
    %2791 = vmatprep.subr.bf16.mxu0 0
    %2792 = vmatpush1.bf16.msra.mxu0 0
    %2793 = vmatprep.subr.bf16.mxu0 0
    %2794 = vmatpush1.bf16.msra.mxu0 0
    %2795 = vmatprep.subr.bf16.mxu0 0
    %2796 = vmatpush1.bf16.msra.mxu0 0
    %2797 = vmatprep.subr.bf16.mxu0 0
    %2798 = vmatpush1.bf16.msra.mxu0 0
    %2799 = vmatprep.subr.bf16.mxu0 0
    %2800 = vmatpush1.bf16.msra.mxu0 0
    %2801 = vmatprep.subr.bf16.mxu0 0
    %2802 = vmatpush1.bf16.msra.mxu0 0
    %2803 = vmatprep.subr.bf16.mxu0 0
    %2804 = vmatpush1.bf16.msra.mxu0 0
    %2805 = vmatprep.subr.bf16.mxu0 0
    %2806 = vmatpush1.bf16.msra.mxu0 0
    %2807 = vmatprep.mubr.bf16.mxu0 0
    %2808 = vmatmul.mubr.bf16.gmra.mrb[0].mxu0 %v2773
    %v2809 = vpop.f32.mrb[0].mxu0
    %v2810 = vadd.f32 %v787, %v2809
    %v2811 = vpop.f32.mrb[0].mxu0
    %v2812 = vpop.f32.mrb[0].mxu0
    %v2813 = vadd.f32 %v787, %v2812
    %v2814 = vpop.f32.mrb[0].mxu0
    %2815 = vdwg.mxu0
    %v2816 = vmax.f32 %v2810, 0.0
    %v2817 = vmax.f32 %v2813, 0.0
    %vm2818 = vcmp.ne.f32.partialorder %v2810, %v2810
    %vm2819 = vcmp.ne.f32.partialorder %v2813, %v2813
    %v2820 = vadd.f32 %v2810, 0.0
    %v2821 = vadd.f32 %v2813, 0.0
    %v2822 = vand.u32 2147483647, %v2810
    %v2823 = vand.u32 2147483647, %v2813
    %v2824 = vsub.f32 0.0, %v2822
    %v2825 = vsub.f32 0.0, %v2823
    %v2826 = vmul.f32 %v2824, 1.442695
    %v2827 = vpow.pop %v2826
    %v2828 = vmul.f32 %v2825, 1.442695
    %v2829 = vpow.pop %v2828
    %v2830 = vadd.f32 %v2827, 1.0
    %v2831 = vlog2.pop %v2830
    %v2832 = vmul.f32 %v2831, 0.6931472
    %v2833 = vmul.f32 -0.5, %v2827
    %v2834 = vadd.f32 %v2833, 1.0
    %v2835 = vmul.f32 %v2834, %v2827
    %v2836 = vand.u32 2147483647, %v2827
    %vm2837 = vcmp.lt.f32.partialorder %v2836, 0.0004427343
    %v2838 = vsel %vm2837, %v2835, %v2832
    %v2839 = vadd.f32 %v2829, 1.0
    %v2840 = vlog2.pop %v2839
    %v2841 = vmul.f32 %v2840, 0.6931472
    %v2842 = vmul.f32 -0.5, %v2829
    %v2843 = vadd.f32 %v2842, 1.0
    %v2844 = vmul.f32 %v2843, %v2829
    %v2845 = vand.u32 2147483647, %v2829
    %vm2846 = vcmp.lt.f32.partialorder %v2845, 0.0004427343
    %v2847 = vsel %vm2846, %v2844, %v2841
    %v2848 = vadd.f32 %v2816, %v2838
    %v2849 = vadd.f32 %v2817, %v2847
    %v2850 = vsel %vm2818, %v2820, %v2848
    %v2851 = vsel %vm2819, %v2821, %v2849
    %v2852 = vmul.f32 %v2850, %v125
    %v2853 = vmul.f32 %v2851, %v127
    %2856 = vrot.lane.b32.xlu0 %v2852, 96
    %v2857 = vpop.permute.xlu0 %2856
    %2858 = vrot.lane.b32.xlu0 %v2853, 96
    %v2859 = vpop.permute.xlu0 %2858
    %v2862 = vadd.f32 %v2810, %v2857
    %v2863 = vadd.f32 %v2813, %v2859
    %v2864 = vpack.c.bf16 %v2863, %v2862
    %v2866 = vsel %vm934, %v2864, 0
    %2868 = vmatprep.subr.bf16.mxu0 %v927
    %2869 = vmatpush1.bf16.msra.mxu0 %v926
    %2870 = vmatprep.subr.bf16.mxu0 %v929
    %2871 = vmatpush1.bf16.msra.mxu0 %v928
    %2872 = vmatprep.subr.bf16.mxu0 0
    %2873 = vmatpush1.bf16.msra.mxu0 0
    %2874 = vmatprep.subr.bf16.mxu0 0
    %2875 = vmatpush1.bf16.msra.mxu0 0
    %2876 = vmatprep.subr.bf16.mxu0 0
    %2877 = vmatpush1.bf16.msra.mxu0 0
    %2878 = vmatprep.subr.bf16.mxu0 0
    %2879 = vmatpush1.bf16.msra.mxu0 0
    %2880 = vmatprep.subr.bf16.mxu0 0
    %2881 = vmatpush1.bf16.msra.mxu0 0
    %2882 = vmatprep.subr.bf16.mxu0 0
    %2883 = vmatpush1.bf16.msra.mxu0 0
    %2884 = vmatprep.subr.bf16.mxu0 0
    %2885 = vmatpush1.bf16.msra.mxu0 0
    %2886 = vmatprep.subr.bf16.mxu0 0
    %2887 = vmatpush1.bf16.msra.mxu0 0
    %2888 = vmatprep.subr.bf16.mxu0 0
    %2889 = vmatpush1.bf16.msra.mxu0 0
    %2890 = vmatprep.subr.bf16.mxu0 0
    %2891 = vmatpush1.bf16.msra.mxu0 0
    %2892 = vmatprep.subr.bf16.mxu0 0
    %2893 = vmatpush1.bf16.msra.mxu0 0
    %2894 = vmatprep.subr.bf16.mxu0 0
    %2895 = vmatpush1.bf16.msra.mxu0 0
    %2896 = vmatprep.subr.bf16.mxu0 0
    %2897 = vmatpush1.bf16.msra.mxu0 0
    %2898 = vmatprep.subr.bf16.mxu0 0
    %2899 = vmatpush1.bf16.msra.mxu0 0
    %2900 = vmatprep.mubr.bf16.mxu0 0
    %2901 = vmatmul.mubr.bf16.gmra.mrb[0].mxu0 %v2866
    %v2902 = vpop.f32.mrb[0].mxu0
    %v2903 = vadd.f32 %v540, %v2902
    %v2904 = vpop.f32.mrb[0].mxu0
    %v2905 = vadd.f32 %v542, %v2904
    %v2906 = vpop.f32.mrb[0].mxu0
    %v2907 = vadd.f32 %v544, %v2906
    %v2908 = vpop.f32.mrb[0].mxu0
    %v2909 = vadd.f32 %v546, %v2908
    %2910 = vdwg.mxu0
    %v2911 = vmul.f32 %v2903, 0.5
    %v2912 = vmul.f32 %v2905, 0.5
    %v2913 = vmul.f32 %v2907, 0.5
    %v2914 = vmul.f32 %v2909, 0.5
    %v2915 = vtanh.pop %v2911
    %v2916 = vtanh.pop %v2912
    %v2917 = vtanh.pop %v2913
    %v2918 = vtanh.pop %v2914
    %v2919 = vmul.f32 %v2915, 0.5
    %v2920 = vmul.f32 %v2916, 0.5
    %v2921 = vmul.f32 %v2917, 0.5
    %v2922 = vmul.f32 %v2918, 0.5
    %v2923 = vadd.f32 %v2919, 0.5
    %v2924 = vadd.f32 %v2920, 0.5
    %v2925 = vadd.f32 %v2921, 0.5
    %v2926 = vadd.f32 %v2922, 0.5
    %v2927 = vmul.f32 %v2923, %v2557
    %v2928 = vmul.f32 %v2925, %v2558
    %v2929 = vmul.f32 %v2923, %v2924
    %v2930 = vmul.f32 %v2925, %v2926
    %2933 = vrot.lane.b32.xlu0 %v2929, 64
    %v2934 = vpop.permute.xlu0 %2933
    %2935 = vrot.lane.b32.xlu0 %v2930, 64
    %v2936 = vpop.permute.xlu0 %2935
    %v2939 = vadd.f32 %v2927, %v2934
    %v2940 = vadd.f32 %v2928, %v2936
    %v2941 = vtanh.pop %v2939
    %v2942 = vtanh.pop %v2940
    %v2943 = vmul.f32 %v2924, %v2941
    %v2944 = vmul.f32 %v2926, %v2942
    %v2945 = vadd.f32 %v2563, %v2943
    %v2946 = vadd.f32 %v2564, %v2944
    %v2947 = vrcp.pop %v2731
    %v2948 = vrcp.pop %v2732
    %v2949 = vmul.f32 %v2850, %v2947
    %v2950 = vmul.f32 %v2851, %v2948
    %v2951 = vmul.f32 %v2949, %v2949
    %v2952 = vmul.f32 %v2950, %v2950
    %v2953 = vsub.f32 %v2810, %v2695
    %v2954 = vsub.f32 %v2813, %v2696
    %2957 = vrot.lane.b32.xlu0 %v2947, 96
    %v2958 = vpop.permute.xlu0 %2957
    %2959 = vrot.lane.b32.xlu0 %v2948, 96
    %v2960 = vpop.permute.xlu0 %2959
    %v2963 = vmul.f32 %v2953, %v2958
    %v2964 = vmul.f32 %v2954, %v2960
    %v2965 = vmul.f32 %v2963, %v2963
    %v2966 = vmul.f32 %v2964, %v2964
    %2969 = vrot.lane.b32.xlu0 %v2965, 32
    %v2970 = vpop.permute.xlu0 %2969
    %2971 = vrot.lane.b32.xlu0 %v2966, 32
    %v2972 = vpop.permute.xlu0 %2971
    %v2975 = vadd.f32 %v2951, %v2970
    %v2976 = vadd.f32 %v2952, %v2972
    %v2977 = vsub.f32 %v2975, 1.0
    %v2978 = vsub.f32 %v2976, 1.0
    %v2979 = vlog2.pop %v2951
    %v2980 = vmul.f32 %v2979, 0.6931472
    %v2981 = vlog2.pop %v2952
    %v2982 = vmul.f32 %v2981, 0.6931472
    %v2983 = vsub.f32 %v2977, %v2980
    %v2984 = vsub.f32 %v2978, %v2982
    %v2985 = vmul.f32 %v2983, 0.5
    %v2986 = vmul.f32 %v2984, 0.5
    %v2987 = vadd.f32 %v2605, %v2985
    %v2988 = vadd.f32 %v2606, %v2986
    %v2989 = vpack.c.bf16 %v2944, %v2943
    %v2991 = vsel %vm612, %v2989, 0
    %2993 = vmatprep.subr.bf16.mxu0 %v589
    %2994 = vmatpush1.bf16.msra.mxu0 %v588
    %2995 = vmatprep.subr.bf16.mxu0 %v592
    %2996 = vmatpush1.bf16.msra.mxu0 %v591
    %2997 = vmatprep.subr.bf16.mxu0 %v595
    %2998 = vmatpush1.bf16.msra.mxu0 %v594
    %2999 = vmatprep.subr.bf16.mxu0 %v598
    %3000 = vmatpush1.bf16.msra.mxu0 %v597
    %3001 = vmatprep.subr.bf16.mxu0 0
    %3002 = vmatpush1.bf16.msra.mxu0 0
    %3003 = vmatprep.subr.bf16.mxu0 0
    %3004 = vmatpush1.bf16.msra.mxu0 0
    %3005 = vmatprep.subr.bf16.mxu0 0
    %3006 = vmatpush1.bf16.msra.mxu0 0
    %3007 = vmatprep.subr.bf16.mxu0 0
    %3008 = vmatpush1.bf16.msra.mxu0 0
    %3009 = vmatprep.subr.bf16.mxu0 0
    %3010 = vmatpush1.bf16.msra.mxu0 0
    %3011 = vmatprep.subr.bf16.mxu0 0
    %3012 = vmatpush1.bf16.msra.mxu0 0
    %3013 = vmatprep.subr.bf16.mxu0 0
    %3014 = vmatpush1.bf16.msra.mxu0 0
    %3015 = vmatprep.subr.bf16.mxu0 0
    %3016 = vmatpush1.bf16.msra.mxu0 0
    %3017 = vmatprep.subr.bf16.mxu0 0
    %3018 = vmatpush1.bf16.msra.mxu0 0
    %3019 = vmatprep.subr.bf16.mxu0 0
    %3020 = vmatpush1.bf16.msra.mxu0 0
    %3021 = vmatprep.subr.bf16.mxu0 0
    %3022 = vmatpush1.bf16.msra.mxu0 0
    %3023 = vmatprep.subr.bf16.mxu0 0
    %3024 = vmatpush1.bf16.msra.mxu0 0
    %3025 = vmatprep.mubr.bf16.mxu0 0
    %3026 = vmatmul.mubr.bf16.gmra.mrb[0].mxu0 %v2991
    %v3027 = vpop.f32.mrb[0].mxu0
    %v3028 = vadd.f32 0.0, %v3027
    %v3029 = vpop.f32.mrb[0].mxu0
    %v3030 = vadd.f32 0.0, %v3029
    %v3031 = vpop.f32.mrb[0].mxu0
    %v3032 = vadd.f32 0.0, %v3031
    %v3033 = vpop.f32.mrb[0].mxu0
    %v3034 = vadd.f32 0.0, %v3033
    %3035 = vdwg.mxu0
    %3036 = vmatprep.subr.bf16.mxu0 0
    %3037 = vmatpush1.bf16.msra.mxu0 %v590
    %3038 = vmatprep.subr.bf16.mxu0 0
    %3039 = vmatpush1.bf16.msra.mxu0 %v593
    %3040 = vmatprep.subr.bf16.mxu0 0
    %3041 = vmatpush1.bf16.msra.mxu0 %v596
    %3042 = vmatprep.subr.bf16.mxu0 0
    %3043 = vmatpush1.bf16.msra.mxu0 %v599
    %3044 = vmatprep.subr.bf16.mxu0 0
    %3045 = vmatpush1.bf16.msra.mxu0 0
    %3046 = vmatprep.subr.bf16.mxu0 0
    %3047 = vmatpush1.bf16.msra.mxu0 0
    %3048 = vmatprep.subr.bf16.mxu0 0
    %3049 = vmatpush1.bf16.msra.mxu0 0
    %3050 = vmatprep.subr.bf16.mxu0 0
    %3051 = vmatpush1.bf16.msra.mxu0 0
    %3052 = vmatprep.subr.bf16.mxu0 0
    %3053 = vmatpush1.bf16.msra.mxu0 0
    %3054 = vmatprep.subr.bf16.mxu0 0
    %3055 = vmatpush1.bf16.msra.mxu0 0
    %3056 = vmatprep.subr.bf16.mxu0 0
    %3057 = vmatpush1.bf16.msra.mxu0 0
    %3058 = vmatprep.subr.bf16.mxu0 0
    %3059 = vmatpush1.bf16.msra.mxu0 0
    %3060 = vmatprep.subr.bf16.mxu0 0
    %3061 = vmatpush1.bf16.msra.mxu0 0
    %3062 = vmatprep.subr.bf16.mxu0 0
    %3063 = vmatpush1.bf16.msra.mxu0 0
    %3064 = vmatprep.subr.bf16.mxu0 0
    %3065 = vmatpush1.bf16.msra.mxu0 0
    %3066 = vmatprep.subr.bf16.mxu0 0
    %3067 = vmatpush1.bf16.msra.mxu0 0
    %3068 = vmatprep.mubr.bf16.mxu0 0
    %3069 = vmatmul.mubr.bf16.gmra.mrb[0].mxu0 %v2991
    %v3070 = vpop.f32.mrb[0].mxu0
    %v3071 = vadd.f32 0.0, %v3070
    %v3072 = vpop.f32.mrb[0].mxu0
    %v3073 = vpop.f32.mrb[0].mxu0
    %v3074 = vadd.f32 0.0, %v3073
    %v3075 = vpop.f32.mrb[0].mxu0
    %3076 = vdwg.mxu0
    %v3077 = vadd.f32 %v3071, %v704
    %v3078 = vadd.f32 %v3074, %v704
    %v3079 = vmax.f32 %v3077, 0.0
    %v3080 = vmax.f32 %v3078, 0.0
    %vm3081 = vcmp.ne.f32.partialorder %v3077, %v3077
    %vm3082 = vcmp.ne.f32.partialorder %v3078, %v3078
    %v3083 = vadd.f32 %v3077, 0.0
    %v3084 = vadd.f32 %v3078, 0.0
    %v3085 = vand.u32 2147483647, %v3077
    %v3086 = vand.u32 2147483647, %v3078
    %v3087 = vsub.f32 0.0, %v3085
    %v3088 = vsub.f32 0.0, %v3086
    %v3089 = vmul.f32 %v3087, 1.442695
    %v3090 = vpow.pop %v3089
    %v3091 = vmul.f32 %v3088, 1.442695
    %v3092 = vpow.pop %v3091
    %v3093 = vadd.f32 %v3090, 1.0
    %v3094 = vlog2.pop %v3093
    %v3095 = vmul.f32 %v3094, 0.6931472
    %v3096 = vmul.f32 -0.5, %v3090
    %v3097 = vadd.f32 %v3096, 1.0
    %v3098 = vmul.f32 %v3097, %v3090
    %v3099 = vand.u32 2147483647, %v3090
    %vm3100 = vcmp.lt.f32.partialorder %v3099, 0.0004427343
    %v3101 = vsel %vm3100, %v3098, %v3095
    %v3102 = vadd.f32 %v3092, 1.0
    %v3103 = vlog2.pop %v3102
    %v3104 = vmul.f32 %v3103, 0.6931472
    %v3105 = vmul.f32 -0.5, %v3092
    %v3106 = vadd.f32 %v3105, 1.0
    %v3107 = vmul.f32 %v3106, %v3092
    %v3108 = vand.u32 2147483647, %v3092
    %vm3109 = vcmp.lt.f32.partialorder %v3108, 0.0004427343
    %v3110 = vsel %vm3109, %v3107, %v3104
    %v3111 = vadd.f32 %v3079, %v3101
    %v3112 = vadd.f32 %v3080, %v3110
    %v3113 = vsel %vm3081, %v3083, %v3111
    %v3114 = vsel %vm3082, %v3084, %v3112
    %v3115 = vadd.f32 %v3028, %v497
    %v3116 = vadd.f32 %v3030, %v499
    %v3117 = vadd.f32 %v3032, %v501
    %v3118 = vadd.f32 %v3034, %v503
    %v3119 = vmul.f32 %v3115, 0.5
    %v3120 = vmul.f32 %v3116, 0.5
    %v3121 = vmul.f32 %v3117, 0.5
    %v3122 = vmul.f32 %v3118, 0.5
    %v3123 = vtanh.pop %v3119
    %v3124 = vtanh.pop %v3120
    %v3125 = vtanh.pop %v3121
    %v3126 = vtanh.pop %v3122
    %v3127 = vmul.f32 %v3123, 0.5
    %v3128 = vmul.f32 %v3124, 0.5
    %v3129 = vmul.f32 %v3125, 0.5
    %v3130 = vmul.f32 %v3126, 0.5
    %v3131 = vadd.f32 %v3127, 0.5
    %v3132 = vadd.f32 %v3128, 0.5
    %v3133 = vadd.f32 %v3129, 0.5
    %v3134 = vadd.f32 %v3130, 0.5
    %v3135 = vmul.f32 %v3131, %v2765
    %v3136 = vmul.f32 %v3133, %v2766
    %v3137 = vmul.f32 %v3131, %v3132
    %v3138 = vmul.f32 %v3133, %v3134
    %3141 = vrot.lane.b32.xlu0 %v3137, 64
    %v3142 = vpop.permute.xlu0 %3141
    %3143 = vrot.lane.b32.xlu0 %v3138, 64
    %v3144 = vpop.permute.xlu0 %3143
    %v3147 = vadd.f32 %v3135, %v3142
    %v3148 = vadd.f32 %v3136, %v3144
    %v3149 = vtanh.pop %v3147
    %v3150 = vtanh.pop %v3148
    %v3151 = vmul.f32 %v3132, %v3149
    %v3152 = vmul.f32 %v3134, %v3150
    %v3153 = vpack.c.bf16 %v3152, %v3151
    %v3155 = vsel %vm612, %v3153, 0
    %3157 = vmatprep.subr.bf16.mxu0 0
    %3158 = vmatpush1.bf16.msra.mxu0 %v805
    %3159 = vmatprep.subr.bf16.mxu0 0
    %3160 = vmatpush1.bf16.msra.mxu0 %v806
    %3161 = vmatprep.subr.bf16.mxu0 0
    %3162 = vmatpush1.bf16.msra.mxu0 %v807
    %3163 = vmatprep.subr.bf16.mxu0 0
    %3164 = vmatpush1.bf16.msra.mxu0 %v808
    %3165 = vmatprep.subr.bf16.mxu0 0
    %3166 = vmatpush1.bf16.msra.mxu0 0
    %3167 = vmatprep.subr.bf16.mxu0 0
    %3168 = vmatpush1.bf16.msra.mxu0 0
    %3169 = vmatprep.subr.bf16.mxu0 0
    %3170 = vmatpush1.bf16.msra.mxu0 0
    %3171 = vmatprep.subr.bf16.mxu0 0
    %3172 = vmatpush1.bf16.msra.mxu0 0
    %3173 = vmatprep.subr.bf16.mxu0 0
    %3174 = vmatpush1.bf16.msra.mxu0 0
    %3175 = vmatprep.subr.bf16.mxu0 0
    %3176 = vmatpush1.bf16.msra.mxu0 0
    %3177 = vmatprep.subr.bf16.mxu0 0
    %3178 = vmatpush1.bf16.msra.mxu0 0
    %3179 = vmatprep.subr.bf16.mxu0 0
    %3180 = vmatpush1.bf16.msra.mxu0 0
    %3181 = vmatprep.subr.bf16.mxu0 0
    %3182 = vmatpush1.bf16.msra.mxu0 0
    %3183 = vmatprep.subr.bf16.mxu0 0
    %3184 = vmatpush1.bf16.msra.mxu0 0
    %3185 = vmatprep.subr.bf16.mxu0 0
    %3186 = vmatpush1.bf16.msra.mxu0 0
    %3187 = vmatprep.subr.bf16.mxu0 0
    %3188 = vmatpush1.bf16.msra.mxu0 0
    %3189 = vmatprep.mubr.bf16.mxu0 0
    %3190 = vmatmul.mubr.bf16.gmra.mrb[0].mxu0 %v3155
    %v3191 = vpop.f32.mrb[0].mxu0
    %v3192 = vadd.f32 %v787, %v3191
    %v3193 = vpop.f32.mrb[0].mxu0
    %v3194 = vpop.f32.mrb[0].mxu0
    %v3195 = vadd.f32 %v787, %v3194
    %v3196 = vpop.f32.mrb[0].mxu0
    %3197 = vdwg.mxu0
    %v3198 = vmax.f32 %v3192, 0.0
    %v3199 = vmax.f32 %v3195, 0.0
    %vm3200 = vcmp.ne.f32.partialorder %v3192, %v3192
    %vm3201 = vcmp.ne.f32.partialorder %v3195, %v3195
    %v3202 = vadd.f32 %v3192, 0.0
    %v3203 = vadd.f32 %v3195, 0.0
    %v3204 = vand.u32 2147483647, %v3192
    %v3205 = vand.u32 2147483647, %v3195
    %v3206 = vsub.f32 0.0, %v3204
    %v3207 = vsub.f32 0.0, %v3205
    %v3208 = vmul.f32 %v3206, 1.442695
    %v3209 = vpow.pop %v3208
    %v3210 = vmul.f32 %v3207, 1.442695
    %v3211 = vpow.pop %v3210
    %v3212 = vadd.f32 %v3209, 1.0
    %v3213 = vlog2.pop %v3212
    %v3214 = vmul.f32 %v3213, 0.6931472
    %v3215 = vmul.f32 -0.5, %v3209
    %v3216 = vadd.f32 %v3215, 1.0
    %v3217 = vmul.f32 %v3216, %v3209
    %v3218 = vand.u32 2147483647, %v3209
    %vm3219 = vcmp.lt.f32.partialorder %v3218, 0.0004427343
    %v3220 = vsel %vm3219, %v3217, %v3214
    %v3221 = vadd.f32 %v3211, 1.0
    %v3222 = vlog2.pop %v3221
    %v3223 = vmul.f32 %v3222, 0.6931472
    %v3224 = vmul.f32 -0.5, %v3211
    %v3225 = vadd.f32 %v3224, 1.0
    %v3226 = vmul.f32 %v3225, %v3211
    %v3227 = vand.u32 2147483647, %v3211
    %vm3228 = vcmp.lt.f32.partialorder %v3227, 0.0004427343
    %v3229 = vsel %vm3228, %v3226, %v3223
    %v3230 = vadd.f32 %v3198, %v3220
    %v3231 = vadd.f32 %v3199, %v3229
    %v3232 = vsel %vm3200, %v3202, %v3230
    %v3233 = vsel %vm3201, %v3203, %v3231
    %3234 = vrot.lane.b32.xlu0 %v125, 96
    %v3235 = vpop.permute.xlu0 %3234
    %3236 = vrot.lane.b32.xlu0 %v127, 96
    %v3237 = vpop.permute.xlu0 %3236
    %v3240 = vmul.f32 %v3232, %v3235
    %v3241 = vmul.f32 %v3233, %v3237
    %3244 = vrot.lane.b32.xlu0 %v3240, 96
    %v3245 = vpop.permute.xlu0 %3244
    %3246 = vrot.lane.b32.xlu0 %v3241, 96
    %v3247 = vpop.permute.xlu0 %3246
    %v3250 = vadd.f32 %v3192, %v3245
    %v3251 = vadd.f32 %v3195, %v3247
    %v3252 = vpack.c.bf16 %v3251, %v3250
    %v3254 = vsel %vm934, %v3252, 0
    %3256 = vmatprep.subr.bf16.mxu0 %v927
    %3257 = vmatpush1.bf16.msra.mxu0 %v926
    %3258 = vmatprep.subr.bf16.mxu0 %v929
    %3259 = vmatpush1.bf16.msra.mxu0 %v928
    %3260 = vmatprep.subr.bf16.mxu0 0
    %3261 = vmatpush1.bf16.msra.mxu0 0
    %3262 = vmatprep.subr.bf16.mxu0 0
    %3263 = vmatpush1.bf16.msra.mxu0 0
    %3264 = vmatprep.subr.bf16.mxu0 0
    %3265 = vmatpush1.bf16.msra.mxu0 0
    %3266 = vmatprep.subr.bf16.mxu0 0
    %3267 = vmatpush1.bf16.msra.mxu0 0
    %3268 = vmatprep.subr.bf16.mxu0 0
    %3269 = vmatpush1.bf16.msra.mxu0 0
    %3270 = vmatprep.subr.bf16.mxu0 0
    %3271 = vmatpush1.bf16.msra.mxu0 0
    %3272 = vmatprep.subr.bf16.mxu0 0
    %3273 = vmatpush1.bf16.msra.mxu0 0
    %3274 = vmatprep.subr.bf16.mxu0 0
    %3275 = vmatpush1.bf16.msra.mxu0 0
    %3276 = vmatprep.subr.bf16.mxu0 0
    %3277 = vmatpush1.bf16.msra.mxu0 0
    %3278 = vmatprep.subr.bf16.mxu0 0
    %3279 = vmatpush1.bf16.msra.mxu0 0
    %3280 = vmatprep.subr.bf16.mxu0 0
    %3281 = vmatpush1.bf16.msra.mxu0 0
    %3282 = vmatprep.subr.bf16.mxu0 0
    %3283 = vmatpush1.bf16.msra.mxu0 0
    %3284 = vmatprep.subr.bf16.mxu0 0
    %3285 = vmatpush1.bf16.msra.mxu0 0
    %3286 = vmatprep.subr.bf16.mxu0 0
    %3287 = vmatpush1.bf16.msra.mxu0 0
    %3288 = vmatprep.mubr.bf16.mxu0 0
    %3289 = vmatmul.mubr.bf16.gmra.mrb[0].mxu0 %v3254
    %v3290 = vpop.f32.mrb[0].mxu0
    %v3291 = vadd.f32 %v540, %v3290
    %v3292 = vpop.f32.mrb[0].mxu0
    %v3293 = vadd.f32 %v542, %v3292
    %v3294 = vpop.f32.mrb[0].mxu0
    %v3295 = vadd.f32 %v544, %v3294
    %v3296 = vpop.f32.mrb[0].mxu0
    %v3297 = vadd.f32 %v546, %v3296
    %3298 = vdwg.mxu0
    %v3299 = vmul.f32 %v3291, 0.5
    %v3300 = vmul.f32 %v3293, 0.5
    %v3301 = vmul.f32 %v3295, 0.5
    %v3302 = vmul.f32 %v3297, 0.5
    %v3303 = vtanh.pop %v3299
    %v3304 = vtanh.pop %v3300
    %v3305 = vtanh.pop %v3301
    %v3306 = vtanh.pop %v3302
    %v3307 = vmul.f32 %v3303, 0.5
    %v3308 = vmul.f32 %v3304, 0.5
    %v3309 = vmul.f32 %v3305, 0.5
    %v3310 = vmul.f32 %v3306, 0.5
    %v3311 = vadd.f32 %v3307, 0.5
    %v3312 = vadd.f32 %v3308, 0.5
    %v3313 = vadd.f32 %v3309, 0.5
    %v3314 = vadd.f32 %v3310, 0.5
    %v3315 = vmul.f32 %v3311, %v2939
    %v3316 = vmul.f32 %v3313, %v2940
    %v3317 = vmul.f32 %v3311, %v3312
    %v3318 = vmul.f32 %v3313, %v3314
    %3321 = vrot.lane.b32.xlu0 %v3317, 64
    %v3322 = vpop.permute.xlu0 %3321
    %3323 = vrot.lane.b32.xlu0 %v3318, 64
    %v3324 = vpop.permute.xlu0 %3323
    %v3327 = vadd.f32 %v3315, %v3322
    %v3328 = vadd.f32 %v3316, %v3324
    %v3329 = vtanh.pop %v3327
    %v3330 = vtanh.pop %v3328
    %v3331 = vmul.f32 %v3312, %v3329
    %v3332 = vmul.f32 %v3314, %v3330
    %v3333 = vadd.f32 %v2945, %v3331
    %v3334 = vadd.f32 %v2946, %v3332
    %v3335 = vrcp.pop %v3113
    %v3336 = vrcp.pop %v3114
    %v3337 = vmul.f32 %v3232, %v3335
    %v3338 = vmul.f32 %v3233, %v3336
    %v3339 = vmul.f32 %v3337, %v3337
    %v3340 = vmul.f32 %v3338, %v3338
    %v3341 = vsub.f32 %v3192, %v3077
    %v3342 = vsub.f32 %v3195, %v3078
    %3345 = vrot.lane.b32.xlu0 %v3335, 96
    %v3346 = vpop.permute.xlu0 %3345
    %3347 = vrot.lane.b32.xlu0 %v3336, 96
    %v3348 = vpop.permute.xlu0 %3347
    %v3351 = vmul.f32 %v3341, %v3346
    %v3352 = vmul.f32 %v3342, %v3348
    %v3353 = vmul.f32 %v3351, %v3351
    %v3354 = vmul.f32 %v3352, %v3352
    %3357 = vrot.lane.b32.xlu0 %v3353, 32
    %v3358 = vpop.permute.xlu0 %3357
    %3359 = vrot.lane.b32.xlu0 %v3354, 32
    %v3360 = vpop.permute.xlu0 %3359
    %v3363 = vadd.f32 %v3339, %v3358
    %v3364 = vadd.f32 %v3340, %v3360
    %v3365 = vsub.f32 %v3363, 1.0
    %v3366 = vsub.f32 %v3364, 1.0
    %v3367 = vlog2.pop %v3339
    %v3368 = vmul.f32 %v3367, 0.6931472
    %v3369 = vlog2.pop %v3340
    %v3370 = vmul.f32 %v3369, 0.6931472
    %v3371 = vsub.f32 %v3365, %v3368
    %v3372 = vsub.f32 %v3366, %v3370
    %v3373 = vmul.f32 %v3371, 0.5
    %v3374 = vmul.f32 %v3372, 0.5
    %v3375 = vadd.f32 %v2987, %v3373
    %v3376 = vadd.f32 %v2988, %v3374
    %v3377 = vpack.c.bf16 %v3332, %v3331
    %v3379 = vsel %vm612, %v3377, 0
    %3381 = vmatprep.subr.bf16.mxu0 %v589
    %3382 = vmatpush1.bf16.msra.mxu0 %v588
    %3383 = vmatprep.subr.bf16.mxu0 %v592
    %3384 = vmatpush1.bf16.msra.mxu0 %v591
    %3385 = vmatprep.subr.bf16.mxu0 %v595
    %3386 = vmatpush1.bf16.msra.mxu0 %v594
    %3387 = vmatprep.subr.bf16.mxu0 %v598
    %3388 = vmatpush1.bf16.msra.mxu0 %v597
    %3389 = vmatprep.subr.bf16.mxu0 0
    %3390 = vmatpush1.bf16.msra.mxu0 0
    %3391 = vmatprep.subr.bf16.mxu0 0
    %3392 = vmatpush1.bf16.msra.mxu0 0
    %3393 = vmatprep.subr.bf16.mxu0 0
    %3394 = vmatpush1.bf16.msra.mxu0 0
    %3395 = vmatprep.subr.bf16.mxu0 0
    %3396 = vmatpush1.bf16.msra.mxu0 0
    %3397 = vmatprep.subr.bf16.mxu0 0
    %3398 = vmatpush1.bf16.msra.mxu0 0
    %3399 = vmatprep.subr.bf16.mxu0 0
    %3400 = vmatpush1.bf16.msra.mxu0 0
    %3401 = vmatprep.subr.bf16.mxu0 0
    %3402 = vmatpush1.bf16.msra.mxu0 0
    %3403 = vmatprep.subr.bf16.mxu0 0
    %3404 = vmatpush1.bf16.msra.mxu0 0
    %3405 = vmatprep.subr.bf16.mxu0 0
    %3406 = vmatpush1.bf16.msra.mxu0 0
    %3407 = vmatprep.subr.bf16.mxu0 0
    %3408 = vmatpush1.bf16.msra.mxu0 0
    %3409 = vmatprep.subr.bf16.mxu0 0
    %3410 = vmatpush1.bf16.msra.mxu0 0
    %3411 = vmatprep.subr.bf16.mxu0 0
    %3412 = vmatpush1.bf16.msra.mxu0 0
    %3413 = vmatprep.mubr.bf16.mxu0 0
    %3414 = vmatmul.mubr.bf16.gmra.mrb[0].mxu0 %v3379
    %v3415 = vpop.f32.mrb[0].mxu0
    %v3416 = vadd.f32 0.0, %v3415
    %v3417 = vpop.f32.mrb[0].mxu0
    %v3418 = vadd.f32 0.0, %v3417
    %v3419 = vpop.f32.mrb[0].mxu0
    %v3420 = vadd.f32 0.0, %v3419
    %v3421 = vpop.f32.mrb[0].mxu0
    %v3422 = vadd.f32 0.0, %v3421
    %3423 = vdwg.mxu0
    %3424 = vmatprep.subr.bf16.mxu0 0
    %3425 = vmatpush1.bf16.msra.mxu0 %v590
    %3426 = vmatprep.subr.bf16.mxu0 0
    %3427 = vmatpush1.bf16.msra.mxu0 %v593
    %3428 = vmatprep.subr.bf16.mxu0 0
    %3429 = vmatpush1.bf16.msra.mxu0 %v596
    %3430 = vmatprep.subr.bf16.mxu0 0
    %3431 = vmatpush1.bf16.msra.mxu0 %v599
    %3432 = vmatprep.subr.bf16.mxu0 0
    %3433 = vmatpush1.bf16.msra.mxu0 0
    %3434 = vmatprep.subr.bf16.mxu0 0
    %3435 = vmatpush1.bf16.msra.mxu0 0
    %3436 = vmatprep.subr.bf16.mxu0 0
    %3437 = vmatpush1.bf16.msra.mxu0 0
    %3438 = vmatprep.subr.bf16.mxu0 0
    %3439 = vmatpush1.bf16.msra.mxu0 0
    %3440 = vmatprep.subr.bf16.mxu0 0
    %3441 = vmatpush1.bf16.msra.mxu0 0
    %3442 = vmatprep.subr.bf16.mxu0 0
    %3443 = vmatpush1.bf16.msra.mxu0 0
    %3444 = vmatprep.subr.bf16.mxu0 0
    %3445 = vmatpush1.bf16.msra.mxu0 0
    %3446 = vmatprep.subr.bf16.mxu0 0
    %3447 = vmatpush1.bf16.msra.mxu0 0
    %3448 = vmatprep.subr.bf16.mxu0 0
    %3449 = vmatpush1.bf16.msra.mxu0 0
    %3450 = vmatprep.subr.bf16.mxu0 0
    %3451 = vmatpush1.bf16.msra.mxu0 0
    %3452 = vmatprep.subr.bf16.mxu0 0
    %3453 = vmatpush1.bf16.msra.mxu0 0
    %3454 = vmatprep.subr.bf16.mxu0 0
    %3455 = vmatpush1.bf16.msra.mxu0 0
    %3456 = vmatprep.mubr.bf16.mxu0 0
    %3457 = vmatmul.mubr.bf16.gmra.mrb[0].mxu0 %v3379
    %v3458 = vpop.f32.mrb[0].mxu0
    %v3459 = vadd.f32 0.0, %v3458
    %v3460 = vpop.f32.mrb[0].mxu0
    %v3461 = vpop.f32.mrb[0].mxu0
    %v3462 = vadd.f32 0.0, %v3461
    %v3463 = vpop.f32.mrb[0].mxu0
    %3464 = vdwg.mxu0
    %v3465 = vadd.f32 %v3459, %v704
    %v3466 = vadd.f32 %v3462, %v704
    %v3467 = vmax.f32 %v3465, 0.0
    %v3468 = vmax.f32 %v3466, 0.0
    %vm3469 = vcmp.ne.f32.partialorder %v3465, %v3465
    %vm3470 = vcmp.ne.f32.partialorder %v3466, %v3466
    %v3471 = vadd.f32 %v3465, 0.0
    %v3472 = vadd.f32 %v3466, 0.0
    %v3473 = vand.u32 2147483647, %v3465
    %v3474 = vand.u32 2147483647, %v3466
    %v3475 = vsub.f32 0.0, %v3473
    %v3476 = vsub.f32 0.0, %v3474
    %v3477 = vmul.f32 %v3475, 1.442695
    %v3478 = vpow.pop %v3477
    %v3479 = vmul.f32 %v3476, 1.442695
    %v3480 = vpow.pop %v3479
    %v3481 = vadd.f32 %v3478, 1.0
    %v3482 = vlog2.pop %v3481
    %v3483 = vmul.f32 %v3482, 0.6931472
    %v3484 = vmul.f32 -0.5, %v3478
    %v3485 = vadd.f32 %v3484, 1.0
    %v3486 = vmul.f32 %v3485, %v3478
    %v3487 = vand.u32 2147483647, %v3478
    %vm3488 = vcmp.lt.f32.partialorder %v3487, 0.0004427343
    %v3489 = vsel %vm3488, %v3486, %v3483
    %v3490 = vadd.f32 %v3480, 1.0
    %v3491 = vlog2.pop %v3490
    %v3492 = vmul.f32 %v3491, 0.6931472
    %v3493 = vmul.f32 -0.5, %v3480
    %v3494 = vadd.f32 %v3493, 1.0
    %v3495 = vmul.f32 %v3494, %v3480
    %v3496 = vand.u32 2147483647, %v3480
    %vm3497 = vcmp.lt.f32.partialorder %v3496, 0.0004427343
    %v3498 = vsel %vm3497, %v3495, %v3492
    %v3499 = vadd.f32 %v3467, %v3489
    %v3500 = vadd.f32 %v3468, %v3498
    %v3501 = vsel %vm3469, %v3471, %v3499
    %v3502 = vsel %vm3470, %v3472, %v3500
    %v3503 = vadd.f32 %v3416, %v497
    %v3504 = vadd.f32 %v3418, %v499
    %v3505 = vadd.f32 %v3420, %v501
    %v3506 = vadd.f32 %v3422, %v503
    %v3507 = vmul.f32 %v3503, 0.5
    %v3508 = vmul.f32 %v3504, 0.5
    %v3509 = vmul.f32 %v3505, 0.5
    %v3510 = vmul.f32 %v3506, 0.5
    %v3511 = vtanh.pop %v3507
    %v3512 = vtanh.pop %v3508
    %v3513 = vtanh.pop %v3509
    %v3514 = vtanh.pop %v3510
    %v3515 = vmul.f32 %v3511, 0.5
    %v3516 = vmul.f32 %v3512, 0.5
    %v3517 = vmul.f32 %v3513, 0.5
    %v3518 = vmul.f32 %v3514, 0.5
    %v3519 = vadd.f32 %v3515, 0.5
    %v3520 = vadd.f32 %v3516, 0.5
    %v3521 = vadd.f32 %v3517, 0.5
    %v3522 = vadd.f32 %v3518, 0.5
    %v3523 = vmul.f32 %v3519, %v3147
    %v3524 = vmul.f32 %v3521, %v3148
    %v3525 = vmul.f32 %v3519, %v3520
    %v3526 = vmul.f32 %v3521, %v3522
    %3529 = vrot.lane.b32.xlu0 %v3525, 64
    %v3530 = vpop.permute.xlu0 %3529
    %3531 = vrot.lane.b32.xlu0 %v3526, 64
    %v3532 = vpop.permute.xlu0 %3531
    %v3535 = vadd.f32 %v3523, %v3530
    %v3536 = vadd.f32 %v3524, %v3532
    %v3537 = vtanh.pop %v3535
    %v3538 = vtanh.pop %v3536
    %v3539 = vmul.f32 %v3520, %v3537
    %v3540 = vmul.f32 %v3522, %v3538
    %v3541 = vpack.c.bf16 %v3540, %v3539
    %v3543 = vsel %vm612, %v3541, 0
    %3545 = vmatprep.subr.bf16.mxu0 0
    %3546 = vmatpush1.bf16.msra.mxu0 %v805
    %3547 = vmatprep.subr.bf16.mxu0 0
    %3548 = vmatpush1.bf16.msra.mxu0 %v806
    %3549 = vmatprep.subr.bf16.mxu0 0
    %3550 = vmatpush1.bf16.msra.mxu0 %v807
    %3551 = vmatprep.subr.bf16.mxu0 0
    %3552 = vmatpush1.bf16.msra.mxu0 %v808
    %3553 = vmatprep.subr.bf16.mxu0 0
    %3554 = vmatpush1.bf16.msra.mxu0 0
    %3555 = vmatprep.subr.bf16.mxu0 0
    %3556 = vmatpush1.bf16.msra.mxu0 0
    %3557 = vmatprep.subr.bf16.mxu0 0
    %3558 = vmatpush1.bf16.msra.mxu0 0
    %3559 = vmatprep.subr.bf16.mxu0 0
    %3560 = vmatpush1.bf16.msra.mxu0 0
    %3561 = vmatprep.subr.bf16.mxu0 0
    %3562 = vmatpush1.bf16.msra.mxu0 0
    %3563 = vmatprep.subr.bf16.mxu0 0
    %3564 = vmatpush1.bf16.msra.mxu0 0
    %3565 = vmatprep.subr.bf16.mxu0 0
    %3566 = vmatpush1.bf16.msra.mxu0 0
    %3567 = vmatprep.subr.bf16.mxu0 0
    %3568 = vmatpush1.bf16.msra.mxu0 0
    %3569 = vmatprep.subr.bf16.mxu0 0
    %3570 = vmatpush1.bf16.msra.mxu0 0
    %3571 = vmatprep.subr.bf16.mxu0 0
    %3572 = vmatpush1.bf16.msra.mxu0 0
    %3573 = vmatprep.subr.bf16.mxu0 0
    %3574 = vmatpush1.bf16.msra.mxu0 0
    %3575 = vmatprep.subr.bf16.mxu0 0
    %3576 = vmatpush1.bf16.msra.mxu0 0
    %3577 = vmatprep.mubr.bf16.mxu0 0
    %3578 = vmatmul.mubr.bf16.gmra.mrb[0].mxu0 %v3543
    %v3579 = vpop.f32.mrb[0].mxu0
    %v3580 = vadd.f32 %v787, %v3579
    %v3581 = vpop.f32.mrb[0].mxu0
    %v3582 = vpop.f32.mrb[0].mxu0
    %v3583 = vadd.f32 %v787, %v3582
    %v3584 = vpop.f32.mrb[0].mxu0
    %3585 = vdwg.mxu0
    %v3586 = vmax.f32 %v3580, 0.0
    %v3587 = vmax.f32 %v3583, 0.0
    %vm3588 = vcmp.ne.f32.partialorder %v3580, %v3580
    %vm3589 = vcmp.ne.f32.partialorder %v3583, %v3583
    %v3590 = vadd.f32 %v3580, 0.0
    %v3591 = vadd.f32 %v3583, 0.0
    %v3592 = vand.u32 2147483647, %v3580
    %v3593 = vand.u32 2147483647, %v3583
    %v3594 = vsub.f32 0.0, %v3592
    %v3595 = vsub.f32 0.0, %v3593
    %v3596 = vmul.f32 %v3594, 1.442695
    %v3597 = vpow.pop %v3596
    %v3598 = vmul.f32 %v3595, 1.442695
    %v3599 = vpow.pop %v3598
    %v3600 = vadd.f32 %v3597, 1.0
    %v3601 = vlog2.pop %v3600
    %v3602 = vmul.f32 %v3601, 0.6931472
    %v3603 = vmul.f32 -0.5, %v3597
    %v3604 = vadd.f32 %v3603, 1.0
    %v3605 = vmul.f32 %v3604, %v3597
    %v3606 = vand.u32 2147483647, %v3597
    %vm3607 = vcmp.lt.f32.partialorder %v3606, 0.0004427343
    %v3608 = vsel %vm3607, %v3605, %v3602
    %v3609 = vadd.f32 %v3599, 1.0
    %v3610 = vlog2.pop %v3609
    %v3611 = vmul.f32 %v3610, 0.6931472
    %v3612 = vmul.f32 -0.5, %v3599
    %v3613 = vadd.f32 %v3612, 1.0
    %v3614 = vmul.f32 %v3613, %v3599
    %v3615 = vand.u32 2147483647, %v3599
    %vm3616 = vcmp.lt.f32.partialorder %v3615, 0.0004427343
    %v3617 = vsel %vm3616, %v3614, %v3611
    %v3618 = vadd.f32 %v3586, %v3608
    %v3619 = vadd.f32 %v3587, %v3617
    %v3620 = vsel %vm3588, %v3590, %v3618
    %v3621 = vsel %vm3589, %v3591, %v3619
    %3622 = vrot.lane.b32.xlu0 %v125, 64
    %v3623 = vpop.permute.xlu0 %3622
    %3624 = vrot.lane.b32.xlu0 %v127, 64
    %v3625 = vpop.permute.xlu0 %3624
    %v3628 = vmul.f32 %v3620, %v3623
    %v3629 = vmul.f32 %v3621, %v3625
    %3632 = vrot.lane.b32.xlu0 %v3628, 96
    %v3633 = vpop.permute.xlu0 %3632
    %3634 = vrot.lane.b32.xlu0 %v3629, 96
    %v3635 = vpop.permute.xlu0 %3634
    %v3638 = vadd.f32 %v3580, %v3633
    %v3639 = vadd.f32 %v3583, %v3635
    %v3640 = vpack.c.bf16 %v3639, %v3638
    %v3642 = vsel %vm934, %v3640, 0
    %3644 = vmatprep.subr.bf16.mxu0 %v927
    %3645 = vmatpush1.bf16.msra.mxu0 %v926
    %3646 = vmatprep.subr.bf16.mxu0 %v929
    %3647 = vmatpush1.bf16.msra.mxu0 %v928
    %3648 = vmatprep.subr.bf16.mxu0 0
    %3649 = vmatpush1.bf16.msra.mxu0 0
    %3650 = vmatprep.subr.bf16.mxu0 0
    %3651 = vmatpush1.bf16.msra.mxu0 0
    %3652 = vmatprep.subr.bf16.mxu0 0
    %3653 = vmatpush1.bf16.msra.mxu0 0
    %3654 = vmatprep.subr.bf16.mxu0 0
    %3655 = vmatpush1.bf16.msra.mxu0 0
    %3656 = vmatprep.subr.bf16.mxu0 0
    %3657 = vmatpush1.bf16.msra.mxu0 0
    %3658 = vmatprep.subr.bf16.mxu0 0
    %3659 = vmatpush1.bf16.msra.mxu0 0
    %3660 = vmatprep.subr.bf16.mxu0 0
    %3661 = vmatpush1.bf16.msra.mxu0 0
    %3662 = vmatprep.subr.bf16.mxu0 0
    %3663 = vmatpush1.bf16.msra.mxu0 0
    %3664 = vmatprep.subr.bf16.mxu0 0
    %3665 = vmatpush1.bf16.msra.mxu0 0
    %3666 = vmatprep.subr.bf16.mxu0 0
    %3667 = vmatpush1.bf16.msra.mxu0 0
    %3668 = vmatprep.subr.bf16.mxu0 0
    %3669 = vmatpush1.bf16.msra.mxu0 0
    %3670 = vmatprep.subr.bf16.mxu0 0
    %3671 = vmatpush1.bf16.msra.mxu0 0
    %3672 = vmatprep.subr.bf16.mxu0 0
    %3673 = vmatpush1.bf16.msra.mxu0 0
    %3674 = vmatprep.subr.bf16.mxu0 0
    %3675 = vmatpush1.bf16.msra.mxu0 0
    %3676 = vmatprep.mubr.bf16.mxu0 0
    %3677 = vmatmul.mubr.bf16.gmra.mrb[0].mxu0 %v3642
    %v3678 = vpop.f32.mrb[0].mxu0
    %v3679 = vadd.f32 %v540, %v3678
    %v3680 = vpop.f32.mrb[0].mxu0
    %v3681 = vadd.f32 %v542, %v3680
    %v3682 = vpop.f32.mrb[0].mxu0
    %v3683 = vadd.f32 %v544, %v3682
    %v3684 = vpop.f32.mrb[0].mxu0
    %v3685 = vadd.f32 %v546, %v3684
    %3686 = vdwg.mxu0
    %v3687 = vmul.f32 %v3679, 0.5
    %v3688 = vmul.f32 %v3681, 0.5
    %v3689 = vmul.f32 %v3683, 0.5
    %v3690 = vmul.f32 %v3685, 0.5
    %v3691 = vtanh.pop %v3687
    %v3692 = vtanh.pop %v3688
    %v3693 = vtanh.pop %v3689
    %v3694 = vtanh.pop %v3690
    %v3695 = vmul.f32 %v3691, 0.5
    %v3696 = vmul.f32 %v3692, 0.5
    %v3697 = vmul.f32 %v3693, 0.5
    %v3698 = vmul.f32 %v3694, 0.5
    %v3699 = vadd.f32 %v3695, 0.5
    %v3700 = vadd.f32 %v3696, 0.5
    %v3701 = vadd.f32 %v3697, 0.5
    %v3702 = vadd.f32 %v3698, 0.5
    %v3703 = vmul.f32 %v3699, %v3327
    %v3704 = vmul.f32 %v3701, %v3328
    %v3705 = vmul.f32 %v3699, %v3700
    %v3706 = vmul.f32 %v3701, %v3702
    %3709 = vrot.lane.b32.xlu0 %v3705, 64
    %v3710 = vpop.permute.xlu0 %3709
    %3711 = vrot.lane.b32.xlu0 %v3706, 64
    %v3712 = vpop.permute.xlu0 %3711
    %v3715 = vadd.f32 %v3703, %v3710
    %v3716 = vadd.f32 %v3704, %v3712
    %v3717 = vtanh.pop %v3715
    %v3718 = vtanh.pop %v3716
    %v3719 = vmul.f32 %v3700, %v3717
    %v3720 = vmul.f32 %v3702, %v3718
    %v3721 = vadd.f32 %v3333, %v3719
    %v3722 = vadd.f32 %v3334, %v3720
    %v3723 = vrcp.pop %v3501
    %v3724 = vrcp.pop %v3502
    %v3725 = vmul.f32 %v3620, %v3723
    %v3726 = vmul.f32 %v3621, %v3724
    %v3727 = vmul.f32 %v3725, %v3725
    %v3728 = vmul.f32 %v3726, %v3726
    %v3729 = vsub.f32 %v3580, %v3465
    %v3730 = vsub.f32 %v3583, %v3466
    %3733 = vrot.lane.b32.xlu0 %v3723, 96
    %v3734 = vpop.permute.xlu0 %3733
    %3735 = vrot.lane.b32.xlu0 %v3724, 96
    %v3736 = vpop.permute.xlu0 %3735
    %v3739 = vmul.f32 %v3729, %v3734
    %v3740 = vmul.f32 %v3730, %v3736
    %v3741 = vmul.f32 %v3739, %v3739
    %v3742 = vmul.f32 %v3740, %v3740
    %3745 = vrot.lane.b32.xlu0 %v3741, 32
    %v3746 = vpop.permute.xlu0 %3745
    %3747 = vrot.lane.b32.xlu0 %v3742, 32
    %v3748 = vpop.permute.xlu0 %3747
    %v3751 = vadd.f32 %v3727, %v3746
    %v3752 = vadd.f32 %v3728, %v3748
    %v3753 = vsub.f32 %v3751, 1.0
    %v3754 = vsub.f32 %v3752, 1.0
    %v3755 = vlog2.pop %v3727
    %v3756 = vmul.f32 %v3755, 0.6931472
    %v3757 = vlog2.pop %v3728
    %v3758 = vmul.f32 %v3757, 0.6931472
    %v3759 = vsub.f32 %v3753, %v3756
    %v3760 = vsub.f32 %v3754, %v3758
    %v3761 = vmul.f32 %v3759, 0.5
    %v3762 = vmul.f32 %v3760, 0.5
    %v3763 = vadd.f32 %v3375, %v3761
    %v3764 = vadd.f32 %v3376, %v3762
    %v3765 = vld [vmem:[%s9] sm:$0x1]
    %v3767 = vlaneseq
    %v3768 = vshrl.u32 %v3767, 7
    %v3769 = vsub.s32 0, %v3768
    %v3770 = vrot.slane %v3765, %v3769
    %v3772 = vmul.f32 %v3721, %v3770
    %v3773 = vmul.f32 %v3722, %v3770
    %v3774 = vsel %vm612, %v3772, 0.0
    %3775 = vadd.xlane.f32.xlu0 %v3774
    %v3776 = vpop.xlane.xlu0 %3775
    %v3777 = vsel %vm612, %v3773, 0.0
    %3778 = vadd.xlane.f32.xlu0 %v3777
    %v3779 = vpop.xlane.xlu0 %3778
    %v3780 = vld [vmem:[#allocation2] sm:$0x1]
    %v3782 = vlaneseq
    %v3783 = vshrl.u32 %v3782, 7
    %v3784 = vsub.s32 0, %v3783
    %v3785 = vrot.slane %v3780, %v3784
    %v3787 = vadd.f32 %v3776, %v3785
    %v3788 = vadd.f32 %v3779, %v3785
    %v3789 = vtanh.pop %v3787
    %v3790 = vtanh.pop %v3788
    %3791 = vst [vmem:[#allocation14] sm:$0xff] 0.0
    %3792 = vst [vmem:[#allocation14 + $0x8] sm:$0xff] 0.0
    %vm3793 = vcmask 7168
    %3794 = vst.msk [vmem:[#allocation14] sm:$0xff] %vm3793, %v3789
    %3795 = vst.msk [vmem:[#allocation14 + $0x8] sm:$0xff] %vm3793, %v3790
    %3798 = vrot.lane.b32.xlu0 %v3763, 97
    %v3799 = vpop.permute.xlu0 %3798
    %3800 = vrot.lane.b32.xlu0 %v3764, 97
    %v3801 = vpop.permute.xlu0 %3800
    %vm3804 = vcmask 269320
    %3805 = vst.msk [vmem:[#allocation14] sm:$0xff] %vm3804, %v3799
    %3806 = vst.msk [vmem:[#allocation14 + $0x8] sm:$0xff] %vm3804, %v3801
    // Predicated region
    $region70: #{tpu_custom_call.1} parent=1 // pred_check
      _
    $region71: #{tpu_custom_call.1} parent=1 // pred_check_branch
      %3808 = sbr.rel (0) target = $region73
    $region72: #{tpu_custom_call.1} parent=1 // pred_region
      %s3810 = ssub.s32 256, 256
      %3811 = vsyncadd [#allocation5], %s3810
      %s3812 = sshll.u32 [#allocation14], 4
      %s3813 = int_to_ptr.vmem [resolvable:$true] %s3812
      %3818 = dma.vmem_to_hbm [thread:$0]  %s3813, 256, %s11, [#allocation5], 128, 128, 8
    $region73: #{tpu_custom_call.1} parent=1 // pred_fallthru
      _
    // Predicated region
    $region74: #{tpu_custom_call.1} parent=1 // pred_check
      _
    $region75: #{tpu_custom_call.1} parent=1 // pred_check_branch
      %3820 = sbr.rel (0) target = $region77
    $region76: #{tpu_custom_call.1} parent=1 // pred_region
      %3821 = dma.done [#allocation5], 256
    $region77: #{tpu_custom_call.1} parent=1 // pred_fallthru
      _
    %3822 = vsyncpa [#allocation4], 1
    %3823 = vsyncpa [#allocation7], 1
    %3824 = vsyncpa [#allocation10], 1
    %3825 = vsyncpa [#allocation13], 1
    %3826 = vsyncpa [#allocation5], 1

</llo_original>
